<compile_context>
chip_gen: v7x
topology: tpu7x:2x2x1
jax: 0.10.0
libtpu: 0.0.40
codegen_flags: <defaults>
</compile_context>

<pallas_src>
import functools

import jax
import jax.numpy as jnp
from jax.experimental import pallas as pl
from jax.experimental.pallas import tpu as pltpu


def _round_up(x, m):
    return (x + m - 1) // m * m


# ---------------------------------------------------------------------------
# Fused kernel: one row-tile of the local projection plus the (tiny) global
# projection per grid step.  Both matmuls run on the MXU with f32 accumulation.
# ---------------------------------------------------------------------------
def _proj_kernel(x_l_ref, w_l_ref, b_l_ref, x_g_ref, w_g_ref, b_g_ref,
                 o_l_ref, o_g_ref):
    # local: (block_m, 768) @ (768, 256) + (1, 256)  -> lane-dense (x, 256) out
    o_l_ref[...] = (
        jnp.dot(x_l_ref[...], w_l_ref[...], preferred_element_type=jnp.float32)
        + b_l_ref[...]
    )
    # global: (B, 2048) @ (2048, 256) + (1, 256); ~1 MFLOP, recomputed every
    # grid step so each step writes its own distinct output block and the grid
    # axis remains "parallel" (both v7x TensorCores usable).
    o_g_ref[0] = (
        jnp.dot(x_g_ref[...], w_g_ref[...], preferred_element_type=jnp.float32)
        + b_g_ref[...]
    )


def _fused_projections(x_l, w_l, b_l, x_g, w_g, b_g, *, num_row_tiles=2):
    """Computes (x_l @ w_l + b_l, x_g @ w_g + b_g) in one pallas_call.

    x_l: (M, 768)  bf16   local features, one row per spatial location
    w_l: (768, N)  bf16
    b_l: (N,)      f32
    x_g: (B, 2048) bf16   global features
    w_g: (2048, N) bf16
    b_g: (N,)      f32
    """
    M, Kl = x_l.shape
    N = w_l.shape[1]
    Bg, Kg = x_g.shape

    # Two large row tiles (no padding/slicing in the wrapper): the partial
    # last block is masked by Pallas — OOB rows of the input block are garbage
    # but K is fully loaded and only in-bounds output rows are written back.
    block_m = _round_up(max(pl.cdiv(M, num_row_tiles), 8), 8)
    grid_m = pl.cdiv(M, block_m)

    out_l, out_g = pl.pallas_call(
        _proj_kernel,
        out_shape=(
            jax.ShapeDtypeStruct((M, N), jnp.float32),
            jax.ShapeDtypeStruct((grid_m, Bg, N), jnp.float32),
        ),
        grid=(grid_m,),
        in_specs=[
            pl.BlockSpec((block_m, Kl), lambda i: (i, 0)),
            pl.BlockSpec((Kl, N), lambda i: (0, 0)),
            pl.BlockSpec((1, N), lambda i: (0, 0)),
            pl.BlockSpec((Bg, Kg), lambda i: (0, 0)),
            pl.BlockSpec((Kg, N), lambda i: (0, 0)),
            pl.BlockSpec((1, N), lambda i: (0, 0)),
        ],
        out_specs=(
            pl.BlockSpec((block_m, N), lambda i: (i, 0)),
            pl.BlockSpec((1, Bg, N), lambda i: (i, 0, 0)),
        ),
        compiler_params=pltpu.CompilerParams(
            dimension_semantics=("parallel",)
        ),
    )(x_l, w_l, b_l.reshape(1, N), x_g, w_g, b_g.reshape(1, N))
    return out_l, out_g[0]


# ---------------------------------------------------------------------------
# ImageEncoder.forward (post-backbone part)
# ---------------------------------------------------------------------------
@functools.partial(jax.jit, static_argnames=("channels_last",))
def image_encoder_forward(x_local, global_feat, params, *, channels_last=True):
    """Mirrors ImageEncoder.forward given the inception outputs.

    x_local:     (B, 17, 17, 768) if channels_last (preferred; no extra pass),
                 else (B, 768, 17, 17) NCHW as PyTorch's inception emits.
    global_feat: (B, 2048)
    returns: local_feat (B, 17, 17, 256), global_feat (B, 256)
    """
    if not channels_last:
        # PyTorch's x.permute(0, 2, 3, 1); fused with the bf16 cast under jit.
        x_local = jnp.transpose(x_local, (0, 2, 3, 1))
    B, H, W, C = x_local.shape

    # bf16 at the kernel boundary (f32 accumulation inside); reshape is free.
    x_l2d = x_local.reshape(B * H * W, C).astype(jnp.bfloat16)
    x_g = global_feat.astype(jnp.bfloat16)

    local_2d, global_out = _fused_projections(
        x_l2d, params["w_local_t"], params["b_local"],
        x_g, params["w_global_t"], params["b_global"],
    )
    return local_2d.reshape(B, H, W, -1), global_out


def init_params(key, multimodal_feat_size=256):
    """uniform(-0.1, 0.1) weights (as in init_trainable_weights), zero biases.
    Weights are stored pre-transposed and pre-cast to bf16 once at init (off
    the hot path); biases stay f32."""
    k1, k2 = jax.random.split(key)
    initrange = 0.1
    # PyTorch nn.Linear stores weight as (out_features, in_features).
    w_global = jax.random.uniform(
        k1, (multimodal_feat_size, 2048), jnp.float32, -initrange, initrange)
    w_local = jax.random.uniform(
        k2, (multimodal_feat_size, 768), jnp.float32, -initrange, initrange)
    return {
        "w_global_t": w_global.T.astype(jnp.bfloat16),   # (2048, 256)
        "b_global": jnp.zeros((multimodal_feat_size,), jnp.float32),
        "w_local_t": w_local.T.astype(jnp.bfloat16),     # (768, 256)
        "b_local": jnp.zeros((multimodal_feat_size,), jnp.float32),
    }


if __name__ == "__main__":
    key = jax.random.PRNGKey(0)
    k_params, k_local, k_global = jax.random.split(key, 3)

    B, HW, C_LOCAL, C_GLOBAL, FEAT = 2, 17, 768, 2048, 256

    params = init_params(k_params, FEAT)

    # Synthetic stand-ins for the frozen inception backbone outputs.  The
    # local features are emitted channels-last (== x.permute(0, 2, 3, 1)).
    x_local = jax.random.normal(k_local, (B, HW, HW, C_LOCAL), jnp.float32)
    g_feat = jax.random.normal(k_global, (B, C_GLOBAL), jnp.float32)

    local_feat, global_feat = image_encoder_forward(x_local, g_feat, params)
    jax.block_until_ready((local_feat, global_feat))

    # Reference in plain JAX, same bf16-in / f32-accumulate regime.
    ref_local = (
        jnp.dot(x_local.reshape(-1, C_LOCAL).astype(jnp.bfloat16),
                params["w_local_t"], preferred_element_type=jnp.float32)
        + params["b_local"]
    ).reshape(B, HW, HW, FEAT)
    ref_global = (
        jnp.dot(g_feat.astype(jnp.bfloat16), params["w_global_t"],
                preferred_element_type=jnp.float32)
        + params["b_global"]
    )

    assert local_feat.shape == (B, HW, HW, FEAT), local_feat.shape
    assert global_feat.shape == (B, FEAT), global_feat.shape
    assert jnp.allclose(local_feat, ref_local, atol=1e-2, rtol=1e-2)
    assert jnp.allclose(global_feat, ref_global, atol=1e-2, rtol=1e-2)

    print("KERNEL_OK")
</pallas_src>

<mosaic_0001>
module attributes {stable_mosaic.version = 11 : i64} {
  func.func @_proj_kernel(%arg0: i32, %arg1: memref<296x768xbf16, #tpu.memory_space<vmem>>, %arg2: memref<768x256xbf16, #tpu.memory_space<vmem>>, %arg3: memref<1x256xf32, #tpu.memory_space<vmem>>, %arg4: memref<2x2048xbf16, #tpu.memory_space<vmem>>, %arg5: memref<2048x256xbf16, #tpu.memory_space<vmem>>, %arg6: memref<1x256xf32, #tpu.memory_space<vmem>>, %arg7: memref<296x256xf32, #tpu.memory_space<vmem>>, %arg8: memref<1x2x256xf32, #tpu.memory_space<vmem>>) attributes {dimension_semantics = [#tpu.dimension_semantics<parallel>], iteration_bounds = array<i64: 2>, scalar_prefetch = 0 : i64, scratch_operands = 0 : i64, tpu.core_type = #tpu.core_type<tc>, window_params = [{transform_indices = @transform_0, window_bounds = array<i64: 296, 768>}, {pipeline_mode = #tpu.pipeline_mode<synchronous>, transform_indices = @transform_1, window_bounds = array<i64: 768, 256>}, {pipeline_mode = #tpu.pipeline_mode<synchronous>, transform_indices = @transform_2, window_bounds = array<i64: 1, 256>}, {pipeline_mode = #tpu.pipeline_mode<synchronous>, transform_indices = @transform_3, window_bounds = array<i64: 2, 2048>}, {pipeline_mode = #tpu.pipeline_mode<synchronous>, transform_indices = @transform_4, window_bounds = array<i64: 2048, 256>}, {pipeline_mode = #tpu.pipeline_mode<synchronous>, transform_indices = @transform_5, window_bounds = array<i64: 1, 256>}, {transform_indices = @transform_6, window_bounds = array<i64: 296, 256>}, {transform_indices = @transform_7, window_bounds = array<i64: 1, 2, 256>}]} {
    %c0 = arith.constant 0 : index
    %c0_0 = arith.constant 0 : index
    %0 = vector.load %arg1[%c0, %c0_0] : memref<296x768xbf16, #tpu.memory_space<vmem>>, vector<296x768xbf16>
    %c0_1 = arith.constant 0 : index
    %c0_2 = arith.constant 0 : index
    %1 = vector.load %arg2[%c0_1, %c0_2] : memref<768x256xbf16, #tpu.memory_space<vmem>>, vector<768x256xbf16>
    %cst = arith.constant dense<0.000000e+00> : vector<296x256xf32>
    %2 = tpu.matmul %0, %1, %cst {dimension_numbers = #tpu.dot_dimension_numbers<[1], [0], [0], [1], [0, 0, 1, 1], [], []>} : vector<296x768xbf16>, vector<768x256xbf16>, vector<296x256xf32> -> vector<296x256xf32>
    %c0_3 = arith.constant 0 : index
    %c0_4 = arith.constant 0 : index
    %3 = vector.load %arg3[%c0_3, %c0_4] : memref<1x256xf32, #tpu.memory_space<vmem>>, vector<1x256xf32>
    %4 = vector.broadcast %3 : vector<1x256xf32> to vector<296x256xf32>
    %5 = arith.addf %2, %4 : vector<296x256xf32>
    %c0_5 = arith.constant 0 : index
    %c0_6 = arith.constant 0 : index
    %6 = vector.load %arg7[%c0_5, %c0_6] : memref<296x256xf32, #tpu.memory_space<vmem>>, vector<296x256xf32>
    tpu.vector_store %arg7[%c0_5, %c0_6], %5 {strides = array<i32>} : memref<296x256xf32, #tpu.memory_space<vmem>>, vector<296x256xf32>,
    %c0_7 = arith.constant 0 : index
    %c0_8 = arith.constant 0 : index
    %7 = vector.load %arg4[%c0_7, %c0_8] : memref<2x2048xbf16, #tpu.memory_space<vmem>>, vector<2x2048xbf16>
    %c0_9 = arith.constant 0 : index
    %c0_10 = arith.constant 0 : index
    %8 = vector.load %arg5[%c0_9, %c0_10] : memref<2048x256xbf16, #tpu.memory_space<vmem>>, vector<2048x256xbf16>
    %cst_11 = arith.constant dense<0.000000e+00> : vector<2x256xf32>
    %9 = tpu.matmul %7, %8, %cst_11 {dimension_numbers = #tpu.dot_dimension_numbers<[1], [0], [0], [1], [0, 0, 1, 1], [], []>} : vector<2x2048xbf16>, vector<2048x256xbf16>, vector<2x256xf32> -> vector<2x256xf32>
    %c0_12 = arith.constant 0 : index
    %c0_13 = arith.constant 0 : index
    %10 = vector.load %arg6[%c0_12, %c0_13] : memref<1x256xf32, #tpu.memory_space<vmem>>, vector<1x256xf32>
    %11 = vector.broadcast %10 : vector<1x256xf32> to vector<2x256xf32>
    %12 = arith.addf %9, %11 : vector<2x256xf32>
    %c0_14 = arith.constant 0 : index
    %c0_15 = arith.constant 0 : index
    %c0_16 = arith.constant 0 : index
    %13 = vector.load %arg8[%c0_14, %c0_15, %c0_16] : memref<1x2x256xf32, #tpu.memory_space<vmem>>, vector<1x2x256xf32>
    %14 = vector.shape_cast %13 : vector<1x2x256xf32> to vector<2x256xf32>
    %15 = vector.shape_cast %12 : vector<2x256xf32> to vector<1x2x256xf32>
    tpu.vector_store %arg8[%c0_14, %c0_15, %c0_16], %15 {strides = array<i32>} : memref<1x2x256xf32, #tpu.memory_space<vmem>>, vector<1x2x256xf32>,
    return
  }
  func.func @transform_0(%arg0: i32) -> (i32, i32) {
    %c0_i32 = arith.constant 0 : i32
    %c0_i32_0 = arith.constant 0 : i32
    return %arg0, %c0_i32 : i32, i32
  }
  func.func @transform_1(%arg0: i32) -> (i32, i32) {
    %c0_i32 = arith.constant 0 : i32
    %c0_i32_0 = arith.constant 0 : i32
    %c0_i32_1 = arith.constant 0 : i32
    return %c0_i32, %c0_i32_0 : i32, i32
  }
  func.func @transform_2(%arg0: i32) -> (i32, i32) {
    %c0_i32 = arith.constant 0 : i32
    %c0_i32_0 = arith.constant 0 : i32
    %c0_i32_1 = arith.constant 0 : i32
    return %c0_i32, %c0_i32_0 : i32, i32
  }
  func.func @transform_3(%arg0: i32) -> (i32, i32) {
    %c0_i32 = arith.constant 0 : i32
    %c0_i32_0 = arith.constant 0 : i32
    %c0_i32_1 = arith.constant 0 : i32
    return %c0_i32, %c0_i32_0 : i32, i32
  }
  func.func @transform_4(%arg0: i32) -> (i32, i32) {
    %c0_i32 = arith.constant 0 : i32
    %c0_i32_0 = arith.constant 0 : i32
    %c0_i32_1 = arith.constant 0 : i32
    return %c0_i32, %c0_i32_0 : i32, i32
  }
  func.func @transform_5(%arg0: i32) -> (i32, i32) {
    %c0_i32 = arith.constant 0 : i32
    %c0_i32_0 = arith.constant 0 : i32
    %c0_i32_1 = arith.constant 0 : i32
    return %c0_i32, %c0_i32_0 : i32, i32
  }
  func.func @transform_6(%arg0: i32) -> (i32, i32) {
    %c0_i32 = arith.constant 0 : i32
    %c0_i32_0 = arith.constant 0 : i32
    return %arg0, %c0_i32 : i32, i32
  }
  func.func @transform_7(%arg0: i32) -> (i32, i32, i32) {
    %c0_i32 = arith.constant 0 : i32
    %c0_i32_0 = arith.constant 0 : i32
    %c0_i32_1 = arith.constant 0 : i32
    return %arg0, %c0_i32, %c0_i32_0 : i32, i32, i32
  }
}

</mosaic_0001>

<llo_original>
// kernel: image_encoder_forward.1
$region0: #{image_encoder_forward.1}
  #allocation0 [shape = 'u32[]', space=smem, size = 0x4, offset = 0x4, fixed_abs, tag = 'smem constant byte address 0x4 - core index']
  #allocation1 [shape = 'u32[144,128]{1,0:T(1,128)}', space=vmem, size = 0x12000, scoped, tag = 'internal scratch']
  %s0 = inlined_call_operand.vmem [shape: bf16[578,768], index: 0, kind: input, shape index: {}]
  %s1 = inlined_call_operand.vmem [shape: bf16[768,256], index: 1, kind: input, shape index: {}]
  %s2 = inlined_call_operand.vmem [shape: f32[1,256], index: 2, kind: input, shape index: {}]
  %s3 = inlined_call_operand.vmem [shape: bf16[2,2048], index: 3, kind: input, shape index: {}]
  %s4 = inlined_call_operand.vmem [shape: bf16[2048,256], index: 4, kind: input, shape index: {}]
  %s5 = inlined_call_operand.vmem [shape: f32[1,256], index: 5, kind: input, shape index: {}]
  %s6 = inlined_call_operand.vmem [shape: f32[578,256], index: 6, kind: output, shape index: {0}]
  %s7 = inlined_call_operand.vmem [shape: f32[2,2,256], index: 7, kind: output, shape index: {1}]
  %8 = xla_tuple %s6, %s7
  %s9 = sld [smem:[#allocation0]]
  $region91: #{image_encoder_forward.1} parent=0
    _
  %s11 = ssub.s32 1, %s9
  %s12 = scalar_select 0, %s11, %s9
  $region1: #{image_encoder_forward.1} parent=0
    #allocation2 [shape = 'u8[606208]{0}', space=vmem, size = 0x94000, scoped, tag = 'output window, operand 0']
    loop: start=0, step=1, limit=4
    $region2: #{image_encoder_forward.1} parent=1 // loop_pre_header
      _
    $region3: #{image_encoder_forward.1} parent=1 // loop_header
      %s14 = sphi 0, %s18
      %p15 = scmp.ge.s32.totalorder %s14, 4
      %s24 = sphi 0, %s26
      %s27 = sphi 0, %s24
      %s28 = sphi 0, %s27
      %s44 = sphi 0, %s28
      %s48 = sphi 0, %s48
      %s50 = sphi 0, %s48
      %s51 = sphi 0, %s50
      %s65 = sphi 0, %s51
      %s69 = sphi 0, %s69
      %s71 = sphi 0, %s69
      %s72 = sphi 0, %s71
      %s86 = sphi 0, %s72
      %s90 = sphi 0, %s90
      %s92 = sphi 0, %s90
      %s93 = sphi 0, %s92
      %s107 = sphi 0, %s93
      %s111 = sphi 0, %s111
      %s113 = sphi 0, %s111
      %s114 = sphi 0, %s113
      %s128 = sphi 0, %s114
      %s132 = sphi 0, %s132
      %s134 = sphi 0, %s132
      %s135 = sphi 0, %s134
      %s149 = sphi 0, %s135
      %s155 = sphi 0, %s157
      %s158 = sphi 0, %s155
      %s159 = sphi 0, %s158
      %s175 = sphi 0, %s159
      %s181 = sphi 0, %s183
      %s184 = sphi 0, %s181
      %s185 = sphi 0, %s184
      %s201 = sphi 0, %s185
    $region4: #{image_encoder_forward.1} parent=1 // loop_header_branch
      %17 = sbr.rel (%p15) target = $region8
    $region5: #{image_encoder_forward.1} parent=1 // loop_body
      %s19 = ssub.s32 %s14, 1
      %s20 = ssub.s32 %s14, 2
      %s21 = sadd.s32 %s14, 1
      %s22 = ssub.s32 %s14, %s21
      %p23 = scmp.eq.s32.totalorder %s22, 0
      %s25 = sadd.s32 %s24, 1
      %s26 = scalar_select %p23, %s24, %s25
      %p29 = pneg %p23
      %p30 = scmp.eq.s32.totalorder %s14, 1
      %p31 = por %p29, %p30
      %p32 = scmp.ne.s32.totalorder %s24, %s27
      %p33 = scmp.eq.s32.totalorder %s14, 0
      %p34 = por %p32, %p33
      %p35 = scmp.ne.s32.totalorder %s24, %s27
      %p36 = scmp.eq.s32.totalorder %s19, 1
      %p37 = por %p35, %p36
      %p38 = scmp.ne.s32.totalorder %s27, %s28
      %p39 = scmp.eq.s32.totalorder %s19, 0
      %p40 = por %p38, %p39
      %p41 = scmp.ne.s32.totalorder %s27, %s28
      %p42 = scmp.eq.s32.totalorder %s20, 1
      %p43 = por %p41, %p42
      %p45 = scmp.ne.s32.totalorder %s28, %s44
      %p46 = scmp.eq.s32.totalorder %s20, 0
      %p47 = por %p45, %p46
      %s49 = sadd.s32 %s48, 1
      %p52 = scmp.eq.s32.totalorder %s14, 1
      %p53 = scmp.ne.s32.totalorder %s48, %s50
      %p54 = scmp.eq.s32.totalorder %s14, 0
      %p55 = por %p53, %p54
      %p56 = scmp.ne.s32.totalorder %s48, %s50
      %p57 = scmp.eq.s32.totalorder %s19, 1
      %p58 = por %p56, %p57
      %p59 = scmp.ne.s32.totalorder %s50, %s51
      %p60 = scmp.eq.s32.totalorder %s19, 0
      %p61 = por %p59, %p60
      %p62 = scmp.ne.s32.totalorder %s50, %s51
      %p63 = scmp.eq.s32.totalorder %s20, 1
      %p64 = por %p62, %p63
      %p66 = scmp.ne.s32.totalorder %s51, %s65
      %p67 = scmp.eq.s32.totalorder %s20, 0
      %p68 = por %p66, %p67
      %s70 = sadd.s32 %s69, 1
      %p73 = scmp.eq.s32.totalorder %s14, 1
      %p74 = scmp.ne.s32.totalorder %s69, %s71
      %p75 = scmp.eq.s32.totalorder %s14, 0
      %p76 = por %p74, %p75
      %p77 = scmp.ne.s32.totalorder %s69, %s71
      %p78 = scmp.eq.s32.totalorder %s19, 1
      %p79 = por %p77, %p78
      %p80 = scmp.ne.s32.totalorder %s71, %s72
      %p81 = scmp.eq.s32.totalorder %s19, 0
      %p82 = por %p80, %p81
      %p83 = scmp.ne.s32.totalorder %s71, %s72
      %p84 = scmp.eq.s32.totalorder %s20, 1
      %p85 = por %p83, %p84
      %p87 = scmp.ne.s32.totalorder %s72, %s86
      %p88 = scmp.eq.s32.totalorder %s20, 0
      %p89 = por %p87, %p88
      %s91 = sadd.s32 %s90, 1
      %p94 = scmp.eq.s32.totalorder %s14, 1
      %p95 = scmp.ne.s32.totalorder %s90, %s92
      %p96 = scmp.eq.s32.totalorder %s14, 0
      %p97 = por %p95, %p96
      %p98 = scmp.ne.s32.totalorder %s90, %s92
      %p99 = scmp.eq.s32.totalorder %s19, 1
      %p100 = por %p98, %p99
      %p101 = scmp.ne.s32.totalorder %s92, %s93
      %p102 = scmp.eq.s32.totalorder %s19, 0
      %p103 = por %p101, %p102
      %p104 = scmp.ne.s32.totalorder %s92, %s93
      %p105 = scmp.eq.s32.totalorder %s20, 1
      %p106 = por %p104, %p105
      %p108 = scmp.ne.s32.totalorder %s93, %s107
      %p109 = scmp.eq.s32.totalorder %s20, 0
      %p110 = por %p108, %p109
      %s112 = sadd.s32 %s111, 1
      %p115 = scmp.eq.s32.totalorder %s14, 1
      %p116 = scmp.ne.s32.totalorder %s111, %s113
      %p117 = scmp.eq.s32.totalorder %s14, 0
      %p118 = por %p116, %p117
      %p119 = scmp.ne.s32.totalorder %s111, %s113
      %p120 = scmp.eq.s32.totalorder %s19, 1
      %p121 = por %p119, %p120
      %p122 = scmp.ne.s32.totalorder %s113, %s114
      %p123 = scmp.eq.s32.totalorder %s19, 0
      %p124 = por %p122, %p123
      %p125 = scmp.ne.s32.totalorder %s113, %s114
      %p126 = scmp.eq.s32.totalorder %s20, 1
      %p127 = por %p125, %p126
      %p129 = scmp.ne.s32.totalorder %s114, %s128
      %p130 = scmp.eq.s32.totalorder %s20, 0
      %p131 = por %p129, %p130
      %s133 = sadd.s32 %s132, 1
      %p136 = scmp.eq.s32.totalorder %s14, 1
      %p137 = scmp.ne.s32.totalorder %s132, %s134
      %p138 = scmp.eq.s32.totalorder %s14, 0
      %p139 = por %p137, %p138
      %p140 = scmp.ne.s32.totalorder %s132, %s134
      %p141 = scmp.eq.s32.totalorder %s19, 1
      %p142 = por %p140, %p141
      %p143 = scmp.ne.s32.totalorder %s134, %s135
      %p144 = scmp.eq.s32.totalorder %s19, 0
      %p145 = por %p143, %p144
      %p146 = scmp.ne.s32.totalorder %s134, %s135
      %p147 = scmp.eq.s32.totalorder %s20, 1
      %p148 = por %p146, %p147
      %p150 = scmp.ne.s32.totalorder %s135, %s149
      %p151 = scmp.eq.s32.totalorder %s20, 0
      %p152 = por %p150, %p151
      %s153 = ssub.s32 %s14, %s21
      %p154 = scmp.eq.s32.totalorder %s153, 0
      %s156 = sadd.s32 %s155, 1
      %s157 = scalar_select %p154, %s155, %s156
      %p160 = pneg %p154
      %p161 = scmp.eq.s32.totalorder %s14, 1
      %p162 = por %p160, %p161
      %p163 = scmp.ne.s32.totalorder %s155, %s158
      %p164 = scmp.eq.s32.totalorder %s14, 0
      %p165 = por %p163, %p164
      %p166 = scmp.ne.s32.totalorder %s155, %s158
      %p167 = scmp.eq.s32.totalorder %s19, 1
      %p168 = por %p166, %p167
      %p169 = scmp.ne.s32.totalorder %s158, %s159
      %p170 = scmp.eq.s32.totalorder %s19, 0
      %p171 = por %p169, %p170
      %p172 = scmp.ne.s32.totalorder %s158, %s159
      %p173 = scmp.eq.s32.totalorder %s20, 1
      %p174 = por %p172, %p173
      %p176 = scmp.ne.s32.totalorder %s159, %s175
      %p177 = scmp.eq.s32.totalorder %s20, 0
      %p178 = por %p176, %p177
      %s179 = ssub.s32 %s14, %s21
      %p180 = scmp.eq.s32.totalorder %s179, 0
      %s182 = sadd.s32 %s181, 1
      %s183 = scalar_select %p180, %s181, %s182
      %p186 = pneg %p180
      %p187 = scmp.eq.s32.totalorder %s14, 1
      %p188 = por %p186, %p187
      %p189 = scmp.ne.s32.totalorder %s181, %s184
      %p190 = scmp.eq.s32.totalorder %s14, 0
      %p191 = por %p189, %p190
      %p192 = scmp.ne.s32.totalorder %s181, %s184
      %p193 = scmp.eq.s32.totalorder %s19, 1
      %p194 = por %p192, %p193
      %p195 = scmp.ne.s32.totalorder %s184, %s185
      %p196 = scmp.eq.s32.totalorder %s19, 0
      %p197 = por %p195, %p196
      %p198 = scmp.ne.s32.totalorder %s184, %s185
      %p199 = scmp.eq.s32.totalorder %s20, 1
      %p200 = por %p198, %p199
      %p202 = scmp.ne.s32.totalorder %s185, %s201
      %p203 = scmp.eq.s32.totalorder %s20, 0
      %p204 = por %p202, %p203
      %p205 = scmp.le.s32.totalorder 1, %s14
      %p206 = scmp.lt.s32.totalorder %s14, 3
      %p207 = pnand %p205, %p206
      %p208 = pneg %p207
      // Predicated region
      $region9: #{image_encoder_forward.1} parent=5 // pred_check
        _
      $region10: #{image_encoder_forward.1} parent=5 // pred_check_branch
        %210 = sbr.rel (%p207) target = $region12
      $region11: #{image_encoder_forward.1} parent=5 // pred_region
        %s211 = ssub.s32 %s14, 1
        // Predicated region
        $region13: #{image_encoder_forward.1} parent=11 // pred_check
          %p212 = pneg %p61
        $region14: #{image_encoder_forward.1} parent=11 // pred_check_branch
          %214 = sbr.rel (%p212) target = $region16
        $region15: #{image_encoder_forward.1} parent=11 // pred_region
          _
        $region16: #{image_encoder_forward.1} parent=11 // pred_fallthru
          _
        // Predicated region
        $region17: #{image_encoder_forward.1} parent=11 // pred_check
          %p215 = pneg %p82
        $region18: #{image_encoder_forward.1} parent=11 // pred_check_branch
          %217 = sbr.rel (%p215) target = $region20
        $region19: #{image_encoder_forward.1} parent=11 // pred_region
          _
        $region20: #{image_encoder_forward.1} parent=11 // pred_fallthru
          _
        // Predicated region
        $region21: #{image_encoder_forward.1} parent=11 // pred_check
          %p218 = pneg %p103
        $region22: #{image_encoder_forward.1} parent=11 // pred_check_branch
          %220 = sbr.rel (%p218) target = $region24
        $region23: #{image_encoder_forward.1} parent=11 // pred_region
          _
        $region24: #{image_encoder_forward.1} parent=11 // pred_fallthru
          _
        // Predicated region
        $region25: #{image_encoder_forward.1} parent=11 // pred_check
          %p221 = pneg %p124
        $region26: #{image_encoder_forward.1} parent=11 // pred_check_branch
          %223 = sbr.rel (%p221) target = $region28
        $region27: #{image_encoder_forward.1} parent=11 // pred_region
          _
        $region28: #{image_encoder_forward.1} parent=11 // pred_fallthru
          _
        // Predicated region
        $region29: #{image_encoder_forward.1} parent=11 // pred_check
          %p224 = pneg %p145
        $region30: #{image_encoder_forward.1} parent=11 // pred_check_branch
          %226 = sbr.rel (%p224) target = $region32
        $region31: #{image_encoder_forward.1} parent=11 // pred_region
          _
        $region32: #{image_encoder_forward.1} parent=11 // pred_fallthru
          _
      $region12: #{image_encoder_forward.1} parent=5 // pred_fallthru
        _
      %p227 = scmp.lt.s32.totalorder %s14, 2
      // Predicated region
      $region33: #{image_encoder_forward.1} parent=5 // pred_check
        %p228 = pneg %p227
      $region34: #{image_encoder_forward.1} parent=5 // pred_check_branch
        %230 = sbr.rel (%p228) target = $region36
      $region35: #{image_encoder_forward.1} parent=5 // pred_region
        // Predicated region
        $region37: #{image_encoder_forward.1} parent=35 // pred_check
          %p231 = pneg %p34
        $region38: #{image_encoder_forward.1} parent=35 // pred_check_branch
          %233 = sbr.rel (%p231) target = $region40
        $region39: #{image_encoder_forward.1} parent=35 // pred_region
          %s234 = smul.u32 37, %s14
          %s235 = ssub.s32 73, %s234
          %p236 = scmp.lt.s32.totalorder %s235, 37
          %s237 = scalar_select %p236, %s235, 37
          %s238 = smul.u32 64, %s237
          %s239 = smul.u32 %s238, 6
          %p240 = scmp.lt.s32.totalorder %s234, 72
          %s241 = scalar_select %p240, %s234, 72
          %s242 = smul.addr %s241, 6
          %s243 = smul.addr %s242, 4
          %s244 = scalar_lea.vmem %s0, %s243
          %s245 = smul.u32 37, %s14
          %s246 = ssub.s32 73, %s245
          %p247 = scmp.lt.s32.totalorder %s246, 37
          %s248 = scalar_select %p247, %s246, 37
          %s249 = smul.u32 64, %s248
          %s250 = smul.u32 %s249, 6
        $region40: #{image_encoder_forward.1} parent=35 // pred_fallthru
          _
      $region36: #{image_encoder_forward.1} parent=5 // pred_fallthru
        _
      %p251 = scmp.le.s32.totalorder 1, %s14
      %p252 = scmp.lt.s32.totalorder %s14, 3
      %p253 = pnand %p251, %p252
      %p254 = pneg %p253
      // Predicated region
      $region41: #{image_encoder_forward.1} parent=5 // pred_check
        _
      $region42: #{image_encoder_forward.1} parent=5 // pred_check_branch
        %256 = sbr.rel (%p253) target = $region44
      $region43: #{image_encoder_forward.1} parent=5 // pred_region
        %s257 = ssub.s32 %s14, 1
        %s258 = smul.u32 37, %s19
        %s259 = ssub.s32 73, %s258
        %p260 = scmp.lt.s32.totalorder %s259, 37
        %s261 = scalar_select %p260, %s259, 37
        %s262 = smul.u32 64, %s261
        %s263 = smul.u32 %s262, 6
        %p264 = scmp.lt.s32.totalorder %s258, 72
        %s265 = scalar_select %p264, %s258, 72
        %s266 = smul.addr %s265, 6
        %s267 = smul.addr %s266, 4
        %s268 = scalar_lea.vmem %s0, %s267
        %p269 = pneg %p40
        %p270 = pneg %p37
        %p271 = pneg %p61
        %p272 = pneg %p58
        %p273 = pneg %p82
        %p274 = pneg %p79
        %p275 = pneg %p103
        %p276 = pneg %p100
        %p277 = pneg %p124
        %p278 = pneg %p121
        %p279 = pneg %p145
        %p280 = pneg %p142
        %p281 = pneg %p171
        %p282 = pneg %p168
        %s283 = sand.u32 %s158, 1
        %s284 = sand.u32 %s158, 1
        %s285 = smul.addr %s284, 592
        %s286 = scalar_lea.vmem [#allocation2], %s285
        %p287 = pneg %p197
        %p288 = pneg %p194
        %p289 = scmp.lt.s32.totalorder %s19, 1
        %s290 = scalar_select %p289, %s19, 1
        %s291 = smul.addr %s290, 2
        %s292 = smul.addr %s291, 2
        %s293 = scalar_lea.vmem %s7, %s292
        %s294 = smul.u32 37, %s19
        %s295 = ssub.s32 73, %s294
        %p296 = scmp.lt.s32.totalorder %s295, 37
        %s297 = scalar_select %p296, %s295, 37
        %s298 = smul.u32 64, %s297
        %s299 = smul.u32 %s298, 6
        %p300 = scmp.lt.s32.totalorder %s294, 72
        %s301 = scalar_select %p300, %s294, 72
        %s302 = smul.addr %s301, 6
        %s303 = smul.addr %s302, 4
        %s304 = scalar_lea.vmem %s0, %s303
        %s305 = smul.u32 37, %s19
        %s306 = ssub.s32 73, %s305
        %p307 = scmp.lt.s32.totalorder %s306, 37
        %s308 = scalar_select %p307, %s306, 37
        %s309 = smul.u32 64, %s308
        %s310 = smul.u32 %s309, 6
        %s311 = smul.u32 37, %s19
        %s312 = ssub.s32 73, %s311
        %p313 = scmp.lt.s32.totalorder %s312, 37
        %s314 = scalar_select %p313, %s312, 37
        %s315 = smul.u32 128, %s314
        %s316 = smul.u32 %s315, 2
        %p317 = scmp.lt.s32.totalorder %s19, 1
        %s318 = scalar_select %p317, %s19, 1
        %s319 = smul.addr %s318, 2
        %s320 = smul.addr %s319, 2
        %s321 = scalar_lea.vmem %s7, %s320
        %v322 = vld [vmem:[%s304] sm:$0xff]
        %v323 = vld [vmem:[%s304 + $0x8] sm:$0xff]
        %v324 = vld [vmem:[%s304 + $0x10] sm:$0xff]
        %v325 = vld [vmem:[%s304 + $0x18] sm:$0xff]
        %v326 = vld [vmem:[%s304 + $0x20] sm:$0xff]
        %v327 = vld [vmem:[%s304 + $0x28] sm:$0xff]
        %v328 = vld [vmem:[%s304 + $0x30] sm:$0xff]
        %v329 = vld [vmem:[%s304 + $0x38] sm:$0xff]
        %v330 = vld [vmem:[%s304 + $0x40] sm:$0xff]
        %v331 = vld [vmem:[%s304 + $0x48] sm:$0xff]
        %v332 = vld [vmem:[%s304 + $0x50] sm:$0xff]
        %v333 = vld [vmem:[%s304 + $0x58] sm:$0xff]
        %v334 = vld [vmem:[%s304 + $0x60] sm:$0xff]
        %v335 = vld [vmem:[%s304 + $0x68] sm:$0xff]
        %v336 = vld [vmem:[%s304 + $0x70] sm:$0xff]
        %v337 = vld [vmem:[%s304 + $0x78] sm:$0xff]
        %v338 = vld [vmem:[%s304 + $0x80] sm:$0xff]
        %v339 = vld [vmem:[%s304 + $0x88] sm:$0xff]
        %v340 = vld [vmem:[%s304 + $0x90] sm:$0xff]
        %v341 = vld [vmem:[%s304 + $0x98] sm:$0xff]
        %v342 = vld [vmem:[%s304 + $0xa0] sm:$0xff]
        %v343 = vld [vmem:[%s304 + $0xa8] sm:$0xff]
        %v344 = vld [vmem:[%s304 + $0xb0] sm:$0xff]
        %v345 = vld [vmem:[%s304 + $0xb8] sm:$0xff]
        %v346 = vld [vmem:[%s304 + $0xc0] sm:$0xff]
        %v347 = vld [vmem:[%s304 + $0xc8] sm:$0xff]
        %v348 = vld [vmem:[%s304 + $0xd0] sm:$0xff]
        %v349 = vld [vmem:[%s304 + $0xd8] sm:$0xff]
        %v350 = vld [vmem:[%s304 + $0xe0] sm:$0xff]
        %v351 = vld [vmem:[%s304 + $0xe8] sm:$0xff]
        %v352 = vld [vmem:[%s304 + $0xf0] sm:$0xff]
        %v353 = vld [vmem:[%s304 + $0xf8] sm:$0xff]
        %v354 = vld [vmem:[%s304 + $0x100] sm:$0xff]
        %v355 = vld [vmem:[%s304 + $0x108] sm:$0xff]
        %v356 = vld [vmem:[%s304 + $0x110] sm:$0xff]
        %v357 = vld [vmem:[%s304 + $0x118] sm:$0xff]
        %v358 = vld [vmem:[%s304 + $0x120] sm:$0xff]
        %v359 = vld [vmem:[%s304 + $0x128] sm:$0xff]
        %v360 = vld [vmem:[%s304 + $0x130] sm:$0xff]
        %v361 = vld [vmem:[%s304 + $0x138] sm:$0xff]
        %v362 = vld [vmem:[%s304 + $0x140] sm:$0xff]
        %v363 = vld [vmem:[%s304 + $0x148] sm:$0xff]
        %v364 = vld [vmem:[%s304 + $0x150] sm:$0xff]
        %v365 = vld [vmem:[%s304 + $0x158] sm:$0xff]
        %v366 = vld [vmem:[%s304 + $0x160] sm:$0xff]
        %v367 = vld [vmem:[%s304 + $0x168] sm:$0xff]
        %v368 = vld [vmem:[%s304 + $0x170] sm:$0xff]
        %v369 = vld [vmem:[%s304 + $0x178] sm:$0xff]
        %v370 = vld [vmem:[%s304 + $0x180] sm:$0xff]
        %v371 = vld [vmem:[%s304 + $0x188] sm:$0xff]
        %v372 = vld [vmem:[%s304 + $0x190] sm:$0xff]
        %v373 = vld [vmem:[%s304 + $0x198] sm:$0xff]
        %v374 = vld [vmem:[%s304 + $0x1a0] sm:$0xff]
        %v375 = vld [vmem:[%s304 + $0x1a8] sm:$0xff]
        %v376 = vld [vmem:[%s304 + $0x1b0] sm:$0xff]
        %v377 = vld [vmem:[%s304 + $0x1b8] sm:$0xff]
        %v378 = vld [vmem:[%s304 + $0x1c0] sm:$0xff]
        %v379 = vld [vmem:[%s304 + $0x1c8] sm:$0xff]
        %v380 = vld [vmem:[%s304 + $0x1d0] sm:$0xff]
        %v381 = vld [vmem:[%s304 + $0x1d8] sm:$0xff]
        %v382 = vld [vmem:[%s304 + $0x1e0] sm:$0xff]
        %v383 = vld [vmem:[%s304 + $0x1e8] sm:$0xff]
        %v384 = vld [vmem:[%s304 + $0x1f0] sm:$0xff]
        %v385 = vld [vmem:[%s304 + $0x1f8] sm:$0xff]
        %v386 = vld [vmem:[%s304 + $0x200] sm:$0xff]
        %v387 = vld [vmem:[%s304 + $0x208] sm:$0xff]
        %v388 = vld [vmem:[%s304 + $0x210] sm:$0xff]
        %v389 = vld [vmem:[%s304 + $0x218] sm:$0xff]
        %v390 = vld [vmem:[%s304 + $0x220] sm:$0xff]
        %v391 = vld [vmem:[%s304 + $0x228] sm:$0xff]
        %v392 = vld [vmem:[%s304 + $0x230] sm:$0xff]
        %v393 = vld [vmem:[%s304 + $0x238] sm:$0xff]
        %v394 = vld [vmem:[%s304 + $0x240] sm:$0xff]
        %v395 = vld [vmem:[%s304 + $0x248] sm:$0xff]
        %v396 = vld [vmem:[%s304 + $0x250] sm:$0xff]
        %v397 = vld [vmem:[%s304 + $0x258] sm:$0xff]
        %v398 = vld [vmem:[%s304 + $0x260] sm:$0xff]
        %v399 = vld [vmem:[%s304 + $0x268] sm:$0xff]
        %v400 = vld [vmem:[%s304 + $0x270] sm:$0xff]
        %v401 = vld [vmem:[%s304 + $0x278] sm:$0xff]
        %v402 = vld [vmem:[%s304 + $0x280] sm:$0xff]
        %v403 = vld [vmem:[%s304 + $0x288] sm:$0xff]
        %v404 = vld [vmem:[%s304 + $0x290] sm:$0xff]
        %v405 = vld [vmem:[%s304 + $0x298] sm:$0xff]
        %v406 = vld [vmem:[%s304 + $0x2a0] sm:$0xff]
        %v407 = vld [vmem:[%s304 + $0x2a8] sm:$0xff]
        %v408 = vld [vmem:[%s304 + $0x2b0] sm:$0xff]
        %v409 = vld [vmem:[%s304 + $0x2b8] sm:$0xff]
        %v410 = vld [vmem:[%s304 + $0x2c0] sm:$0xff]
        %v411 = vld [vmem:[%s304 + $0x2c8] sm:$0xff]
        %v412 = vld [vmem:[%s304 + $0x2d0] sm:$0xff]
        %v413 = vld [vmem:[%s304 + $0x2d8] sm:$0xff]
        %v414 = vld [vmem:[%s304 + $0x2e0] sm:$0xff]
        %v415 = vld [vmem:[%s304 + $0x2e8] sm:$0xff]
        %v416 = vld [vmem:[%s304 + $0x2f0] sm:$0xff]
        %v417 = vld [vmem:[%s304 + $0x2f8] sm:$0xff]
        %v418 = vld [vmem:[%s304 + $0x300] sm:$0xff]
        %v419 = vld [vmem:[%s304 + $0x308] sm:$0xff]
        %v420 = vld [vmem:[%s304 + $0x310] sm:$0xff]
        %v421 = vld [vmem:[%s304 + $0x318] sm:$0xff]
        %v422 = vld [vmem:[%s304 + $0x320] sm:$0xff]
        %v423 = vld [vmem:[%s304 + $0x328] sm:$0xff]
        %v424 = vld [vmem:[%s304 + $0x330] sm:$0xff]
        %v425 = vld [vmem:[%s304 + $0x338] sm:$0xff]
        %v426 = vld [vmem:[%s304 + $0x340] sm:$0xff]
        %v427 = vld [vmem:[%s304 + $0x348] sm:$0xff]
        %v428 = vld [vmem:[%s304 + $0x350] sm:$0xff]
        %v429 = vld [vmem:[%s304 + $0x358] sm:$0xff]
        %v430 = vld [vmem:[%s304 + $0x360] sm:$0xff]
        %v431 = vld [vmem:[%s304 + $0x368] sm:$0xff]
        %v432 = vld [vmem:[%s304 + $0x370] sm:$0xff]
        %v433 = vld [vmem:[%s1] sm:$0xff]
        %v434 = vld [vmem:[%s1 + $0x8] sm:$0xff]
        %v435 = vld [vmem:[%s1 + $0x10] sm:$0xff]
        %v436 = vld [vmem:[%s1 + $0x18] sm:$0xff]
        %v437 = vld [vmem:[%s1 + $0x20] sm:$0xff]
        %v438 = vld [vmem:[%s1 + $0x28] sm:$0xff]
        %v439 = vld [vmem:[%s1 + $0x30] sm:$0xff]
        %v440 = vld [vmem:[%s1 + $0x38] sm:$0xff]
        %v441 = vld [vmem:[%s1 + $0x40] sm:$0xff]
        %v442 = vld [vmem:[%s1 + $0x48] sm:$0xff]
        %v443 = vld [vmem:[%s1 + $0x50] sm:$0xff]
        %v444 = vld [vmem:[%s1 + $0x58] sm:$0xff]
        %v445 = vld [vmem:[%s1 + $0x60] sm:$0xff]
        %v446 = vld [vmem:[%s1 + $0x68] sm:$0xff]
        %v447 = vld [vmem:[%s1 + $0x70] sm:$0xff]
        %v448 = vld [vmem:[%s1 + $0x78] sm:$0xff]
        %v449 = vld [vmem:[%s1 + $0x80] sm:$0xff]
        %v450 = vld [vmem:[%s1 + $0x88] sm:$0xff]
        %v451 = vld [vmem:[%s1 + $0x90] sm:$0xff]
        %v452 = vld [vmem:[%s1 + $0x98] sm:$0xff]
        %v453 = vld [vmem:[%s1 + $0xa0] sm:$0xff]
        %v454 = vld [vmem:[%s1 + $0xa8] sm:$0xff]
        %v455 = vld [vmem:[%s1 + $0xb0] sm:$0xff]
        %v456 = vld [vmem:[%s1 + $0xb8] sm:$0xff]
        %v457 = vld [vmem:[%s1 + $0xc0] sm:$0xff]
        %v458 = vld [vmem:[%s1 + $0xc8] sm:$0xff]
        %v459 = vld [vmem:[%s1 + $0xd0] sm:$0xff]
        %v460 = vld [vmem:[%s1 + $0xd8] sm:$0xff]
        %v461 = vld [vmem:[%s1 + $0xe0] sm:$0xff]
        %v462 = vld [vmem:[%s1 + $0xe8] sm:$0xff]
        %v463 = vld [vmem:[%s1 + $0xf0] sm:$0xff]
        %v464 = vld [vmem:[%s1 + $0xf8] sm:$0xff]
        %v465 = vld [vmem:[%s1 + $0x100] sm:$0xff]
        %v466 = vld [vmem:[%s1 + $0x108] sm:$0xff]
        %v467 = vld [vmem:[%s1 + $0x110] sm:$0xff]
        %v468 = vld [vmem:[%s1 + $0x118] sm:$0xff]
        %v469 = vld [vmem:[%s1 + $0x120] sm:$0xff]
        %v470 = vld [vmem:[%s1 + $0x128] sm:$0xff]
        %v471 = vld [vmem:[%s1 + $0x130] sm:$0xff]
        %v472 = vld [vmem:[%s1 + $0x138] sm:$0xff]
        %v473 = vld [vmem:[%s1 + $0x140] sm:$0xff]
        %v474 = vld [vmem:[%s1 + $0x148] sm:$0xff]
        %v475 = vld [vmem:[%s1 + $0x150] sm:$0xff]
        %v476 = vld [vmem:[%s1 + $0x158] sm:$0xff]
        %v477 = vld [vmem:[%s1 + $0x160] sm:$0xff]
        %v478 = vld [vmem:[%s1 + $0x168] sm:$0xff]
        %v479 = vld [vmem:[%s1 + $0x170] sm:$0xff]
        %v480 = vld [vmem:[%s1 + $0x178] sm:$0xff]
        %v481 = vld [vmem:[%s1 + $0x180] sm:$0xff]
        %v482 = vld [vmem:[%s1 + $0x188] sm:$0xff]
        %v483 = vld [vmem:[%s1 + $0x190] sm:$0xff]
        %v484 = vld [vmem:[%s1 + $0x198] sm:$0xff]
        %v485 = vld [vmem:[%s1 + $0x1a0] sm:$0xff]
        %v486 = vld [vmem:[%s1 + $0x1a8] sm:$0xff]
        %v487 = vld [vmem:[%s1 + $0x1b0] sm:$0xff]
        %v488 = vld [vmem:[%s1 + $0x1b8] sm:$0xff]
        %v489 = vld [vmem:[%s1 + $0x1c0] sm:$0xff]
        %v490 = vld [vmem:[%s1 + $0x1c8] sm:$0xff]
        %v491 = vld [vmem:[%s1 + $0x1d0] sm:$0xff]
        %v492 = vld [vmem:[%s1 + $0x1d8] sm:$0xff]
        %v493 = vld [vmem:[%s1 + $0x1e0] sm:$0xff]
        %v494 = vld [vmem:[%s1 + $0x1e8] sm:$0xff]
        %v495 = vld [vmem:[%s1 + $0x1f0] sm:$0xff]
        %v496 = vld [vmem:[%s1 + $0x1f8] sm:$0xff]
        %v497 = vld [vmem:[%s1 + $0x200] sm:$0xff]
        %v498 = vld [vmem:[%s1 + $0x208] sm:$0xff]
        %v499 = vld [vmem:[%s1 + $0x210] sm:$0xff]
        %v500 = vld [vmem:[%s1 + $0x218] sm:$0xff]
        %v501 = vld [vmem:[%s1 + $0x220] sm:$0xff]
        %v502 = vld [vmem:[%s1 + $0x228] sm:$0xff]
        %v503 = vld [vmem:[%s1 + $0x230] sm:$0xff]
        %v504 = vld [vmem:[%s1 + $0x238] sm:$0xff]
        %v505 = vld [vmem:[%s1 + $0x240] sm:$0xff]
        %v506 = vld [vmem:[%s1 + $0x248] sm:$0xff]
        %v507 = vld [vmem:[%s1 + $0x250] sm:$0xff]
        %v508 = vld [vmem:[%s1 + $0x258] sm:$0xff]
        %v509 = vld [vmem:[%s1 + $0x260] sm:$0xff]
        %v510 = vld [vmem:[%s1 + $0x268] sm:$0xff]
        %v511 = vld [vmem:[%s1 + $0x270] sm:$0xff]
        %v512 = vld [vmem:[%s1 + $0x278] sm:$0xff]
        %v513 = vld [vmem:[%s1 + $0x280] sm:$0xff]
        %v514 = vld [vmem:[%s1 + $0x288] sm:$0xff]
        %v515 = vld [vmem:[%s1 + $0x290] sm:$0xff]
        %v516 = vld [vmem:[%s1 + $0x298] sm:$0xff]
        %v517 = vld [vmem:[%s1 + $0x2a0] sm:$0xff]
        %v518 = vld [vmem:[%s1 + $0x2a8] sm:$0xff]
        %v519 = vld [vmem:[%s1 + $0x2b0] sm:$0xff]
        %v520 = vld [vmem:[%s1 + $0x2b8] sm:$0xff]
        %v521 = vld [vmem:[%s1 + $0x2c0] sm:$0xff]
        %v522 = vld [vmem:[%s1 + $0x2c8] sm:$0xff]
        %v523 = vld [vmem:[%s1 + $0x2d0] sm:$0xff]
        %v524 = vld [vmem:[%s1 + $0x2d8] sm:$0xff]
        %v525 = vld [vmem:[%s1 + $0x2e0] sm:$0xff]
        %v526 = vld [vmem:[%s1 + $0x2e8] sm:$0xff]
        %v527 = vld [vmem:[%s1 + $0x2f0] sm:$0xff]
        %v528 = vld [vmem:[%s1 + $0x2f8] sm:$0xff]
        %v529 = vld [vmem:[%s2] sm:$0x3]
        %v531 = vlaneseq
        %v532 = vshrl.u32 %v531, 7
        %v533 = vsub.s32 0, %v532
        %v534 = vrot.slane %v529, %v533
        %v535 = vlaneseq
        %v536 = vshrl.u32 %v535, 7
        %v537 = vsub.s32 1, %v536
        %v538 = vrot.slane %v529, %v537
        %v652 = vunpack.c.l.b16 %v322
        %v653 = vunpack.c.h.b16 %v322
        %v654 = vunpack.c.l.b16 %v323
        %v655 = vunpack.c.h.b16 %v323
        %v656 = vunpack.c.l.b16 %v324
        %v657 = vunpack.c.h.b16 %v324
        %v658 = vunpack.c.l.b16 %v325
        %v659 = vunpack.c.h.b16 %v325
        %v660 = vunpack.c.l.b16 %v326
        %v661 = vunpack.c.h.b16 %v326
        %v662 = vunpack.c.l.b16 %v327
        %v663 = vunpack.c.h.b16 %v327
        %v664 = vunpack.c.l.b16 %v328
        %v665 = vunpack.c.h.b16 %v328
        %v666 = vunpack.c.l.b16 %v329
        %v667 = vunpack.c.h.b16 %v329
        %v668 = vunpack.c.l.b16 %v330
        %v669 = vunpack.c.h.b16 %v330
        %v670 = vunpack.c.l.b16 %v331
        %v671 = vunpack.c.h.b16 %v331
        %v672 = vunpack.c.l.b16 %v332
        %v673 = vunpack.c.h.b16 %v332
        %v674 = vunpack.c.l.b16 %v333
        %v675 = vunpack.c.h.b16 %v333
        %v676 = vunpack.c.l.b16 %v334
        %v677 = vunpack.c.h.b16 %v334
        %v678 = vunpack.c.l.b16 %v335
        %v679 = vunpack.c.h.b16 %v335
        %v680 = vunpack.c.l.b16 %v336
        %v681 = vunpack.c.h.b16 %v336
        %v682 = vunpack.c.l.b16 %v337
        %v683 = vunpack.c.h.b16 %v337
        %v684 = vunpack.c.l.b16 %v338
        %v685 = vunpack.c.h.b16 %v338
        %v686 = vunpack.c.l.b16 %v339
        %v687 = vunpack.c.h.b16 %v339
        %v688 = vunpack.c.l.b16 %v340
        %v689 = vunpack.c.h.b16 %v340
        %v690 = vunpack.c.l.b16 %v341
        %v691 = vunpack.c.h.b16 %v341
        %v692 = vunpack.c.l.b16 %v342
        %v693 = vunpack.c.h.b16 %v342
        %v694 = vunpack.c.l.b16 %v343
        %v695 = vunpack.c.h.b16 %v343
        %v696 = vunpack.c.l.b16 %v344
        %v697 = vunpack.c.h.b16 %v344
        %v698 = vunpack.c.l.b16 %v345
        %v699 = vunpack.c.h.b16 %v345
        %v700 = vunpack.c.l.b16 %v346
        %v701 = vunpack.c.h.b16 %v346
        %v702 = vunpack.c.l.b16 %v347
        %v703 = vunpack.c.h.b16 %v347
        %v704 = vunpack.c.l.b16 %v348
        %v705 = vunpack.c.h.b16 %v348
        %v706 = vunpack.c.l.b16 %v349
        %v707 = vunpack.c.h.b16 %v349
        %v708 = vunpack.c.l.b16 %v350
        %v709 = vunpack.c.h.b16 %v350
        %v710 = vunpack.c.l.b16 %v351
        %v711 = vunpack.c.h.b16 %v351
        %v712 = vunpack.c.l.b16 %v352
        %v713 = vunpack.c.h.b16 %v352
        %v714 = vunpack.c.l.b16 %v353
        %v715 = vunpack.c.h.b16 %v353
        %v716 = vunpack.c.l.b16 %v354
        %v717 = vunpack.c.h.b16 %v354
        %v718 = vunpack.c.l.b16 %v355
        %v719 = vunpack.c.h.b16 %v355
        %v720 = vunpack.c.l.b16 %v356
        %v721 = vunpack.c.h.b16 %v356
        %v722 = vunpack.c.l.b16 %v357
        %v723 = vunpack.c.h.b16 %v357
        %v724 = vunpack.c.l.b16 %v358
        %v725 = vunpack.c.h.b16 %v358
        %v726 = vunpack.c.l.b16 %v359
        %v727 = vunpack.c.h.b16 %v359
        %v728 = vunpack.c.l.b16 %v360
        %v729 = vunpack.c.h.b16 %v360
        %v730 = vunpack.c.l.b16 %v361
        %v731 = vunpack.c.h.b16 %v361
        %v732 = vunpack.c.l.b16 %v362
        %v733 = vunpack.c.h.b16 %v362
        %v734 = vunpack.c.l.b16 %v363
        %v735 = vunpack.c.h.b16 %v363
        %v736 = vunpack.c.l.b16 %v364
        %v737 = vunpack.c.h.b16 %v364
        %v738 = vunpack.c.l.b16 %v365
        %v739 = vunpack.c.h.b16 %v365
        %v740 = vunpack.c.l.b16 %v366
        %v741 = vunpack.c.h.b16 %v366
        %v742 = vunpack.c.l.b16 %v367
        %v743 = vunpack.c.h.b16 %v367
        %v744 = vunpack.c.l.b16 %v368
        %v745 = vunpack.c.h.b16 %v368
        %v746 = vunpack.c.l.b16 %v369
        %v747 = vunpack.c.h.b16 %v369
        %v748 = vunpack.c.l.b16 %v370
        %v749 = vunpack.c.h.b16 %v370
        %v750 = vunpack.c.l.b16 %v371
        %v751 = vunpack.c.h.b16 %v371
        %v752 = vunpack.c.l.b16 %v372
        %v753 = vunpack.c.h.b16 %v372
        %v754 = vunpack.c.l.b16 %v373
        %v755 = vunpack.c.h.b16 %v373
        %v756 = vunpack.c.l.b16 %v374
        %v757 = vunpack.c.h.b16 %v374
        %v758 = vunpack.c.l.b16 %v375
        %v759 = vunpack.c.h.b16 %v375
        %v760 = vunpack.c.l.b16 %v376
        %v761 = vunpack.c.h.b16 %v376
        %v762 = vunpack.c.l.b16 %v377
        %v763 = vunpack.c.h.b16 %v377
        %v764 = vunpack.c.l.b16 %v378
        %v765 = vunpack.c.h.b16 %v378
        %v766 = vunpack.c.l.b16 %v379
        %v767 = vunpack.c.h.b16 %v379
        %v768 = vunpack.c.l.b16 %v380
        %v769 = vunpack.c.h.b16 %v380
        %v770 = vunpack.c.l.b16 %v381
        %v771 = vunpack.c.h.b16 %v381
        %v772 = vunpack.c.l.b16 %v382
        %v773 = vunpack.c.h.b16 %v382
        %v774 = vunpack.c.l.b16 %v383
        %v775 = vunpack.c.h.b16 %v383
        %v776 = vunpack.c.l.b16 %v384
        %v777 = vunpack.c.h.b16 %v384
        %v778 = vunpack.c.l.b16 %v385
        %v779 = vunpack.c.h.b16 %v385
        %v780 = vunpack.c.l.b16 %v386
        %v781 = vunpack.c.h.b16 %v386
        %v782 = vunpack.c.l.b16 %v387
        %v783 = vunpack.c.h.b16 %v387
        %v784 = vunpack.c.l.b16 %v388
        %v785 = vunpack.c.h.b16 %v388
        %v786 = vunpack.c.l.b16 %v389
        %v787 = vunpack.c.h.b16 %v389
        %v788 = vunpack.c.l.b16 %v390
        %v789 = vunpack.c.h.b16 %v390
        %v790 = vunpack.c.l.b16 %v391
        %v791 = vunpack.c.h.b16 %v391
        %v792 = vunpack.c.l.b16 %v392
        %v793 = vunpack.c.h.b16 %v392
        %v794 = vunpack.c.l.b16 %v393
        %v795 = vunpack.c.h.b16 %v393
        %v796 = vunpack.c.l.b16 %v394
        %v797 = vunpack.c.h.b16 %v394
        %v798 = vunpack.c.l.b16 %v395
        %v799 = vunpack.c.h.b16 %v395
        %v800 = vunpack.c.l.b16 %v396
        %v801 = vunpack.c.h.b16 %v396
        %v802 = vunpack.c.l.b16 %v397
        %v803 = vunpack.c.h.b16 %v397
        %v804 = vunpack.c.l.b16 %v398
        %v805 = vunpack.c.h.b16 %v398
        %v806 = vunpack.c.l.b16 %v399
        %v807 = vunpack.c.h.b16 %v399
        %v808 = vunpack.c.l.b16 %v400
        %v809 = vunpack.c.h.b16 %v400
        %v810 = vunpack.c.l.b16 %v401
        %v811 = vunpack.c.h.b16 %v401
        %v812 = vunpack.c.l.b16 %v402
        %v813 = vunpack.c.h.b16 %v402
        %v814 = vunpack.c.l.b16 %v403
        %v815 = vunpack.c.h.b16 %v403
        %v816 = vunpack.c.l.b16 %v404
        %v817 = vunpack.c.h.b16 %v404
        %v818 = vunpack.c.l.b16 %v405
        %v819 = vunpack.c.h.b16 %v405
        %v820 = vunpack.c.l.b16 %v406
        %v821 = vunpack.c.h.b16 %v406
        %v822 = vunpack.c.l.b16 %v407
        %v823 = vunpack.c.h.b16 %v407
        %v824 = vunpack.c.l.b16 %v408
        %v825 = vunpack.c.h.b16 %v408
        %v826 = vunpack.c.l.b16 %v409
        %v827 = vunpack.c.h.b16 %v409
        %v828 = vunpack.c.l.b16 %v410
        %v829 = vunpack.c.h.b16 %v410
        %v830 = vunpack.c.l.b16 %v411
        %v831 = vunpack.c.h.b16 %v411
        %v832 = vunpack.c.l.b16 %v412
        %v833 = vunpack.c.h.b16 %v412
        %v834 = vunpack.c.l.b16 %v413
        %v835 = vunpack.c.h.b16 %v413
        %v836 = vunpack.c.l.b16 %v414
        %v837 = vunpack.c.h.b16 %v414
        %v838 = vunpack.c.l.b16 %v415
        %v839 = vunpack.c.h.b16 %v415
        %v840 = vunpack.c.l.b16 %v416
        %v841 = vunpack.c.h.b16 %v416
        %v842 = vunpack.c.l.b16 %v417
        %v843 = vunpack.c.h.b16 %v417
        %v844 = vunpack.c.l.b16 %v418
        %v845 = vunpack.c.h.b16 %v418
        %v846 = vunpack.c.l.b16 %v419
        %v847 = vunpack.c.h.b16 %v419
        %v848 = vunpack.c.l.b16 %v420
        %v849 = vunpack.c.h.b16 %v420
        %v850 = vunpack.c.l.b16 %v421
        %v851 = vunpack.c.h.b16 %v421
        %v852 = vunpack.c.l.b16 %v422
        %v853 = vunpack.c.h.b16 %v422
        %v854 = vunpack.c.l.b16 %v423
        %v855 = vunpack.c.h.b16 %v423
        %v856 = vunpack.c.l.b16 %v424
        %v857 = vunpack.c.h.b16 %v424
        %v858 = vunpack.c.l.b16 %v425
        %v859 = vunpack.c.h.b16 %v425
        %v860 = vunpack.c.l.b16 %v426
        %v861 = vunpack.c.h.b16 %v426
        %v862 = vunpack.c.l.b16 %v427
        %v863 = vunpack.c.h.b16 %v427
        %v864 = vunpack.c.l.b16 %v428
        %v865 = vunpack.c.h.b16 %v428
        %v866 = vunpack.c.l.b16 %v429
        %v867 = vunpack.c.h.b16 %v429
        %v868 = vunpack.c.l.b16 %v430
        %v869 = vunpack.c.h.b16 %v430
        %v870 = vunpack.c.l.b16 %v431
        %v871 = vunpack.c.h.b16 %v431
        %v872 = vunpack.c.l.b16 %v432
        %v873 = vunpack.c.h.b16 %v432
        %v874 = vpack.c.b16 %v658, %v652
        %v875 = vpack.c.b16 %v659, %v653
        %v876 = vpack.c.b16 %v660, %v654
        %v877 = vpack.c.b16 %v661, %v655
        %v878 = vpack.c.b16 %v662, %v656
        %v879 = vpack.c.b16 %v663, %v657
        %v880 = vpack.c.b16 %v670, %v664
        %v881 = vpack.c.b16 %v671, %v665
        %v882 = vpack.c.b16 %v672, %v666
        %v883 = vpack.c.b16 %v673, %v667
        %v884 = vpack.c.b16 %v674, %v668
        %v885 = vpack.c.b16 %v675, %v669
        %v886 = vpack.c.b16 %v682, %v676
        %v887 = vpack.c.b16 %v683, %v677
        %v888 = vpack.c.b16 %v684, %v678
        %v889 = vpack.c.b16 %v685, %v679
        %v890 = vpack.c.b16 %v686, %v680
        %v891 = vpack.c.b16 %v687, %v681
        %v892 = vpack.c.b16 %v694, %v688
        %v893 = vpack.c.b16 %v695, %v689
        %v894 = vpack.c.b16 %v696, %v690
        %v895 = vpack.c.b16 %v697, %v691
        %v896 = vpack.c.b16 %v698, %v692
        %v897 = vpack.c.b16 %v699, %v693
        %v898 = vpack.c.b16 %v706, %v700
        %v899 = vpack.c.b16 %v707, %v701
        %v900 = vpack.c.b16 %v708, %v702
        %v901 = vpack.c.b16 %v709, %v703
        %v902 = vpack.c.b16 %v710, %v704
        %v903 = vpack.c.b16 %v711, %v705
        %v904 = vpack.c.b16 %v718, %v712
        %v905 = vpack.c.b16 %v719, %v713
        %v906 = vpack.c.b16 %v720, %v714
        %v907 = vpack.c.b16 %v721, %v715
        %v908 = vpack.c.b16 %v722, %v716
        %v909 = vpack.c.b16 %v723, %v717
        %v910 = vpack.c.b16 %v730, %v724
        %v911 = vpack.c.b16 %v731, %v725
        %v912 = vpack.c.b16 %v732, %v726
        %v913 = vpack.c.b16 %v733, %v727
        %v914 = vpack.c.b16 %v734, %v728
        %v915 = vpack.c.b16 %v735, %v729
        %v916 = vpack.c.b16 %v742, %v736
        %v917 = vpack.c.b16 %v743, %v737
        %v918 = vpack.c.b16 %v744, %v738
        %v919 = vpack.c.b16 %v745, %v739
        %v920 = vpack.c.b16 %v746, %v740
        %v921 = vpack.c.b16 %v747, %v741
        %v922 = vpack.c.b16 %v754, %v748
        %v923 = vpack.c.b16 %v755, %v749
        %v924 = vpack.c.b16 %v756, %v750
        %v925 = vpack.c.b16 %v757, %v751
        %v926 = vpack.c.b16 %v758, %v752
        %v927 = vpack.c.b16 %v759, %v753
        %v928 = vpack.c.b16 %v766, %v760
        %v929 = vpack.c.b16 %v767, %v761
        %v930 = vpack.c.b16 %v768, %v762
        %v931 = vpack.c.b16 %v769, %v763
        %v932 = vpack.c.b16 %v770, %v764
        %v933 = vpack.c.b16 %v771, %v765
        %v934 = vpack.c.b16 %v778, %v772
        %v935 = vpack.c.b16 %v779, %v773
        %v936 = vpack.c.b16 %v780, %v774
        %v937 = vpack.c.b16 %v781, %v775
        %v938 = vpack.c.b16 %v782, %v776
        %v939 = vpack.c.b16 %v783, %v777
        %v940 = vpack.c.b16 %v790, %v784
        %v941 = vpack.c.b16 %v791, %v785
        %v942 = vpack.c.b16 %v792, %v786
        %v943 = vpack.c.b16 %v793, %v787
        %v944 = vpack.c.b16 %v794, %v788
        %v945 = vpack.c.b16 %v795, %v789
        %v946 = vpack.c.b16 %v802, %v796
        %v947 = vpack.c.b16 %v803, %v797
        %v948 = vpack.c.b16 %v804, %v798
        %v949 = vpack.c.b16 %v805, %v799
        %v950 = vpack.c.b16 %v806, %v800
        %v951 = vpack.c.b16 %v807, %v801
        %v952 = vpack.c.b16 %v814, %v808
        %v953 = vpack.c.b16 %v815, %v809
        %v954 = vpack.c.b16 %v816, %v810
        %v955 = vpack.c.b16 %v817, %v811
        %v956 = vpack.c.b16 %v818, %v812
        %v957 = vpack.c.b16 %v819, %v813
        %v958 = vpack.c.b16 %v826, %v820
        %v959 = vpack.c.b16 %v827, %v821
        %v960 = vpack.c.b16 %v828, %v822
        %v961 = vpack.c.b16 %v829, %v823
        %v962 = vpack.c.b16 %v830, %v824
        %v963 = vpack.c.b16 %v831, %v825
        %v964 = vpack.c.b16 %v838, %v832
        %v965 = vpack.c.b16 %v839, %v833
        %v966 = vpack.c.b16 %v840, %v834
        %v967 = vpack.c.b16 %v841, %v835
        %v968 = vpack.c.b16 %v842, %v836
        %v969 = vpack.c.b16 %v843, %v837
        %v970 = vpack.c.b16 %v850, %v844
        %v971 = vpack.c.b16 %v851, %v845
        %v972 = vpack.c.b16 %v852, %v846
        %v973 = vpack.c.b16 %v853, %v847
        %v974 = vpack.c.b16 %v854, %v848
        %v975 = vpack.c.b16 %v855, %v849
        %v976 = vpack.c.b16 %v862, %v856
        %v977 = vpack.c.b16 %v863, %v857
        %v978 = vpack.c.b16 %v864, %v858
        %v979 = vpack.c.b16 %v865, %v859
        %v980 = vpack.c.b16 %v866, %v860
        %v981 = vpack.c.b16 %v867, %v861
        %v982 = vpack.c.b16 %v868, %v868
        %v983 = vpack.c.b16 %v869, %v869
        %v984 = vpack.c.b16 %v870, %v870
        %v985 = vpack.c.b16 %v871, %v871
        %v986 = vpack.c.b16 %v872, %v872
        %v987 = vpack.c.b16 %v873, %v873
        %v1198 = vunpack.c.l.b16 %v433
        %v1199 = vunpack.c.h.b16 %v433
        %v1200 = vunpack.c.l.b16 %v434
        %v1201 = vunpack.c.h.b16 %v434
        %v1202 = vunpack.c.l.b16 %v435
        %v1203 = vunpack.c.h.b16 %v435
        %v1204 = vunpack.c.l.b16 %v436
        %v1205 = vunpack.c.h.b16 %v436
        %v1206 = vunpack.c.l.b16 %v437
        %v1207 = vunpack.c.h.b16 %v437
        %v1208 = vunpack.c.l.b16 %v438
        %v1209 = vunpack.c.h.b16 %v438
        %v1210 = vunpack.c.l.b16 %v439
        %v1211 = vunpack.c.h.b16 %v439
        %v1212 = vunpack.c.l.b16 %v440
        %v1213 = vunpack.c.h.b16 %v440
        %v1214 = vunpack.c.l.b16 %v441
        %v1215 = vunpack.c.h.b16 %v441
        %v1216 = vunpack.c.l.b16 %v442
        %v1217 = vunpack.c.h.b16 %v442
        %v1218 = vunpack.c.l.b16 %v443
        %v1219 = vunpack.c.h.b16 %v443
        %v1220 = vunpack.c.l.b16 %v444
        %v1221 = vunpack.c.h.b16 %v444
        %v1222 = vunpack.c.l.b16 %v445
        %v1223 = vunpack.c.h.b16 %v445
        %v1224 = vunpack.c.l.b16 %v446
        %v1225 = vunpack.c.h.b16 %v446
        %v1226 = vunpack.c.l.b16 %v447
        %v1227 = vunpack.c.h.b16 %v447
        %v1228 = vunpack.c.l.b16 %v448
        %v1229 = vunpack.c.h.b16 %v448
        %v1230 = vunpack.c.l.b16 %v449
        %v1231 = vunpack.c.h.b16 %v449
        %v1232 = vunpack.c.l.b16 %v450
        %v1233 = vunpack.c.h.b16 %v450
        %v1234 = vunpack.c.l.b16 %v451
        %v1235 = vunpack.c.h.b16 %v451
        %v1236 = vunpack.c.l.b16 %v452
        %v1237 = vunpack.c.h.b16 %v452
        %v1238 = vunpack.c.l.b16 %v453
        %v1239 = vunpack.c.h.b16 %v453
        %v1240 = vunpack.c.l.b16 %v454
        %v1241 = vunpack.c.h.b16 %v454
        %v1242 = vunpack.c.l.b16 %v455
        %v1243 = vunpack.c.h.b16 %v455
        %v1244 = vunpack.c.l.b16 %v456
        %v1245 = vunpack.c.h.b16 %v456
        %v1246 = vunpack.c.l.b16 %v457
        %v1247 = vunpack.c.h.b16 %v457
        %v1248 = vunpack.c.l.b16 %v458
        %v1249 = vunpack.c.h.b16 %v458
        %v1250 = vunpack.c.l.b16 %v459
        %v1251 = vunpack.c.h.b16 %v459
        %v1252 = vunpack.c.l.b16 %v460
        %v1253 = vunpack.c.h.b16 %v460
        %v1254 = vunpack.c.l.b16 %v461
        %v1255 = vunpack.c.h.b16 %v461
        %v1256 = vunpack.c.l.b16 %v462
        %v1257 = vunpack.c.h.b16 %v462
        %v1258 = vunpack.c.l.b16 %v463
        %v1259 = vunpack.c.h.b16 %v463
        %v1260 = vunpack.c.l.b16 %v464
        %v1261 = vunpack.c.h.b16 %v464
        %v1262 = vunpack.c.l.b16 %v465
        %v1263 = vunpack.c.h.b16 %v465
        %v1264 = vunpack.c.l.b16 %v466
        %v1265 = vunpack.c.h.b16 %v466
        %v1266 = vunpack.c.l.b16 %v467
        %v1267 = vunpack.c.h.b16 %v467
        %v1268 = vunpack.c.l.b16 %v468
        %v1269 = vunpack.c.h.b16 %v468
        %v1270 = vunpack.c.l.b16 %v469
        %v1271 = vunpack.c.h.b16 %v469
        %v1272 = vunpack.c.l.b16 %v470
        %v1273 = vunpack.c.h.b16 %v470
        %v1274 = vunpack.c.l.b16 %v471
        %v1275 = vunpack.c.h.b16 %v471
        %v1276 = vunpack.c.l.b16 %v472
        %v1277 = vunpack.c.h.b16 %v472
        %v1278 = vunpack.c.l.b16 %v473
        %v1279 = vunpack.c.h.b16 %v473
        %v1280 = vunpack.c.l.b16 %v474
        %v1281 = vunpack.c.h.b16 %v474
        %v1282 = vunpack.c.l.b16 %v475
        %v1283 = vunpack.c.h.b16 %v475
        %v1284 = vunpack.c.l.b16 %v476
        %v1285 = vunpack.c.h.b16 %v476
        %v1286 = vunpack.c.l.b16 %v477
        %v1287 = vunpack.c.h.b16 %v477
        %v1288 = vunpack.c.l.b16 %v478
        %v1289 = vunpack.c.h.b16 %v478
        %v1290 = vunpack.c.l.b16 %v479
        %v1291 = vunpack.c.h.b16 %v479
        %v1292 = vunpack.c.l.b16 %v480
        %v1293 = vunpack.c.h.b16 %v480
        %v1294 = vunpack.c.l.b16 %v481
        %v1295 = vunpack.c.h.b16 %v481
        %v1296 = vunpack.c.l.b16 %v482
        %v1297 = vunpack.c.h.b16 %v482
        %v1298 = vunpack.c.l.b16 %v483
        %v1299 = vunpack.c.h.b16 %v483
        %v1300 = vunpack.c.l.b16 %v484
        %v1301 = vunpack.c.h.b16 %v484
        %v1302 = vunpack.c.l.b16 %v485
        %v1303 = vunpack.c.h.b16 %v485
        %v1304 = vunpack.c.l.b16 %v486
        %v1305 = vunpack.c.h.b16 %v486
        %v1306 = vunpack.c.l.b16 %v487
        %v1307 = vunpack.c.h.b16 %v487
        %v1308 = vunpack.c.l.b16 %v488
        %v1309 = vunpack.c.h.b16 %v488
        %v1310 = vunpack.c.l.b16 %v489
        %v1311 = vunpack.c.h.b16 %v489
        %v1312 = vunpack.c.l.b16 %v490
        %v1313 = vunpack.c.h.b16 %v490
        %v1314 = vunpack.c.l.b16 %v491
        %v1315 = vunpack.c.h.b16 %v491
        %v1316 = vunpack.c.l.b16 %v492
        %v1317 = vunpack.c.h.b16 %v492
        %v1318 = vunpack.c.l.b16 %v493
        %v1319 = vunpack.c.h.b16 %v493
        %v1320 = vunpack.c.l.b16 %v494
        %v1321 = vunpack.c.h.b16 %v494
        %v1322 = vunpack.c.l.b16 %v495
        %v1323 = vunpack.c.h.b16 %v495
        %v1324 = vunpack.c.l.b16 %v496
        %v1325 = vunpack.c.h.b16 %v496
        %v1326 = vunpack.c.l.b16 %v497
        %v1327 = vunpack.c.h.b16 %v497
        %v1328 = vunpack.c.l.b16 %v498
        %v1329 = vunpack.c.h.b16 %v498
        %v1330 = vunpack.c.l.b16 %v499
        %v1331 = vunpack.c.h.b16 %v499
        %v1332 = vunpack.c.l.b16 %v500
        %v1333 = vunpack.c.h.b16 %v500
        %v1334 = vunpack.c.l.b16 %v501
        %v1335 = vunpack.c.h.b16 %v501
        %v1336 = vunpack.c.l.b16 %v502
        %v1337 = vunpack.c.h.b16 %v502
        %v1338 = vunpack.c.l.b16 %v503
        %v1339 = vunpack.c.h.b16 %v503
        %v1340 = vunpack.c.l.b16 %v504
        %v1341 = vunpack.c.h.b16 %v504
        %v1342 = vunpack.c.l.b16 %v505
        %v1343 = vunpack.c.h.b16 %v505
        %v1344 = vunpack.c.l.b16 %v506
        %v1345 = vunpack.c.h.b16 %v506
        %v1346 = vunpack.c.l.b16 %v507
        %v1347 = vunpack.c.h.b16 %v507
        %v1348 = vunpack.c.l.b16 %v508
        %v1349 = vunpack.c.h.b16 %v508
        %v1350 = vunpack.c.l.b16 %v509
        %v1351 = vunpack.c.h.b16 %v509
        %v1352 = vunpack.c.l.b16 %v510
        %v1353 = vunpack.c.h.b16 %v510
        %v1354 = vunpack.c.l.b16 %v511
        %v1355 = vunpack.c.h.b16 %v511
        %v1356 = vunpack.c.l.b16 %v512
        %v1357 = vunpack.c.h.b16 %v512
        %v1358 = vunpack.c.l.b16 %v513
        %v1359 = vunpack.c.h.b16 %v513
        %v1360 = vunpack.c.l.b16 %v514
        %v1361 = vunpack.c.h.b16 %v514
        %v1362 = vunpack.c.l.b16 %v515
        %v1363 = vunpack.c.h.b16 %v515
        %v1364 = vunpack.c.l.b16 %v516
        %v1365 = vunpack.c.h.b16 %v516
        %v1366 = vunpack.c.l.b16 %v517
        %v1367 = vunpack.c.h.b16 %v517
        %v1368 = vunpack.c.l.b16 %v518
        %v1369 = vunpack.c.h.b16 %v518
        %v1370 = vunpack.c.l.b16 %v519
        %v1371 = vunpack.c.h.b16 %v519
        %v1372 = vunpack.c.l.b16 %v520
        %v1373 = vunpack.c.h.b16 %v520
        %v1374 = vunpack.c.l.b16 %v521
        %v1375 = vunpack.c.h.b16 %v521
        %v1376 = vunpack.c.l.b16 %v522
        %v1377 = vunpack.c.h.b16 %v522
        %v1378 = vunpack.c.l.b16 %v523
        %v1379 = vunpack.c.h.b16 %v523
        %v1380 = vunpack.c.l.b16 %v524
        %v1381 = vunpack.c.h.b16 %v524
        %v1382 = vunpack.c.l.b16 %v525
        %v1383 = vunpack.c.h.b16 %v525
        %v1384 = vunpack.c.l.b16 %v526
        %v1385 = vunpack.c.h.b16 %v526
        %v1386 = vunpack.c.l.b16 %v527
        %v1387 = vunpack.c.h.b16 %v527
        %v1388 = vunpack.c.l.b16 %v528
        %v1389 = vunpack.c.h.b16 %v528
        %v1390 = vpack.c.b16 %v1200, %v1198
        %v1391 = vpack.c.b16 %v1201, %v1199
        %v1392 = vpack.c.b16 %v1204, %v1202
        %v1393 = vpack.c.b16 %v1205, %v1203
        %v1394 = vpack.c.b16 %v1208, %v1206
        %v1395 = vpack.c.b16 %v1209, %v1207
        %v1396 = vpack.c.b16 %v1212, %v1210
        %v1397 = vpack.c.b16 %v1213, %v1211
        %v1398 = vpack.c.b16 %v1216, %v1214
        %v1399 = vpack.c.b16 %v1217, %v1215
        %v1400 = vpack.c.b16 %v1220, %v1218
        %v1401 = vpack.c.b16 %v1221, %v1219
        %v1402 = vpack.c.b16 %v1224, %v1222
        %v1403 = vpack.c.b16 %v1225, %v1223
        %v1404 = vpack.c.b16 %v1228, %v1226
        %v1405 = vpack.c.b16 %v1229, %v1227
        %v1406 = vpack.c.b16 %v1232, %v1230
        %v1407 = vpack.c.b16 %v1233, %v1231
        %v1408 = vpack.c.b16 %v1236, %v1234
        %v1409 = vpack.c.b16 %v1237, %v1235
        %v1410 = vpack.c.b16 %v1240, %v1238
        %v1411 = vpack.c.b16 %v1241, %v1239
        %v1412 = vpack.c.b16 %v1244, %v1242
        %v1413 = vpack.c.b16 %v1245, %v1243
        %v1414 = vpack.c.b16 %v1248, %v1246
        %v1415 = vpack.c.b16 %v1249, %v1247
        %v1416 = vpack.c.b16 %v1252, %v1250
        %v1417 = vpack.c.b16 %v1253, %v1251
        %v1418 = vpack.c.b16 %v1256, %v1254
        %v1419 = vpack.c.b16 %v1257, %v1255
        %v1420 = vpack.c.b16 %v1260, %v1258
        %v1421 = vpack.c.b16 %v1261, %v1259
        %v1422 = vpack.c.b16 %v1264, %v1262
        %v1423 = vpack.c.b16 %v1265, %v1263
        %v1424 = vpack.c.b16 %v1268, %v1266
        %v1425 = vpack.c.b16 %v1269, %v1267
        %v1426 = vpack.c.b16 %v1272, %v1270
        %v1427 = vpack.c.b16 %v1273, %v1271
        %v1428 = vpack.c.b16 %v1276, %v1274
        %v1429 = vpack.c.b16 %v1277, %v1275
        %v1430 = vpack.c.b16 %v1280, %v1278
        %v1431 = vpack.c.b16 %v1281, %v1279
        %v1432 = vpack.c.b16 %v1284, %v1282
        %v1433 = vpack.c.b16 %v1285, %v1283
        %v1434 = vpack.c.b16 %v1288, %v1286
        %v1435 = vpack.c.b16 %v1289, %v1287
        %v1436 = vpack.c.b16 %v1292, %v1290
        %v1437 = vpack.c.b16 %v1293, %v1291
        %v1438 = vpack.c.b16 %v1296, %v1294
        %v1439 = vpack.c.b16 %v1297, %v1295
        %v1440 = vpack.c.b16 %v1300, %v1298
        %v1441 = vpack.c.b16 %v1301, %v1299
        %v1442 = vpack.c.b16 %v1304, %v1302
        %v1443 = vpack.c.b16 %v1305, %v1303
        %v1444 = vpack.c.b16 %v1308, %v1306
        %v1445 = vpack.c.b16 %v1309, %v1307
        %v1446 = vpack.c.b16 %v1312, %v1310
        %v1447 = vpack.c.b16 %v1313, %v1311
        %v1448 = vpack.c.b16 %v1316, %v1314
        %v1449 = vpack.c.b16 %v1317, %v1315
        %v1450 = vpack.c.b16 %v1320, %v1318
        %v1451 = vpack.c.b16 %v1321, %v1319
        %v1452 = vpack.c.b16 %v1324, %v1322
        %v1453 = vpack.c.b16 %v1325, %v1323
        %v1454 = vpack.c.b16 %v1328, %v1326
        %v1455 = vpack.c.b16 %v1329, %v1327
        %v1456 = vpack.c.b16 %v1332, %v1330
        %v1457 = vpack.c.b16 %v1333, %v1331
        %v1458 = vpack.c.b16 %v1336, %v1334
        %v1459 = vpack.c.b16 %v1337, %v1335
        %v1460 = vpack.c.b16 %v1340, %v1338
        %v1461 = vpack.c.b16 %v1341, %v1339
        %v1462 = vpack.c.b16 %v1344, %v1342
        %v1463 = vpack.c.b16 %v1345, %v1343
        %v1464 = vpack.c.b16 %v1348, %v1346
        %v1465 = vpack.c.b16 %v1349, %v1347
        %v1466 = vpack.c.b16 %v1352, %v1350
        %v1467 = vpack.c.b16 %v1353, %v1351
        %v1468 = vpack.c.b16 %v1356, %v1354
        %v1469 = vpack.c.b16 %v1357, %v1355
        %v1470 = vpack.c.b16 %v1360, %v1358
        %v1471 = vpack.c.b16 %v1361, %v1359
        %v1472 = vpack.c.b16 %v1364, %v1362
        %v1473 = vpack.c.b16 %v1365, %v1363
        %v1474 = vpack.c.b16 %v1368, %v1366
        %v1475 = vpack.c.b16 %v1369, %v1367
        %v1476 = vpack.c.b16 %v1372, %v1370
        %v1477 = vpack.c.b16 %v1373, %v1371
        %v1478 = vpack.c.b16 %v1376, %v1374
        %v1479 = vpack.c.b16 %v1377, %v1375
        %v1480 = vpack.c.b16 %v1380, %v1378
        %v1481 = vpack.c.b16 %v1381, %v1379
        %v1482 = vpack.c.b16 %v1384, %v1382
        %v1483 = vpack.c.b16 %v1385, %v1383
        %v1484 = vpack.c.b16 %v1388, %v1386
        %v1485 = vpack.c.b16 %v1389, %v1387
        %1582 = vmatprep.subr.bf16.mxu0 %v1391
        %1583 = vmatpush1.bf16.msra.mxu0 %v1390
        %1584 = vmatprep.subr.bf16.mxu0 %v1393
        %1585 = vmatpush1.bf16.msra.mxu0 %v1392
        %1586 = vmatprep.subr.bf16.mxu0 %v1395
        %1587 = vmatpush1.bf16.msra.mxu0 %v1394
        %1588 = vmatprep.subr.bf16.mxu0 %v1397
        %1589 = vmatpush1.bf16.msra.mxu0 %v1396
        %1590 = vmatprep.subr.bf16.mxu0 %v1399
        %1591 = vmatpush1.bf16.msra.mxu0 %v1398
        %1592 = vmatprep.subr.bf16.mxu0 %v1401
        %1593 = vmatpush1.bf16.msra.mxu0 %v1400
        %1594 = vmatprep.subr.bf16.mxu0 %v1403
        %1595 = vmatpush1.bf16.msra.mxu0 %v1402
        %1596 = vmatprep.subr.bf16.mxu0 %v1405
        %1597 = vmatpush1.bf16.msra.mxu0 %v1404
        %1598 = vmatprep.subr.bf16.mxu0 %v1407
        %1599 = vmatpush1.bf16.msra.mxu0 %v1406
        %1600 = vmatprep.subr.bf16.mxu0 %v1409
        %1601 = vmatpush1.bf16.msra.mxu0 %v1408
        %1602 = vmatprep.subr.bf16.mxu0 %v1411
        %1603 = vmatpush1.bf16.msra.mxu0 %v1410
        %1604 = vmatprep.subr.bf16.mxu0 %v1413
        %1605 = vmatpush1.bf16.msra.mxu0 %v1412
        %1606 = vmatprep.subr.bf16.mxu0 %v1415
        %1607 = vmatpush1.bf16.msra.mxu0 %v1414
        %1608 = vmatprep.subr.bf16.mxu0 %v1417
        %1609 = vmatpush1.bf16.msra.mxu0 %v1416
        %1610 = vmatprep.subr.bf16.mxu0 %v1419
        %1611 = vmatpush1.bf16.msra.mxu0 %v1418
        %1612 = vmatprep.subr.bf16.mxu0 %v1421
        %1613 = vmatpush1.bf16.msra.mxu0 %v1420
        %1614 = vmatprep.mubr.bf16.mxu0 %v875
        %1615 = vmatmul.mubr.bf16.gmra.mrb[0].mxu0 %v874
        %v1616 = vpop.f32.mrb[0].mxu0
        %v1617 = vadd.f32 %v534, %v1616
        %v1618 = vpop.f32.mrb[0].mxu0
        %v1619 = vadd.f32 %v538, %v1618
        %v1620 = vpop.f32.mrb[0].mxu0
        %v1621 = vadd.f32 %v534, %v1620
        %v1622 = vpop.f32.mrb[0].mxu0
        %v1623 = vadd.f32 %v538, %v1622
        %1624 = vmatprep.mubr.bf16.mxu0 %v881
        %1625 = vmatmul.mubr.bf16.gmra.mrb[0].mxu0 %v880
        %v1626 = vpop.f32.mrb[0].mxu0
        %v1627 = vadd.f32 %v534, %v1626
        %v1628 = vpop.f32.mrb[0].mxu0
        %v1629 = vadd.f32 %v538, %v1628
        %v1630 = vpop.f32.mrb[0].mxu0
        %v1631 = vadd.f32 %v534, %v1630
        %v1632 = vpop.f32.mrb[0].mxu0
        %v1633 = vadd.f32 %v538, %v1632
        %1634 = vmatprep.mubr.bf16.mxu0 %v887
        %1635 = vmatmul.mubr.bf16.gmra.mrb[0].mxu0 %v886
        %v1636 = vpop.f32.mrb[0].mxu0
        %v1637 = vadd.f32 %v534, %v1636
        %v1638 = vpop.f32.mrb[0].mxu0
        %v1639 = vadd.f32 %v538, %v1638
        %v1640 = vpop.f32.mrb[0].mxu0
        %v1641 = vadd.f32 %v534, %v1640
        %v1642 = vpop.f32.mrb[0].mxu0
        %v1643 = vadd.f32 %v538, %v1642
        %1644 = vmatprep.mubr.bf16.mxu0 %v893
        %1645 = vmatmul.mubr.bf16.gmra.mrb[0].mxu0 %v892
        %v1646 = vpop.f32.mrb[0].mxu0
        %v1647 = vadd.f32 %v534, %v1646
        %v1648 = vpop.f32.mrb[0].mxu0
        %v1649 = vadd.f32 %v538, %v1648
        %v1650 = vpop.f32.mrb[0].mxu0
        %v1651 = vadd.f32 %v534, %v1650
        %v1652 = vpop.f32.mrb[0].mxu0
        %v1653 = vadd.f32 %v538, %v1652
        %1654 = vmatprep.mubr.bf16.mxu0 %v899
        %1655 = vmatmul.mubr.bf16.gmra.mrb[0].mxu0 %v898
        %v1656 = vpop.f32.mrb[0].mxu0
        %v1657 = vadd.f32 %v534, %v1656
        %v1658 = vpop.f32.mrb[0].mxu0
        %v1659 = vadd.f32 %v538, %v1658
        %v1660 = vpop.f32.mrb[0].mxu0
        %v1661 = vadd.f32 %v534, %v1660
        %v1662 = vpop.f32.mrb[0].mxu0
        %v1663 = vadd.f32 %v538, %v1662
        %1664 = vmatprep.mubr.bf16.mxu0 %v905
        %1665 = vmatmul.mubr.bf16.gmra.mrb[0].mxu0 %v904
        %v1666 = vpop.f32.mrb[0].mxu0
        %v1667 = vadd.f32 %v534, %v1666
        %v1668 = vpop.f32.mrb[0].mxu0
        %v1669 = vadd.f32 %v538, %v1668
        %v1670 = vpop.f32.mrb[0].mxu0
        %v1671 = vadd.f32 %v534, %v1670
        %v1672 = vpop.f32.mrb[0].mxu0
        %v1673 = vadd.f32 %v538, %v1672
        %1674 = vmatprep.mubr.bf16.mxu0 %v911
        %1675 = vmatmul.mubr.bf16.gmra.mrb[0].mxu0 %v910
        %v1676 = vpop.f32.mrb[0].mxu0
        %v1677 = vadd.f32 %v534, %v1676
        %v1678 = vpop.f32.mrb[0].mxu0
        %v1679 = vadd.f32 %v538, %v1678
        %v1680 = vpop.f32.mrb[0].mxu0
        %v1681 = vadd.f32 %v534, %v1680
        %v1682 = vpop.f32.mrb[0].mxu0
        %v1683 = vadd.f32 %v538, %v1682
        %1684 = vmatprep.mubr.bf16.mxu0 %v917
        %1685 = vmatmul.mubr.bf16.gmra.mrb[0].mxu0 %v916
        %v1686 = vpop.f32.mrb[0].mxu0
        %v1687 = vadd.f32 %v534, %v1686
        %v1688 = vpop.f32.mrb[0].mxu0
        %v1689 = vadd.f32 %v538, %v1688
        %v1690 = vpop.f32.mrb[0].mxu0
        %v1691 = vadd.f32 %v534, %v1690
        %v1692 = vpop.f32.mrb[0].mxu0
        %v1693 = vadd.f32 %v538, %v1692
        %1694 = vmatprep.mubr.bf16.mxu0 %v923
        %1695 = vmatmul.mubr.bf16.gmra.mrb[0].mxu0 %v922
        %v1696 = vpop.f32.mrb[0].mxu0
        %v1697 = vadd.f32 %v534, %v1696
        %v1698 = vpop.f32.mrb[0].mxu0
        %v1699 = vadd.f32 %v538, %v1698
        %v1700 = vpop.f32.mrb[0].mxu0
        %v1701 = vadd.f32 %v534, %v1700
        %v1702 = vpop.f32.mrb[0].mxu0
        %v1703 = vadd.f32 %v538, %v1702
        %1704 = vmatprep.mubr.bf16.mxu0 %v929
        %1705 = vmatmul.mubr.bf16.gmra.mrb[0].mxu0 %v928
        %v1706 = vpop.f32.mrb[0].mxu0
        %v1707 = vadd.f32 %v534, %v1706
        %v1708 = vpop.f32.mrb[0].mxu0
        %v1709 = vadd.f32 %v538, %v1708
        %v1710 = vpop.f32.mrb[0].mxu0
        %v1711 = vadd.f32 %v534, %v1710
        %v1712 = vpop.f32.mrb[0].mxu0
        %v1713 = vadd.f32 %v538, %v1712
        %1714 = vmatprep.mubr.bf16.mxu0 %v935
        %1715 = vmatmul.mubr.bf16.gmra.mrb[0].mxu0 %v934
        %v1716 = vpop.f32.mrb[0].mxu0
        %v1717 = vadd.f32 %v534, %v1716
        %v1718 = vpop.f32.mrb[0].mxu0
        %v1719 = vadd.f32 %v538, %v1718
        %v1720 = vpop.f32.mrb[0].mxu0
        %v1721 = vadd.f32 %v534, %v1720
        %v1722 = vpop.f32.mrb[0].mxu0
        %v1723 = vadd.f32 %v538, %v1722
        %1724 = vmatprep.mubr.bf16.mxu0 %v941
        %1725 = vmatmul.mubr.bf16.gmra.mrb[0].mxu0 %v940
        %v1726 = vpop.f32.mrb[0].mxu0
        %v1727 = vadd.f32 %v534, %v1726
        %v1728 = vpop.f32.mrb[0].mxu0
        %v1729 = vadd.f32 %v538, %v1728
        %v1730 = vpop.f32.mrb[0].mxu0
        %v1731 = vadd.f32 %v534, %v1730
        %v1732 = vpop.f32.mrb[0].mxu0
        %v1733 = vadd.f32 %v538, %v1732
        %1734 = vmatprep.mubr.bf16.mxu0 %v947
        %1735 = vmatmul.mubr.bf16.gmra.mrb[0].mxu0 %v946
        %v1736 = vpop.f32.mrb[0].mxu0
        %v1737 = vadd.f32 %v534, %v1736
        %v1738 = vpop.f32.mrb[0].mxu0
        %v1739 = vadd.f32 %v538, %v1738
        %v1740 = vpop.f32.mrb[0].mxu0
        %v1741 = vadd.f32 %v534, %v1740
        %v1742 = vpop.f32.mrb[0].mxu0
        %v1743 = vadd.f32 %v538, %v1742
        %1744 = vmatprep.mubr.bf16.mxu0 %v953
        %1745 = vmatmul.mubr.bf16.gmra.mrb[0].mxu0 %v952
        %v1746 = vpop.f32.mrb[0].mxu0
        %v1747 = vadd.f32 %v534, %v1746
        %v1748 = vpop.f32.mrb[0].mxu0
        %v1749 = vadd.f32 %v538, %v1748
        %v1750 = vpop.f32.mrb[0].mxu0
        %v1751 = vadd.f32 %v534, %v1750
        %v1752 = vpop.f32.mrb[0].mxu0
        %v1753 = vadd.f32 %v538, %v1752
        %1754 = vmatprep.mubr.bf16.mxu0 %v959
        %1755 = vmatmul.mubr.bf16.gmra.mrb[0].mxu0 %v958
        %v1756 = vpop.f32.mrb[0].mxu0
        %v1757 = vadd.f32 %v534, %v1756
        %v1758 = vpop.f32.mrb[0].mxu0
        %v1759 = vadd.f32 %v538, %v1758
        %v1760 = vpop.f32.mrb[0].mxu0
        %v1761 = vadd.f32 %v534, %v1760
        %v1762 = vpop.f32.mrb[0].mxu0
        %v1763 = vadd.f32 %v538, %v1762
        %1764 = vmatprep.mubr.bf16.mxu0 %v965
        %1765 = vmatmul.mubr.bf16.gmra.mrb[0].mxu0 %v964
        %v1766 = vpop.f32.mrb[0].mxu0
        %v1767 = vadd.f32 %v534, %v1766
        %v1768 = vpop.f32.mrb[0].mxu0
        %v1769 = vadd.f32 %v538, %v1768
        %v1770 = vpop.f32.mrb[0].mxu0
        %v1771 = vadd.f32 %v534, %v1770
        %v1772 = vpop.f32.mrb[0].mxu0
        %v1773 = vadd.f32 %v538, %v1772
        %1774 = vmatprep.mubr.bf16.mxu0 %v971
        %1775 = vmatmul.mubr.bf16.gmra.mrb[0].mxu0 %v970
        %v1776 = vpop.f32.mrb[0].mxu0
        %v1777 = vadd.f32 %v534, %v1776
        %v1778 = vpop.f32.mrb[0].mxu0
        %v1779 = vadd.f32 %v538, %v1778
        %v1780 = vpop.f32.mrb[0].mxu0
        %v1781 = vadd.f32 %v534, %v1780
        %v1782 = vpop.f32.mrb[0].mxu0
        %v1783 = vadd.f32 %v538, %v1782
        %1784 = vmatprep.mubr.bf16.mxu0 %v977
        %1785 = vmatmul.mubr.bf16.gmra.mrb[0].mxu0 %v976
        %v1786 = vpop.f32.mrb[0].mxu0
        %v1787 = vadd.f32 %v534, %v1786
        %v1788 = vpop.f32.mrb[0].mxu0
        %v1789 = vadd.f32 %v538, %v1788
        %v1790 = vpop.f32.mrb[0].mxu0
        %v1791 = vadd.f32 %v534, %v1790
        %v1792 = vpop.f32.mrb[0].mxu0
        %v1793 = vadd.f32 %v538, %v1792
        %1794 = vmatprep.mubr.bf16.mxu0 %v983
        %1795 = vmatmul.mubr.bf16.gmra.mrb[0].mxu0 %v982
        %v1796 = vpop.f32.mrb[0].mxu0
        %v1797 = vadd.f32 %v534, %v1796
        %v1798 = vpop.f32.mrb[0].mxu0
        %v1799 = vadd.f32 %v538, %v1798
        %v1800 = vpop.f32.mrb[0].mxu0
        %v1801 = vpop.f32.mrb[0].mxu0
        %1802 = vdwg.mxu0
        %1803 = vmatprep.subr.bf16.mxu0 %v1423
        %1804 = vmatpush1.bf16.msra.mxu0 %v1422
        %1805 = vmatprep.subr.bf16.mxu0 %v1425
        %1806 = vmatpush1.bf16.msra.mxu0 %v1424
        %1807 = vmatprep.subr.bf16.mxu0 %v1427
        %1808 = vmatpush1.bf16.msra.mxu0 %v1426
        %1809 = vmatprep.subr.bf16.mxu0 %v1429
        %1810 = vmatpush1.bf16.msra.mxu0 %v1428
        %1811 = vmatprep.subr.bf16.mxu0 %v1431
        %1812 = vmatpush1.bf16.msra.mxu0 %v1430
        %1813 = vmatprep.subr.bf16.mxu0 %v1433
        %1814 = vmatpush1.bf16.msra.mxu0 %v1432
        %1815 = vmatprep.subr.bf16.mxu0 %v1435
        %1816 = vmatpush1.bf16.msra.mxu0 %v1434
        %1817 = vmatprep.subr.bf16.mxu0 %v1437
        %1818 = vmatpush1.bf16.msra.mxu0 %v1436
        %1819 = vmatprep.subr.bf16.mxu0 %v1439
        %1820 = vmatpush1.bf16.msra.mxu0 %v1438
        %1821 = vmatprep.subr.bf16.mxu0 %v1441
        %1822 = vmatpush1.bf16.msra.mxu0 %v1440
        %1823 = vmatprep.subr.bf16.mxu0 %v1443
        %1824 = vmatpush1.bf16.msra.mxu0 %v1442
        %1825 = vmatprep.subr.bf16.mxu0 %v1445
        %1826 = vmatpush1.bf16.msra.mxu0 %v1444
        %1827 = vmatprep.subr.bf16.mxu0 %v1447
        %1828 = vmatpush1.bf16.msra.mxu0 %v1446
        %1829 = vmatprep.subr.bf16.mxu0 %v1449
        %1830 = vmatpush1.bf16.msra.mxu0 %v1448
        %1831 = vmatprep.subr.bf16.mxu0 %v1451
        %1832 = vmatpush1.bf16.msra.mxu0 %v1450
        %1833 = vmatprep.subr.bf16.mxu0 %v1453
        %1834 = vmatpush1.bf16.msra.mxu0 %v1452
        %1835 = vmatprep.mubr.bf16.mxu0 %v877
        %1836 = vmatmul.mubr.bf16.gmra.mrb[0].mxu0 %v876
        %v1837 = vpop.f32.mrb[0].mxu0
        %v1838 = vadd.f32 %v1617, %v1837
        %v1839 = vpop.f32.mrb[0].mxu0
        %v1840 = vadd.f32 %v1619, %v1839
        %v1841 = vpop.f32.mrb[0].mxu0
        %v1842 = vadd.f32 %v1621, %v1841
        %v1843 = vpop.f32.mrb[0].mxu0
        %v1844 = vadd.f32 %v1623, %v1843
        %1845 = vmatprep.mubr.bf16.mxu0 %v883
        %1846 = vmatmul.mubr.bf16.gmra.mrb[0].mxu0 %v882
        %v1847 = vpop.f32.mrb[0].mxu0
        %v1848 = vadd.f32 %v1627, %v1847
        %v1849 = vpop.f32.mrb[0].mxu0
        %v1850 = vadd.f32 %v1629, %v1849
        %v1851 = vpop.f32.mrb[0].mxu0
        %v1852 = vadd.f32 %v1631, %v1851
        %v1853 = vpop.f32.mrb[0].mxu0
        %v1854 = vadd.f32 %v1633, %v1853
        %1855 = vmatprep.mubr.bf16.mxu0 %v889
        %1856 = vmatmul.mubr.bf16.gmra.mrb[0].mxu0 %v888
        %v1857 = vpop.f32.mrb[0].mxu0
        %v1858 = vadd.f32 %v1637, %v1857
        %v1859 = vpop.f32.mrb[0].mxu0
        %v1860 = vadd.f32 %v1639, %v1859
        %v1861 = vpop.f32.mrb[0].mxu0
        %v1862 = vadd.f32 %v1641, %v1861
        %v1863 = vpop.f32.mrb[0].mxu0
        %v1864 = vadd.f32 %v1643, %v1863
        %1865 = vmatprep.mubr.bf16.mxu0 %v895
        %1866 = vmatmul.mubr.bf16.gmra.mrb[0].mxu0 %v894
        %v1867 = vpop.f32.mrb[0].mxu0
        %v1868 = vadd.f32 %v1647, %v1867
        %v1869 = vpop.f32.mrb[0].mxu0
        %v1870 = vadd.f32 %v1649, %v1869
        %v1871 = vpop.f32.mrb[0].mxu0
        %v1872 = vadd.f32 %v1651, %v1871
        %v1873 = vpop.f32.mrb[0].mxu0
        %v1874 = vadd.f32 %v1653, %v1873
        %1875 = vmatprep.mubr.bf16.mxu0 %v901
        %1876 = vmatmul.mubr.bf16.gmra.mrb[0].mxu0 %v900
        %v1877 = vpop.f32.mrb[0].mxu0
        %v1878 = vadd.f32 %v1657, %v1877
        %v1879 = vpop.f32.mrb[0].mxu0
        %v1880 = vadd.f32 %v1659, %v1879
        %v1881 = vpop.f32.mrb[0].mxu0
        %v1882 = vadd.f32 %v1661, %v1881
        %v1883 = vpop.f32.mrb[0].mxu0
        %v1884 = vadd.f32 %v1663, %v1883
        %1885 = vmatprep.mubr.bf16.mxu0 %v907
        %1886 = vmatmul.mubr.bf16.gmra.mrb[0].mxu0 %v906
        %v1887 = vpop.f32.mrb[0].mxu0
        %v1888 = vadd.f32 %v1667, %v1887
        %v1889 = vpop.f32.mrb[0].mxu0
        %v1890 = vadd.f32 %v1669, %v1889
        %v1891 = vpop.f32.mrb[0].mxu0
        %v1892 = vadd.f32 %v1671, %v1891
        %v1893 = vpop.f32.mrb[0].mxu0
        %v1894 = vadd.f32 %v1673, %v1893
        %1895 = vmatprep.mubr.bf16.mxu0 %v913
        %1896 = vmatmul.mubr.bf16.gmra.mrb[0].mxu0 %v912
        %v1897 = vpop.f32.mrb[0].mxu0
        %v1898 = vadd.f32 %v1677, %v1897
        %v1899 = vpop.f32.mrb[0].mxu0
        %v1900 = vadd.f32 %v1679, %v1899
        %v1901 = vpop.f32.mrb[0].mxu0
        %v1902 = vadd.f32 %v1681, %v1901
        %v1903 = vpop.f32.mrb[0].mxu0
        %v1904 = vadd.f32 %v1683, %v1903
        %1905 = vmatprep.mubr.bf16.mxu0 %v919
        %1906 = vmatmul.mubr.bf16.gmra.mrb[0].mxu0 %v918
        %v1907 = vpop.f32.mrb[0].mxu0
        %v1908 = vadd.f32 %v1687, %v1907
        %v1909 = vpop.f32.mrb[0].mxu0
        %v1910 = vadd.f32 %v1689, %v1909
        %v1911 = vpop.f32.mrb[0].mxu0
        %v1912 = vadd.f32 %v1691, %v1911
        %v1913 = vpop.f32.mrb[0].mxu0
        %v1914 = vadd.f32 %v1693, %v1913
        %1915 = vmatprep.mubr.bf16.mxu0 %v925
        %1916 = vmatmul.mubr.bf16.gmra.mrb[0].mxu0 %v924
        %v1917 = vpop.f32.mrb[0].mxu0
        %v1918 = vadd.f32 %v1697, %v1917
        %v1919 = vpop.f32.mrb[0].mxu0
        %v1920 = vadd.f32 %v1699, %v1919
        %v1921 = vpop.f32.mrb[0].mxu0
        %v1922 = vadd.f32 %v1701, %v1921
        %v1923 = vpop.f32.mrb[0].mxu0
        %v1924 = vadd.f32 %v1703, %v1923
        %1925 = vmatprep.mubr.bf16.mxu0 %v931
        %1926 = vmatmul.mubr.bf16.gmra.mrb[0].mxu0 %v930
        %v1927 = vpop.f32.mrb[0].mxu0
        %v1928 = vadd.f32 %v1707, %v1927
        %v1929 = vpop.f32.mrb[0].mxu0
        %v1930 = vadd.f32 %v1709, %v1929
        %v1931 = vpop.f32.mrb[0].mxu0
        %v1932 = vadd.f32 %v1711, %v1931
        %v1933 = vpop.f32.mrb[0].mxu0
        %v1934 = vadd.f32 %v1713, %v1933
        %1935 = vmatprep.mubr.bf16.mxu0 %v937
        %1936 = vmatmul.mubr.bf16.gmra.mrb[0].mxu0 %v936
        %v1937 = vpop.f32.mrb[0].mxu0
        %v1938 = vadd.f32 %v1717, %v1937
        %v1939 = vpop.f32.mrb[0].mxu0
        %v1940 = vadd.f32 %v1719, %v1939
        %v1941 = vpop.f32.mrb[0].mxu0
        %v1942 = vadd.f32 %v1721, %v1941
        %v1943 = vpop.f32.mrb[0].mxu0
        %v1944 = vadd.f32 %v1723, %v1943
        %1945 = vmatprep.mubr.bf16.mxu0 %v943
        %1946 = vmatmul.mubr.bf16.gmra.mrb[0].mxu0 %v942
        %v1947 = vpop.f32.mrb[0].mxu0
        %v1948 = vadd.f32 %v1727, %v1947
        %v1949 = vpop.f32.mrb[0].mxu0
        %v1950 = vadd.f32 %v1729, %v1949
        %v1951 = vpop.f32.mrb[0].mxu0
        %v1952 = vadd.f32 %v1731, %v1951
        %v1953 = vpop.f32.mrb[0].mxu0
        %v1954 = vadd.f32 %v1733, %v1953
        %1955 = vmatprep.mubr.bf16.mxu0 %v949
        %1956 = vmatmul.mubr.bf16.gmra.mrb[0].mxu0 %v948
        %v1957 = vpop.f32.mrb[0].mxu0
        %v1958 = vadd.f32 %v1737, %v1957
        %v1959 = vpop.f32.mrb[0].mxu0
        %v1960 = vadd.f32 %v1739, %v1959
        %v1961 = vpop.f32.mrb[0].mxu0
        %v1962 = vadd.f32 %v1741, %v1961
        %v1963 = vpop.f32.mrb[0].mxu0
        %v1964 = vadd.f32 %v1743, %v1963
        %1965 = vmatprep.mubr.bf16.mxu0 %v955
        %1966 = vmatmul.mubr.bf16.gmra.mrb[0].mxu0 %v954
        %v1967 = vpop.f32.mrb[0].mxu0
        %v1968 = vadd.f32 %v1747, %v1967
        %v1969 = vpop.f32.mrb[0].mxu0
        %v1970 = vadd.f32 %v1749, %v1969
        %v1971 = vpop.f32.mrb[0].mxu0
        %v1972 = vadd.f32 %v1751, %v1971
        %v1973 = vpop.f32.mrb[0].mxu0
        %v1974 = vadd.f32 %v1753, %v1973
        %1975 = vmatprep.mubr.bf16.mxu0 %v961
        %1976 = vmatmul.mubr.bf16.gmra.mrb[0].mxu0 %v960
        %v1977 = vpop.f32.mrb[0].mxu0
        %v1978 = vadd.f32 %v1757, %v1977
        %v1979 = vpop.f32.mrb[0].mxu0
        %v1980 = vadd.f32 %v1759, %v1979
        %v1981 = vpop.f32.mrb[0].mxu0
        %v1982 = vadd.f32 %v1761, %v1981
        %v1983 = vpop.f32.mrb[0].mxu0
        %v1984 = vadd.f32 %v1763, %v1983
        %1985 = vmatprep.mubr.bf16.mxu0 %v967
        %1986 = vmatmul.mubr.bf16.gmra.mrb[0].mxu0 %v966
        %v1987 = vpop.f32.mrb[0].mxu0
        %v1988 = vadd.f32 %v1767, %v1987
        %v1989 = vpop.f32.mrb[0].mxu0
        %v1990 = vadd.f32 %v1769, %v1989
        %v1991 = vpop.f32.mrb[0].mxu0
        %v1992 = vadd.f32 %v1771, %v1991
        %v1993 = vpop.f32.mrb[0].mxu0
        %v1994 = vadd.f32 %v1773, %v1993
        %1995 = vmatprep.mubr.bf16.mxu0 %v973
        %1996 = vmatmul.mubr.bf16.gmra.mrb[0].mxu0 %v972
        %v1997 = vpop.f32.mrb[0].mxu0
        %v1998 = vadd.f32 %v1777, %v1997
        %v1999 = vpop.f32.mrb[0].mxu0
        %v2000 = vadd.f32 %v1779, %v1999
        %v2001 = vpop.f32.mrb[0].mxu0
        %v2002 = vadd.f32 %v1781, %v2001
        %v2003 = vpop.f32.mrb[0].mxu0
        %v2004 = vadd.f32 %v1783, %v2003
        %2005 = vmatprep.mubr.bf16.mxu0 %v979
        %2006 = vmatmul.mubr.bf16.gmra.mrb[0].mxu0 %v978
        %v2007 = vpop.f32.mrb[0].mxu0
        %v2008 = vadd.f32 %v1787, %v2007
        %v2009 = vpop.f32.mrb[0].mxu0
        %v2010 = vadd.f32 %v1789, %v2009
        %v2011 = vpop.f32.mrb[0].mxu0
        %v2012 = vadd.f32 %v1791, %v2011
        %v2013 = vpop.f32.mrb[0].mxu0
        %v2014 = vadd.f32 %v1793, %v2013
        %2015 = vmatprep.mubr.bf16.mxu0 %v985
        %2016 = vmatmul.mubr.bf16.gmra.mrb[0].mxu0 %v984
        %v2017 = vpop.f32.mrb[0].mxu0
        %v2018 = vadd.f32 %v1797, %v2017
        %v2019 = vpop.f32.mrb[0].mxu0
        %v2020 = vadd.f32 %v1799, %v2019
        %v2021 = vpop.f32.mrb[0].mxu0
        %v2022 = vpop.f32.mrb[0].mxu0
        %2023 = vdwg.mxu0
        %2024 = vmatprep.subr.bf16.mxu0 %v1455
        %2025 = vmatpush1.bf16.msra.mxu0 %v1454
        %2026 = vmatprep.subr.bf16.mxu0 %v1457
        %2027 = vmatpush1.bf16.msra.mxu0 %v1456
        %2028 = vmatprep.subr.bf16.mxu0 %v1459
        %2029 = vmatpush1.bf16.msra.mxu0 %v1458
        %2030 = vmatprep.subr.bf16.mxu0 %v1461
        %2031 = vmatpush1.bf16.msra.mxu0 %v1460
        %2032 = vmatprep.subr.bf16.mxu0 %v1463
        %2033 = vmatpush1.bf16.msra.mxu0 %v1462
        %2034 = vmatprep.subr.bf16.mxu0 %v1465
        %2035 = vmatpush1.bf16.msra.mxu0 %v1464
        %2036 = vmatprep.subr.bf16.mxu0 %v1467
        %2037 = vmatpush1.bf16.msra.mxu0 %v1466
        %2038 = vmatprep.subr.bf16.mxu0 %v1469
        %2039 = vmatpush1.bf16.msra.mxu0 %v1468
        %2040 = vmatprep.subr.bf16.mxu0 %v1471
        %2041 = vmatpush1.bf16.msra.mxu0 %v1470
        %2042 = vmatprep.subr.bf16.mxu0 %v1473
        %2043 = vmatpush1.bf16.msra.mxu0 %v1472
        %2044 = vmatprep.subr.bf16.mxu0 %v1475
        %2045 = vmatpush1.bf16.msra.mxu0 %v1474
        %2046 = vmatprep.subr.bf16.mxu0 %v1477
        %2047 = vmatpush1.bf16.msra.mxu0 %v1476
        %2048 = vmatprep.subr.bf16.mxu0 %v1479
        %2049 = vmatpush1.bf16.msra.mxu0 %v1478
        %2050 = vmatprep.subr.bf16.mxu0 %v1481
        %2051 = vmatpush1.bf16.msra.mxu0 %v1480
        %2052 = vmatprep.subr.bf16.mxu0 %v1483
        %2053 = vmatpush1.bf16.msra.mxu0 %v1482
        %2054 = vmatprep.subr.bf16.mxu0 %v1485
        %2055 = vmatpush1.bf16.msra.mxu0 %v1484
        %2056 = vmatprep.mubr.bf16.mxu0 %v879
        %2057 = vmatmul.mubr.bf16.gmra.mrb[0].mxu0 %v878
        %v2058 = vpop.f32.mrb[0].mxu0
        %v2059 = vadd.f32 %v1838, %v2058
        %v2060 = vpop.f32.mrb[0].mxu0
        %v2061 = vadd.f32 %v1840, %v2060
        %v2062 = vpop.f32.mrb[0].mxu0
        %v2063 = vadd.f32 %v1842, %v2062
        %v2064 = vpop.f32.mrb[0].mxu0
        %v2065 = vadd.f32 %v1844, %v2064
        %2066 = vmatprep.mubr.bf16.mxu0 %v885
        %2067 = vmatmul.mubr.bf16.gmra.mrb[0].mxu0 %v884
        %v2068 = vpop.f32.mrb[0].mxu0
        %v2069 = vadd.f32 %v1848, %v2068
        %v2070 = vpop.f32.mrb[0].mxu0
        %v2071 = vadd.f32 %v1850, %v2070
        %v2072 = vpop.f32.mrb[0].mxu0
        %v2073 = vadd.f32 %v1852, %v2072
        %v2074 = vpop.f32.mrb[0].mxu0
        %v2075 = vadd.f32 %v1854, %v2074
        %2076 = vmatprep.mubr.bf16.mxu0 %v891
        %2077 = vmatmul.mubr.bf16.gmra.mrb[0].mxu0 %v890
        %v2078 = vpop.f32.mrb[0].mxu0
        %v2079 = vadd.f32 %v1858, %v2078
        %v2080 = vpop.f32.mrb[0].mxu0
        %v2081 = vadd.f32 %v1860, %v2080
        %v2082 = vpop.f32.mrb[0].mxu0
        %v2083 = vadd.f32 %v1862, %v2082
        %v2084 = vpop.f32.mrb[0].mxu0
        %v2085 = vadd.f32 %v1864, %v2084
        %2086 = vmatprep.mubr.bf16.mxu0 %v897
        %2087 = vmatmul.mubr.bf16.gmra.mrb[0].mxu0 %v896
        %v2088 = vpop.f32.mrb[0].mxu0
        %v2089 = vadd.f32 %v1868, %v2088
        %v2090 = vpop.f32.mrb[0].mxu0
        %v2091 = vadd.f32 %v1870, %v2090
        %v2092 = vpop.f32.mrb[0].mxu0
        %v2093 = vadd.f32 %v1872, %v2092
        %v2094 = vpop.f32.mrb[0].mxu0
        %v2095 = vadd.f32 %v1874, %v2094
        %2096 = vmatprep.mubr.bf16.mxu0 %v903
        %2097 = vmatmul.mubr.bf16.gmra.mrb[0].mxu0 %v902
        %v2098 = vpop.f32.mrb[0].mxu0
        %v2099 = vadd.f32 %v1878, %v2098
        %v2100 = vpop.f32.mrb[0].mxu0
        %v2101 = vadd.f32 %v1880, %v2100
        %v2102 = vpop.f32.mrb[0].mxu0
        %v2103 = vadd.f32 %v1882, %v2102
        %v2104 = vpop.f32.mrb[0].mxu0
        %v2105 = vadd.f32 %v1884, %v2104
        %2106 = vmatprep.mubr.bf16.mxu0 %v909
        %2107 = vmatmul.mubr.bf16.gmra.mrb[0].mxu0 %v908
        %v2108 = vpop.f32.mrb[0].mxu0
        %v2109 = vadd.f32 %v1888, %v2108
        %v2110 = vpop.f32.mrb[0].mxu0
        %v2111 = vadd.f32 %v1890, %v2110
        %v2112 = vpop.f32.mrb[0].mxu0
        %v2113 = vadd.f32 %v1892, %v2112
        %v2114 = vpop.f32.mrb[0].mxu0
        %v2115 = vadd.f32 %v1894, %v2114
        %2116 = vmatprep.mubr.bf16.mxu0 %v915
        %2117 = vmatmul.mubr.bf16.gmra.mrb[0].mxu0 %v914
        %v2118 = vpop.f32.mrb[0].mxu0
        %v2119 = vadd.f32 %v1898, %v2118
        %v2120 = vpop.f32.mrb[0].mxu0
        %v2121 = vadd.f32 %v1900, %v2120
        %v2122 = vpop.f32.mrb[0].mxu0
        %v2123 = vadd.f32 %v1902, %v2122
        %v2124 = vpop.f32.mrb[0].mxu0
        %v2125 = vadd.f32 %v1904, %v2124
        %2126 = vmatprep.mubr.bf16.mxu0 %v921
        %2127 = vmatmul.mubr.bf16.gmra.mrb[0].mxu0 %v920
        %v2128 = vpop.f32.mrb[0].mxu0
        %v2129 = vadd.f32 %v1908, %v2128
        %v2130 = vpop.f32.mrb[0].mxu0
        %v2131 = vadd.f32 %v1910, %v2130
        %v2132 = vpop.f32.mrb[0].mxu0
        %v2133 = vadd.f32 %v1912, %v2132
        %v2134 = vpop.f32.mrb[0].mxu0
        %v2135 = vadd.f32 %v1914, %v2134
        %2136 = vmatprep.mubr.bf16.mxu0 %v927
        %2137 = vmatmul.mubr.bf16.gmra.mrb[0].mxu0 %v926
        %v2138 = vpop.f32.mrb[0].mxu0
        %v2139 = vadd.f32 %v1918, %v2138
        %v2140 = vpop.f32.mrb[0].mxu0
        %v2141 = vadd.f32 %v1920, %v2140
        %v2142 = vpop.f32.mrb[0].mxu0
        %v2143 = vadd.f32 %v1922, %v2142
        %v2144 = vpop.f32.mrb[0].mxu0
        %v2145 = vadd.f32 %v1924, %v2144
        %2146 = vmatprep.mubr.bf16.mxu0 %v933
        %2147 = vmatmul.mubr.bf16.gmra.mrb[0].mxu0 %v932
        %v2148 = vpop.f32.mrb[0].mxu0
        %v2149 = vadd.f32 %v1928, %v2148
        %v2150 = vpop.f32.mrb[0].mxu0
        %v2151 = vadd.f32 %v1930, %v2150
        %v2152 = vpop.f32.mrb[0].mxu0
        %v2153 = vadd.f32 %v1932, %v2152
        %v2154 = vpop.f32.mrb[0].mxu0
        %v2155 = vadd.f32 %v1934, %v2154
        %2156 = vmatprep.mubr.bf16.mxu0 %v939
        %2157 = vmatmul.mubr.bf16.gmra.mrb[0].mxu0 %v938
        %v2158 = vpop.f32.mrb[0].mxu0
        %v2159 = vadd.f32 %v1938, %v2158
        %v2160 = vpop.f32.mrb[0].mxu0
        %v2161 = vadd.f32 %v1940, %v2160
        %v2162 = vpop.f32.mrb[0].mxu0
        %v2163 = vadd.f32 %v1942, %v2162
        %v2164 = vpop.f32.mrb[0].mxu0
        %v2165 = vadd.f32 %v1944, %v2164
        %2166 = vmatprep.mubr.bf16.mxu0 %v945
        %2167 = vmatmul.mubr.bf16.gmra.mrb[0].mxu0 %v944
        %v2168 = vpop.f32.mrb[0].mxu0
        %v2169 = vadd.f32 %v1948, %v2168
        %v2170 = vpop.f32.mrb[0].mxu0
        %v2171 = vadd.f32 %v1950, %v2170
        %v2172 = vpop.f32.mrb[0].mxu0
        %v2173 = vadd.f32 %v1952, %v2172
        %v2174 = vpop.f32.mrb[0].mxu0
        %v2175 = vadd.f32 %v1954, %v2174
        %2176 = vmatprep.mubr.bf16.mxu0 %v951
        %2177 = vmatmul.mubr.bf16.gmra.mrb[0].mxu0 %v950
        %v2178 = vpop.f32.mrb[0].mxu0
        %v2179 = vadd.f32 %v1958, %v2178
        %v2180 = vpop.f32.mrb[0].mxu0
        %v2181 = vadd.f32 %v1960, %v2180
        %v2182 = vpop.f32.mrb[0].mxu0
        %v2183 = vadd.f32 %v1962, %v2182
        %v2184 = vpop.f32.mrb[0].mxu0
        %v2185 = vadd.f32 %v1964, %v2184
        %2186 = vmatprep.mubr.bf16.mxu0 %v957
        %2187 = vmatmul.mubr.bf16.gmra.mrb[0].mxu0 %v956
        %v2188 = vpop.f32.mrb[0].mxu0
        %v2189 = vadd.f32 %v1968, %v2188
        %v2190 = vpop.f32.mrb[0].mxu0
        %v2191 = vadd.f32 %v1970, %v2190
        %v2192 = vpop.f32.mrb[0].mxu0
        %v2193 = vadd.f32 %v1972, %v2192
        %v2194 = vpop.f32.mrb[0].mxu0
        %v2195 = vadd.f32 %v1974, %v2194
        %2196 = vmatprep.mubr.bf16.mxu0 %v963
        %2197 = vmatmul.mubr.bf16.gmra.mrb[0].mxu0 %v962
        %v2198 = vpop.f32.mrb[0].mxu0
        %v2199 = vadd.f32 %v1978, %v2198
        %v2200 = vpop.f32.mrb[0].mxu0
        %v2201 = vadd.f32 %v1980, %v2200
        %v2202 = vpop.f32.mrb[0].mxu0
        %v2203 = vadd.f32 %v1982, %v2202
        %v2204 = vpop.f32.mrb[0].mxu0
        %v2205 = vadd.f32 %v1984, %v2204
        %2206 = vmatprep.mubr.bf16.mxu0 %v969
        %2207 = vmatmul.mubr.bf16.gmra.mrb[0].mxu0 %v968
        %v2208 = vpop.f32.mrb[0].mxu0
        %v2209 = vadd.f32 %v1988, %v2208
        %v2210 = vpop.f32.mrb[0].mxu0
        %v2211 = vadd.f32 %v1990, %v2210
        %v2212 = vpop.f32.mrb[0].mxu0
        %v2213 = vadd.f32 %v1992, %v2212
        %v2214 = vpop.f32.mrb[0].mxu0
        %v2215 = vadd.f32 %v1994, %v2214
        %2216 = vmatprep.mubr.bf16.mxu0 %v975
        %2217 = vmatmul.mubr.bf16.gmra.mrb[0].mxu0 %v974
        %v2218 = vpop.f32.mrb[0].mxu0
        %v2219 = vadd.f32 %v1998, %v2218
        %v2220 = vpop.f32.mrb[0].mxu0
        %v2221 = vadd.f32 %v2000, %v2220
        %v2222 = vpop.f32.mrb[0].mxu0
        %v2223 = vadd.f32 %v2002, %v2222
        %v2224 = vpop.f32.mrb[0].mxu0
        %v2225 = vadd.f32 %v2004, %v2224
        %2226 = vmatprep.mubr.bf16.mxu0 %v981
        %2227 = vmatmul.mubr.bf16.gmra.mrb[0].mxu0 %v980
        %v2228 = vpop.f32.mrb[0].mxu0
        %v2229 = vadd.f32 %v2008, %v2228
        %v2230 = vpop.f32.mrb[0].mxu0
        %v2231 = vadd.f32 %v2010, %v2230
        %v2232 = vpop.f32.mrb[0].mxu0
        %v2233 = vadd.f32 %v2012, %v2232
        %v2234 = vpop.f32.mrb[0].mxu0
        %v2235 = vadd.f32 %v2014, %v2234
        %2236 = vmatprep.mubr.bf16.mxu0 %v987
        %2237 = vmatmul.mubr.bf16.gmra.mrb[0].mxu0 %v986
        %v2238 = vpop.f32.mrb[0].mxu0
        %v2239 = vadd.f32 %v2018, %v2238
        %v2240 = vpop.f32.mrb[0].mxu0
        %v2241 = vadd.f32 %v2020, %v2240
        %v2242 = vpop.f32.mrb[0].mxu0
        %v2243 = vpop.f32.mrb[0].mxu0
        %2244 = vdwg.mxu0
        %2245 = vst [vmem:[%s286] sm:$0xff] %v2059
        %2246 = vst [vmem:[%s286 + $0x8] sm:$0xff] %v2061
        %2247 = vst [vmem:[%s286 + $0x10] sm:$0xff] %v2063
        %2248 = vst [vmem:[%s286 + $0x18] sm:$0xff] %v2065
        %2249 = vst [vmem:[%s286 + $0x20] sm:$0xff] %v2069
        %2250 = vst [vmem:[%s286 + $0x28] sm:$0xff] %v2071
        %2251 = vst [vmem:[%s286 + $0x30] sm:$0xff] %v2073
        %2252 = vst [vmem:[%s286 + $0x38] sm:$0xff] %v2075
        %2253 = vst [vmem:[%s286 + $0x40] sm:$0xff] %v2079
        %2254 = vst [vmem:[%s286 + $0x48] sm:$0xff] %v2081
        %2255 = vst [vmem:[%s286 + $0x50] sm:$0xff] %v2083
        %2256 = vst [vmem:[%s286 + $0x58] sm:$0xff] %v2085
        %2257 = vst [vmem:[%s286 + $0x60] sm:$0xff] %v2089
        %2258 = vst [vmem:[%s286 + $0x68] sm:$0xff] %v2091
        %2259 = vst [vmem:[%s286 + $0x70] sm:$0xff] %v2093
        %2260 = vst [vmem:[%s286 + $0x78] sm:$0xff] %v2095
        %2261 = vst [vmem:[%s286 + $0x80] sm:$0xff] %v2099
        %2262 = vst [vmem:[%s286 + $0x88] sm:$0xff] %v2101
        %2263 = vst [vmem:[%s286 + $0x90] sm:$0xff] %v2103
        %2264 = vst [vmem:[%s286 + $0x98] sm:$0xff] %v2105
        %2265 = vst [vmem:[%s286 + $0xa0] sm:$0xff] %v2109
        %2266 = vst [vmem:[%s286 + $0xa8] sm:$0xff] %v2111
        %2267 = vst [vmem:[%s286 + $0xb0] sm:$0xff] %v2113
        %2268 = vst [vmem:[%s286 + $0xb8] sm:$0xff] %v2115
        %2269 = vst [vmem:[%s286 + $0xc0] sm:$0xff] %v2119
        %2270 = vst [vmem:[%s286 + $0xc8] sm:$0xff] %v2121
        %2271 = vst [vmem:[%s286 + $0xd0] sm:$0xff] %v2123
        %2272 = vst [vmem:[%s286 + $0xd8] sm:$0xff] %v2125
        %2273 = vst [vmem:[%s286 + $0xe0] sm:$0xff] %v2129
        %2274 = vst [vmem:[%s286 + $0xe8] sm:$0xff] %v2131
        %2275 = vst [vmem:[%s286 + $0xf0] sm:$0xff] %v2133
        %2276 = vst [vmem:[%s286 + $0xf8] sm:$0xff] %v2135
        %2277 = vst [vmem:[%s286 + $0x100] sm:$0xff] %v2139
        %2278 = vst [vmem:[%s286 + $0x108] sm:$0xff] %v2141
        %2279 = vst [vmem:[%s286 + $0x110] sm:$0xff] %v2143
        %2280 = vst [vmem:[%s286 + $0x118] sm:$0xff] %v2145
        %2281 = vst [vmem:[%s286 + $0x120] sm:$0xff] %v2149
        %2282 = vst [vmem:[%s286 + $0x128] sm:$0xff] %v2151
        %2283 = vst [vmem:[%s286 + $0x130] sm:$0xff] %v2153
        %2284 = vst [vmem:[%s286 + $0x138] sm:$0xff] %v2155
        %2285 = vst [vmem:[%s286 + $0x140] sm:$0xff] %v2159
        %2286 = vst [vmem:[%s286 + $0x148] sm:$0xff] %v2161
        %2287 = vst [vmem:[%s286 + $0x150] sm:$0xff] %v2163
        %2288 = vst [vmem:[%s286 + $0x158] sm:$0xff] %v2165
        %2289 = vst [vmem:[%s286 + $0x160] sm:$0xff] %v2169
        %2290 = vst [vmem:[%s286 + $0x168] sm:$0xff] %v2171
        %2291 = vst [vmem:[%s286 + $0x170] sm:$0xff] %v2173
        %2292 = vst [vmem:[%s286 + $0x178] sm:$0xff] %v2175
        %2293 = vst [vmem:[%s286 + $0x180] sm:$0xff] %v2179
        %2294 = vst [vmem:[%s286 + $0x188] sm:$0xff] %v2181
        %2295 = vst [vmem:[%s286 + $0x190] sm:$0xff] %v2183
        %2296 = vst [vmem:[%s286 + $0x198] sm:$0xff] %v2185
        %2297 = vst [vmem:[%s286 + $0x1a0] sm:$0xff] %v2189
        %2298 = vst [vmem:[%s286 + $0x1a8] sm:$0xff] %v2191
        %2299 = vst [vmem:[%s286 + $0x1b0] sm:$0xff] %v2193
        %2300 = vst [vmem:[%s286 + $0x1b8] sm:$0xff] %v2195
        %2301 = vst [vmem:[%s286 + $0x1c0] sm:$0xff] %v2199
        %2302 = vst [vmem:[%s286 + $0x1c8] sm:$0xff] %v2201
        %2303 = vst [vmem:[%s286 + $0x1d0] sm:$0xff] %v2203
        %2304 = vst [vmem:[%s286 + $0x1d8] sm:$0xff] %v2205
        %2305 = vst [vmem:[%s286 + $0x1e0] sm:$0xff] %v2209
        %2306 = vst [vmem:[%s286 + $0x1e8] sm:$0xff] %v2211
        %2307 = vst [vmem:[%s286 + $0x1f0] sm:$0xff] %v2213
        %2308 = vst [vmem:[%s286 + $0x1f8] sm:$0xff] %v2215
        %2309 = vst [vmem:[%s286 + $0x200] sm:$0xff] %v2219
        %2310 = vst [vmem:[%s286 + $0x208] sm:$0xff] %v2221
        %2311 = vst [vmem:[%s286 + $0x210] sm:$0xff] %v2223
        %2312 = vst [vmem:[%s286 + $0x218] sm:$0xff] %v2225
        %2313 = vst [vmem:[%s286 + $0x220] sm:$0xff] %v2229
        %2314 = vst [vmem:[%s286 + $0x228] sm:$0xff] %v2231
        %2315 = vst [vmem:[%s286 + $0x230] sm:$0xff] %v2233
        %2316 = vst [vmem:[%s286 + $0x238] sm:$0xff] %v2235
        %2317 = vst [vmem:[%s286 + $0x240] sm:$0xff] %v2239
        %2318 = vst [vmem:[%s286 + $0x248] sm:$0xff] %v2241
        %v2319 = vld [vmem:[%s3] sm:$0xff]
        %v2320 = vld [vmem:[%s3 + $0x8] sm:$0xff]
        %v2321 = vld [vmem:[%s4] sm:$0xff]
        %v2322 = vld [vmem:[%s4 + $0x8] sm:$0xff]
        %v2323 = vld [vmem:[%s4 + $0x10] sm:$0xff]
        %v2324 = vld [vmem:[%s4 + $0x18] sm:$0xff]
        %v2325 = vld [vmem:[%s4 + $0x20] sm:$0xff]
        %v2326 = vld [vmem:[%s4 + $0x28] sm:$0xff]
        %v2327 = vld [vmem:[%s4 + $0x30] sm:$0xff]
        %v2328 = vld [vmem:[%s4 + $0x38] sm:$0xff]
        %v2329 = vld [vmem:[%s4 + $0x40] sm:$0xff]
        %v2330 = vld [vmem:[%s4 + $0x48] sm:$0xff]
        %v2331 = vld [vmem:[%s4 + $0x50] sm:$0xff]
        %v2332 = vld [vmem:[%s4 + $0x58] sm:$0xff]
        %v2333 = vld [vmem:[%s4 + $0x60] sm:$0xff]
        %v2334 = vld [vmem:[%s4 + $0x68] sm:$0xff]
        %v2335 = vld [vmem:[%s4 + $0x70] sm:$0xff]
        %v2336 = vld [vmem:[%s4 + $0x78] sm:$0xff]
        %v2337 = vld [vmem:[%s4 + $0x80] sm:$0xff]
        %v2338 = vld [vmem:[%s4 + $0x88] sm:$0xff]
        %v2339 = vld [vmem:[%s4 + $0x90] sm:$0xff]
        %v2340 = vld [vmem:[%s4 + $0x98] sm:$0xff]
        %v2341 = vld [vmem:[%s4 + $0xa0] sm:$0xff]
        %v2342 = vld [vmem:[%s4 + $0xa8] sm:$0xff]
        %v2343 = vld [vmem:[%s4 + $0xb0] sm:$0xff]
        %v2344 = vld [vmem:[%s4 + $0xb8] sm:$0xff]
        %v2345 = vld [vmem:[%s4 + $0xc0] sm:$0xff]
        %v2346 = vld [vmem:[%s4 + $0xc8] sm:$0xff]
        %v2347 = vld [vmem:[%s4 + $0xd0] sm:$0xff]
        %v2348 = vld [vmem:[%s4 + $0xd8] sm:$0xff]
        %v2349 = vld [vmem:[%s4 + $0xe0] sm:$0xff]
        %v2350 = vld [vmem:[%s4 + $0xe8] sm:$0xff]
        %v2351 = vld [vmem:[%s4 + $0xf0] sm:$0xff]
        %v2352 = vld [vmem:[%s4 + $0xf8] sm:$0xff]
        %v2353 = vld [vmem:[%s4 + $0x100] sm:$0xff]
        %v2354 = vld [vmem:[%s4 + $0x108] sm:$0xff]
        %v2355 = vld [vmem:[%s4 + $0x110] sm:$0xff]
        %v2356 = vld [vmem:[%s4 + $0x118] sm:$0xff]
        %v2357 = vld [vmem:[%s4 + $0x120] sm:$0xff]
        %v2358 = vld [vmem:[%s4 + $0x128] sm:$0xff]
        %v2359 = vld [vmem:[%s4 + $0x130] sm:$0xff]
        %v2360 = vld [vmem:[%s4 + $0x138] sm:$0xff]
        %v2361 = vld [vmem:[%s4 + $0x140] sm:$0xff]
        %v2362 = vld [vmem:[%s4 + $0x148] sm:$0xff]
        %v2363 = vld [vmem:[%s4 + $0x150] sm:$0xff]
        %v2364 = vld [vmem:[%s4 + $0x158] sm:$0xff]
        %v2365 = vld [vmem:[%s4 + $0x160] sm:$0xff]
        %v2366 = vld [vmem:[%s4 + $0x168] sm:$0xff]
        %v2367 = vld [vmem:[%s4 + $0x170] sm:$0xff]
        %v2368 = vld [vmem:[%s4 + $0x178] sm:$0xff]
        %v2369 = vld [vmem:[%s4 + $0x180] sm:$0xff]
        %v2370 = vld [vmem:[%s4 + $0x188] sm:$0xff]
        %v2371 = vld [vmem:[%s4 + $0x190] sm:$0xff]
        %v2372 = vld [vmem:[%s4 + $0x198] sm:$0xff]
        %v2373 = vld [vmem:[%s4 + $0x1a0] sm:$0xff]
        %v2374 = vld [vmem:[%s4 + $0x1a8] sm:$0xff]
        %v2375 = vld [vmem:[%s4 + $0x1b0] sm:$0xff]
        %v2376 = vld [vmem:[%s4 + $0x1b8] sm:$0xff]
        %v2377 = vld [vmem:[%s4 + $0x1c0] sm:$0xff]
        %v2378 = vld [vmem:[%s4 + $0x1c8] sm:$0xff]
        %v2379 = vld [vmem:[%s4 + $0x1d0] sm:$0xff]
        %v2380 = vld [vmem:[%s4 + $0x1d8] sm:$0xff]
        %v2381 = vld [vmem:[%s4 + $0x1e0] sm:$0xff]
        %v2382 = vld [vmem:[%s4 + $0x1e8] sm:$0xff]
        %v2383 = vld [vmem:[%s4 + $0x1f0] sm:$0xff]
        %v2384 = vld [vmem:[%s4 + $0x1f8] sm:$0xff]
        %v2385 = vld [vmem:[%s4 + $0x200] sm:$0xff]
        %v2386 = vld [vmem:[%s4 + $0x208] sm:$0xff]
        %v2387 = vld [vmem:[%s4 + $0x210] sm:$0xff]
        %v2388 = vld [vmem:[%s4 + $0x218] sm:$0xff]
        %v2389 = vld [vmem:[%s4 + $0x220] sm:$0xff]
        %v2390 = vld [vmem:[%s4 + $0x228] sm:$0xff]
        %v2391 = vld [vmem:[%s4 + $0x230] sm:$0xff]
        %v2392 = vld [vmem:[%s4 + $0x238] sm:$0xff]
        %v2393 = vld [vmem:[%s4 + $0x240] sm:$0xff]
        %v2394 = vld [vmem:[%s4 + $0x248] sm:$0xff]
        %v2395 = vld [vmem:[%s4 + $0x250] sm:$0xff]
        %v2396 = vld [vmem:[%s4 + $0x258] sm:$0xff]
        %v2397 = vld [vmem:[%s4 + $0x260] sm:$0xff]
        %v2398 = vld [vmem:[%s4 + $0x268] sm:$0xff]
        %v2399 = vld [vmem:[%s4 + $0x270] sm:$0xff]
        %v2400 = vld [vmem:[%s4 + $0x278] sm:$0xff]
        %v2401 = vld [vmem:[%s4 + $0x280] sm:$0xff]
        %v2402 = vld [vmem:[%s4 + $0x288] sm:$0xff]
        %v2403 = vld [vmem:[%s4 + $0x290] sm:$0xff]
        %v2404 = vld [vmem:[%s4 + $0x298] sm:$0xff]
        %v2405 = vld [vmem:[%s4 + $0x2a0] sm:$0xff]
        %v2406 = vld [vmem:[%s4 + $0x2a8] sm:$0xff]
        %v2407 = vld [vmem:[%s4 + $0x2b0] sm:$0xff]
        %v2408 = vld [vmem:[%s4 + $0x2b8] sm:$0xff]
        %v2409 = vld [vmem:[%s4 + $0x2c0] sm:$0xff]
        %v2410 = vld [vmem:[%s4 + $0x2c8] sm:$0xff]
        %v2411 = vld [vmem:[%s4 + $0x2d0] sm:$0xff]
        %v2412 = vld [vmem:[%s4 + $0x2d8] sm:$0xff]
        %v2413 = vld [vmem:[%s4 + $0x2e0] sm:$0xff]
        %v2414 = vld [vmem:[%s4 + $0x2e8] sm:$0xff]
        %v2415 = vld [vmem:[%s4 + $0x2f0] sm:$0xff]
        %v2416 = vld [vmem:[%s4 + $0x2f8] sm:$0xff]
        %v2417 = vld [vmem:[%s4 + $0x300] sm:$0xff]
        %v2418 = vld [vmem:[%s4 + $0x308] sm:$0xff]
        %v2419 = vld [vmem:[%s4 + $0x310] sm:$0xff]
        %v2420 = vld [vmem:[%s4 + $0x318] sm:$0xff]
        %v2421 = vld [vmem:[%s4 + $0x320] sm:$0xff]
        %v2422 = vld [vmem:[%s4 + $0x328] sm:$0xff]
        %v2423 = vld [vmem:[%s4 + $0x330] sm:$0xff]
        %v2424 = vld [vmem:[%s4 + $0x338] sm:$0xff]
        %v2425 = vld [vmem:[%s4 + $0x340] sm:$0xff]
        %v2426 = vld [vmem:[%s4 + $0x348] sm:$0xff]
        %v2427 = vld [vmem:[%s4 + $0x350] sm:$0xff]
        %v2428 = vld [vmem:[%s4 + $0x358] sm:$0xff]
        %v2429 = vld [vmem:[%s4 + $0x360] sm:$0xff]
        %v2430 = vld [vmem:[%s4 + $0x368] sm:$0xff]
        %v2431 = vld [vmem:[%s4 + $0x370] sm:$0xff]
        %v2432 = vld [vmem:[%s4 + $0x378] sm:$0xff]
        %v2433 = vld [vmem:[%s4 + $0x380] sm:$0xff]
        %v2434 = vld [vmem:[%s4 + $0x388] sm:$0xff]
        %v2435 = vld [vmem:[%s4 + $0x390] sm:$0xff]
        %v2436 = vld [vmem:[%s4 + $0x398] sm:$0xff]
        %v2437 = vld [vmem:[%s4 + $0x3a0] sm:$0xff]
        %v2438 = vld [vmem:[%s4 + $0x3a8] sm:$0xff]
        %v2439 = vld [vmem:[%s4 + $0x3b0] sm:$0xff]
        %v2440 = vld [vmem:[%s4 + $0x3b8] sm:$0xff]
        %v2441 = vld [vmem:[%s4 + $0x3c0] sm:$0xff]
        %v2442 = vld [vmem:[%s4 + $0x3c8] sm:$0xff]
        %v2443 = vld [vmem:[%s4 + $0x3d0] sm:$0xff]
        %v2444 = vld [vmem:[%s4 + $0x3d8] sm:$0xff]
        %v2445 = vld [vmem:[%s4 + $0x3e0] sm:$0xff]
        %v2446 = vld [vmem:[%s4 + $0x3e8] sm:$0xff]
        %v2447 = vld [vmem:[%s4 + $0x3f0] sm:$0xff]
        %v2448 = vld [vmem:[%s4 + $0x3f8] sm:$0xff]
        %v2449 = vld [vmem:[%s4 + $0x400] sm:$0xff]
        %v2450 = vld [vmem:[%s4 + $0x408] sm:$0xff]
        %v2451 = vld [vmem:[%s4 + $0x410] sm:$0xff]
        %v2452 = vld [vmem:[%s4 + $0x418] sm:$0xff]
        %v2453 = vld [vmem:[%s4 + $0x420] sm:$0xff]
        %v2454 = vld [vmem:[%s4 + $0x428] sm:$0xff]
        %v2455 = vld [vmem:[%s4 + $0x430] sm:$0xff]
        %v2456 = vld [vmem:[%s4 + $0x438] sm:$0xff]
        %v2457 = vld [vmem:[%s4 + $0x440] sm:$0xff]
        %v2458 = vld [vmem:[%s4 + $0x448] sm:$0xff]
        %v2459 = vld [vmem:[%s4 + $0x450] sm:$0xff]
        %v2460 = vld [vmem:[%s4 + $0x458] sm:$0xff]
        %v2461 = vld [vmem:[%s4 + $0x460] sm:$0xff]
        %v2462 = vld [vmem:[%s4 + $0x468] sm:$0xff]
        %v2463 = vld [vmem:[%s4 + $0x470] sm:$0xff]
        %v2464 = vld [vmem:[%s4 + $0x478] sm:$0xff]
        %v2465 = vld [vmem:[%s4 + $0x480] sm:$0xff]
        %v2466 = vld [vmem:[%s4 + $0x488] sm:$0xff]
        %v2467 = vld [vmem:[%s4 + $0x490] sm:$0xff]
        %v2468 = vld [vmem:[%s4 + $0x498] sm:$0xff]
        %v2469 = vld [vmem:[%s4 + $0x4a0] sm:$0xff]
        %v2470 = vld [vmem:[%s4 + $0x4a8] sm:$0xff]
        %v2471 = vld [vmem:[%s4 + $0x4b0] sm:$0xff]
        %v2472 = vld [vmem:[%s4 + $0x4b8] sm:$0xff]
        %v2473 = vld [vmem:[%s4 + $0x4c0] sm:$0xff]
        %v2474 = vld [vmem:[%s4 + $0x4c8] sm:$0xff]
        %v2475 = vld [vmem:[%s4 + $0x4d0] sm:$0xff]
        %v2476 = vld [vmem:[%s4 + $0x4d8] sm:$0xff]
        %v2477 = vld [vmem:[%s4 + $0x4e0] sm:$0xff]
        %v2478 = vld [vmem:[%s4 + $0x4e8] sm:$0xff]
        %v2479 = vld [vmem:[%s4 + $0x4f0] sm:$0xff]
        %v2480 = vld [vmem:[%s4 + $0x4f8] sm:$0xff]
        %v2481 = vld [vmem:[%s4 + $0x500] sm:$0xff]
        %v2482 = vld [vmem:[%s4 + $0x508] sm:$0xff]
        %v2483 = vld [vmem:[%s4 + $0x510] sm:$0xff]
        %v2484 = vld [vmem:[%s4 + $0x518] sm:$0xff]
        %v2485 = vld [vmem:[%s4 + $0x520] sm:$0xff]
        %v2486 = vld [vmem:[%s4 + $0x528] sm:$0xff]
        %v2487 = vld [vmem:[%s4 + $0x530] sm:$0xff]
        %v2488 = vld [vmem:[%s4 + $0x538] sm:$0xff]
        %v2489 = vld [vmem:[%s4 + $0x540] sm:$0xff]
        %v2490 = vld [vmem:[%s4 + $0x548] sm:$0xff]
        %v2491 = vld [vmem:[%s4 + $0x550] sm:$0xff]
        %v2492 = vld [vmem:[%s4 + $0x558] sm:$0xff]
        %v2493 = vld [vmem:[%s4 + $0x560] sm:$0xff]
        %v2494 = vld [vmem:[%s4 + $0x568] sm:$0xff]
        %v2495 = vld [vmem:[%s4 + $0x570] sm:$0xff]
        %v2496 = vld [vmem:[%s4 + $0x578] sm:$0xff]
        %v2497 = vld [vmem:[%s4 + $0x580] sm:$0xff]
        %v2498 = vld [vmem:[%s4 + $0x588] sm:$0xff]
        %v2499 = vld [vmem:[%s4 + $0x590] sm:$0xff]
        %v2500 = vld [vmem:[%s4 + $0x598] sm:$0xff]
        %v2501 = vld [vmem:[%s4 + $0x5a0] sm:$0xff]
        %v2502 = vld [vmem:[%s4 + $0x5a8] sm:$0xff]
        %v2503 = vld [vmem:[%s4 + $0x5b0] sm:$0xff]
        %v2504 = vld [vmem:[%s4 + $0x5b8] sm:$0xff]
        %v2505 = vld [vmem:[%s4 + $0x5c0] sm:$0xff]
        %v2506 = vld [vmem:[%s4 + $0x5c8] sm:$0xff]
        %v2507 = vld [vmem:[%s4 + $0x5d0] sm:$0xff]
        %v2508 = vld [vmem:[%s4 + $0x5d8] sm:$0xff]
        %v2509 = vld [vmem:[%s4 + $0x5e0] sm:$0xff]
        %v2510 = vld [vmem:[%s4 + $0x5e8] sm:$0xff]
        %v2511 = vld [vmem:[%s4 + $0x5f0] sm:$0xff]
        %v2512 = vld [vmem:[%s4 + $0x5f8] sm:$0xff]
        %v2513 = vld [vmem:[%s4 + $0x600] sm:$0xff]
        %v2514 = vld [vmem:[%s4 + $0x608] sm:$0xff]
        %v2515 = vld [vmem:[%s4 + $0x610] sm:$0xff]
        %v2516 = vld [vmem:[%s4 + $0x618] sm:$0xff]
        %v2517 = vld [vmem:[%s4 + $0x620] sm:$0xff]
        %v2518 = vld [vmem:[%s4 + $0x628] sm:$0xff]
        %v2519 = vld [vmem:[%s4 + $0x630] sm:$0xff]
        %v2520 = vld [vmem:[%s4 + $0x638] sm:$0xff]
        %v2521 = vld [vmem:[%s4 + $0x640] sm:$0xff]
        %v2522 = vld [vmem:[%s4 + $0x648] sm:$0xff]
        %v2523 = vld [vmem:[%s4 + $0x650] sm:$0xff]
        %v2524 = vld [vmem:[%s4 + $0x658] sm:$0xff]
        %v2525 = vld [vmem:[%s4 + $0x660] sm:$0xff]
        %v2526 = vld [vmem:[%s4 + $0x668] sm:$0xff]
        %v2527 = vld [vmem:[%s4 + $0x670] sm:$0xff]
        %v2528 = vld [vmem:[%s4 + $0x678] sm:$0xff]
        %v2529 = vld [vmem:[%s4 + $0x680] sm:$0xff]
        %v2530 = vld [vmem:[%s4 + $0x688] sm:$0xff]
        %v2531 = vld [vmem:[%s4 + $0x690] sm:$0xff]
        %v2532 = vld [vmem:[%s4 + $0x698] sm:$0xff]
        %v2533 = vld [vmem:[%s4 + $0x6a0] sm:$0xff]
        %v2534 = vld [vmem:[%s4 + $0x6a8] sm:$0xff]
        %v2535 = vld [vmem:[%s4 + $0x6b0] sm:$0xff]
        %v2536 = vld [vmem:[%s4 + $0x6b8] sm:$0xff]
        %v2537 = vld [vmem:[%s4 + $0x6c0] sm:$0xff]
        %v2538 = vld [vmem:[%s4 + $0x6c8] sm:$0xff]
        %v2539 = vld [vmem:[%s4 + $0x6d0] sm:$0xff]
        %v2540 = vld [vmem:[%s4 + $0x6d8] sm:$0xff]
        %v2541 = vld [vmem:[%s4 + $0x6e0] sm:$0xff]
        %v2542 = vld [vmem:[%s4 + $0x6e8] sm:$0xff]
        %v2543 = vld [vmem:[%s4 + $0x6f0] sm:$0xff]
        %v2544 = vld [vmem:[%s4 + $0x6f8] sm:$0xff]
        %v2545 = vld [vmem:[%s4 + $0x700] sm:$0xff]
        %v2546 = vld [vmem:[%s4 + $0x708] sm:$0xff]
        %v2547 = vld [vmem:[%s4 + $0x710] sm:$0xff]
        %v2548 = vld [vmem:[%s4 + $0x718] sm:$0xff]
        %v2549 = vld [vmem:[%s4 + $0x720] sm:$0xff]
        %v2550 = vld [vmem:[%s4 + $0x728] sm:$0xff]
        %v2551 = vld [vmem:[%s4 + $0x730] sm:$0xff]
        %v2552 = vld [vmem:[%s4 + $0x738] sm:$0xff]
        %v2553 = vld [vmem:[%s4 + $0x740] sm:$0xff]
        %v2554 = vld [vmem:[%s4 + $0x748] sm:$0xff]
        %v2555 = vld [vmem:[%s4 + $0x750] sm:$0xff]
        %v2556 = vld [vmem:[%s4 + $0x758] sm:$0xff]
        %v2557 = vld [vmem:[%s4 + $0x760] sm:$0xff]
        %v2558 = vld [vmem:[%s4 + $0x768] sm:$0xff]
        %v2559 = vld [vmem:[%s4 + $0x770] sm:$0xff]
        %v2560 = vld [vmem:[%s4 + $0x778] sm:$0xff]
        %v2561 = vld [vmem:[%s4 + $0x780] sm:$0xff]
        %v2562 = vld [vmem:[%s4 + $0x788] sm:$0xff]
        %v2563 = vld [vmem:[%s4 + $0x790] sm:$0xff]
        %v2564 = vld [vmem:[%s4 + $0x798] sm:$0xff]
        %v2565 = vld [vmem:[%s4 + $0x7a0] sm:$0xff]
        %v2566 = vld [vmem:[%s4 + $0x7a8] sm:$0xff]
        %v2567 = vld [vmem:[%s4 + $0x7b0] sm:$0xff]
        %v2568 = vld [vmem:[%s4 + $0x7b8] sm:$0xff]
        %v2569 = vld [vmem:[%s4 + $0x7c0] sm:$0xff]
        %v2570 = vld [vmem:[%s4 + $0x7c8] sm:$0xff]
        %v2571 = vld [vmem:[%s4 + $0x7d0] sm:$0xff]
        %v2572 = vld [vmem:[%s4 + $0x7d8] sm:$0xff]
        %v2573 = vld [vmem:[%s4 + $0x7e0] sm:$0xff]
        %v2574 = vld [vmem:[%s4 + $0x7e8] sm:$0xff]
        %v2575 = vld [vmem:[%s4 + $0x7f0] sm:$0xff]
        %v2576 = vld [vmem:[%s4 + $0x7f8] sm:$0xff]
        %v2577 = vld [vmem:[%s5] sm:$0x3]
        %v2579 = vlaneseq
        %v2580 = vshrl.u32 %v2579, 7
        %v2581 = vsub.s32 0, %v2580
        %v2582 = vrot.slane %v2577, %v2581
        %v2583 = vlaneseq
        %v2584 = vshrl.u32 %v2583, 7
        %v2585 = vsub.s32 1, %v2584
        %v2586 = vrot.slane %v2577, %v2585
        %v2591 = vcombine.high %v2319, %v2319
        %v2593 = vunpack.c.l.s4 1966171168
        %v2594 = vunpack.c.0.s8 %v2593
        %v2595 = vlaneseq
        %v2596 = vshrl.u32 %v2595, 7
        %v2597 = vsub.s32 %v2594, %v2596
        %v2598 = vrot.slane %v2319, %v2597
        %v2600 = vunpack.c.l.s4 1966171168
        %v2601 = vunpack.c.0.s8 %v2600
        %v2602 = vlaneseq
        %v2603 = vshrl.u32 %v2602, 7
        %v2604 = vsub.s32 %v2601, %v2603
        %v2605 = vrot.slane %v2591, %v2604
        %v2606 = vcombine.high %v2598, %v2598
        %v2607 = vcombine.high %v2605, %v2605
        %v2609 = vunpack.c.l.s4 1966171168
        %v2610 = vunpack.c.0.s8 %v2609
        %v2611 = vlaneseq
        %v2612 = vshrl.u32 %v2611, 7
        %v2613 = vsub.s32 %v2610, %v2612
        %v2614 = vrot.slane %v2598, %v2613
        %v2616 = vunpack.c.l.s4 1966171168
        %v2617 = vunpack.c.0.s8 %v2616
        %v2618 = vlaneseq
        %v2619 = vshrl.u32 %v2618, 7
        %v2620 = vsub.s32 %v2617, %v2619
        %v2621 = vrot.slane %v2605, %v2620
        %v2623 = vunpack.c.l.s4 1966171168
        %v2624 = vunpack.c.0.s8 %v2623
        %v2625 = vlaneseq
        %v2626 = vshrl.u32 %v2625, 7
        %v2627 = vsub.s32 %v2624, %v2626
        %v2628 = vrot.slane %v2606, %v2627
        %v2630 = vunpack.c.l.s4 1966171168
        %v2631 = vunpack.c.0.s8 %v2630
        %v2632 = vlaneseq
        %v2633 = vshrl.u32 %v2632, 7
        %v2634 = vsub.s32 %v2631, %v2633
        %v2635 = vrot.slane %v2607, %v2634
        %v2636 = vcombine.high %v2614, %v2614
        %v2637 = vcombine.high %v2621, %v2621
        %v2638 = vcombine.high %v2628, %v2628
        %v2639 = vcombine.high %v2635, %v2635
        %v2640 = vcombine.high %v2320, %v2320
        %v2642 = vunpack.c.l.s4 1966171168
        %v2643 = vunpack.c.0.s8 %v2642
        %v2644 = vlaneseq
        %v2645 = vshrl.u32 %v2644, 7
        %v2646 = vsub.s32 %v2643, %v2645
        %v2647 = vrot.slane %v2320, %v2646
        %v2649 = vunpack.c.l.s4 1966171168
        %v2650 = vunpack.c.0.s8 %v2649
        %v2651 = vlaneseq
        %v2652 = vshrl.u32 %v2651, 7
        %v2653 = vsub.s32 %v2650, %v2652
        %v2654 = vrot.slane %v2640, %v2653
        %v2655 = vcombine.high %v2647, %v2647
        %v2656 = vcombine.high %v2654, %v2654
        %v2658 = vunpack.c.l.s4 1966171168
        %v2659 = vunpack.c.0.s8 %v2658
        %v2660 = vlaneseq
        %v2661 = vshrl.u32 %v2660, 7
        %v2662 = vsub.s32 %v2659, %v2661
        %v2663 = vrot.slane %v2647, %v2662
        %v2665 = vunpack.c.l.s4 1966171168
        %v2666 = vunpack.c.0.s8 %v2665
        %v2667 = vlaneseq
        %v2668 = vshrl.u32 %v2667, 7
        %v2669 = vsub.s32 %v2666, %v2668
        %v2670 = vrot.slane %v2654, %v2669
        %v2672 = vunpack.c.l.s4 1966171168
        %v2673 = vunpack.c.0.s8 %v2672
        %v2674 = vlaneseq
        %v2675 = vshrl.u32 %v2674, 7
        %v2676 = vsub.s32 %v2673, %v2675
        %v2677 = vrot.slane %v2655, %v2676
        %v2679 = vunpack.c.l.s4 1966171168
        %v2680 = vunpack.c.0.s8 %v2679
        %v2681 = vlaneseq
        %v2682 = vshrl.u32 %v2681, 7
        %v2683 = vsub.s32 %v2680, %v2682
        %v2684 = vrot.slane %v2656, %v2683
        %v2685 = vcombine.high %v2663, %v2663
        %v2686 = vcombine.high %v2670, %v2670
        %v2687 = vcombine.high %v2677, %v2677
        %v2688 = vcombine.high %v2684, %v2684
        %v2961 = vunpack.c.l.b16 %v2321
        %v2962 = vunpack.c.h.b16 %v2321
        %v2963 = vunpack.c.l.b16 %v2322
        %v2964 = vunpack.c.h.b16 %v2322
        %v2965 = vunpack.c.l.b16 %v2323
        %v2966 = vunpack.c.h.b16 %v2323
        %v2967 = vunpack.c.l.b16 %v2324
        %v2968 = vunpack.c.h.b16 %v2324
        %v2969 = vunpack.c.l.b16 %v2325
        %v2970 = vunpack.c.h.b16 %v2325
        %v2971 = vunpack.c.l.b16 %v2326
        %v2972 = vunpack.c.h.b16 %v2326
        %v2973 = vunpack.c.l.b16 %v2327
        %v2974 = vunpack.c.h.b16 %v2327
        %v2975 = vunpack.c.l.b16 %v2328
        %v2976 = vunpack.c.h.b16 %v2328
        %v2977 = vunpack.c.l.b16 %v2329
        %v2978 = vunpack.c.h.b16 %v2329
        %v2979 = vunpack.c.l.b16 %v2330
        %v2980 = vunpack.c.h.b16 %v2330
        %v2981 = vunpack.c.l.b16 %v2331
        %v2982 = vunpack.c.h.b16 %v2331
        %v2983 = vunpack.c.l.b16 %v2332
        %v2984 = vunpack.c.h.b16 %v2332
        %v2985 = vunpack.c.l.b16 %v2333
        %v2986 = vunpack.c.h.b16 %v2333
        %v2987 = vunpack.c.l.b16 %v2334
        %v2988 = vunpack.c.h.b16 %v2334
        %v2989 = vunpack.c.l.b16 %v2335
        %v2990 = vunpack.c.h.b16 %v2335
        %v2991 = vunpack.c.l.b16 %v2336
        %v2992 = vunpack.c.h.b16 %v2336
        %v2993 = vunpack.c.l.b16 %v2337
        %v2994 = vunpack.c.h.b16 %v2337
        %v2995 = vunpack.c.l.b16 %v2338
        %v2996 = vunpack.c.h.b16 %v2338
        %v2997 = vunpack.c.l.b16 %v2339
        %v2998 = vunpack.c.h.b16 %v2339
        %v2999 = vunpack.c.l.b16 %v2340
        %v3000 = vunpack.c.h.b16 %v2340
        %v3001 = vunpack.c.l.b16 %v2341
        %v3002 = vunpack.c.h.b16 %v2341
        %v3003 = vunpack.c.l.b16 %v2342
        %v3004 = vunpack.c.h.b16 %v2342
        %v3005 = vunpack.c.l.b16 %v2343
        %v3006 = vunpack.c.h.b16 %v2343
        %v3007 = vunpack.c.l.b16 %v2344
        %v3008 = vunpack.c.h.b16 %v2344
        %v3009 = vunpack.c.l.b16 %v2345
        %v3010 = vunpack.c.h.b16 %v2345
        %v3011 = vunpack.c.l.b16 %v2346
        %v3012 = vunpack.c.h.b16 %v2346
        %v3013 = vunpack.c.l.b16 %v2347
        %v3014 = vunpack.c.h.b16 %v2347
        %v3015 = vunpack.c.l.b16 %v2348
        %v3016 = vunpack.c.h.b16 %v2348
        %v3017 = vunpack.c.l.b16 %v2349
        %v3018 = vunpack.c.h.b16 %v2349
        %v3019 = vunpack.c.l.b16 %v2350
        %v3020 = vunpack.c.h.b16 %v2350
        %v3021 = vunpack.c.l.b16 %v2351
        %v3022 = vunpack.c.h.b16 %v2351
        %v3023 = vunpack.c.l.b16 %v2352
        %v3024 = vunpack.c.h.b16 %v2352
        %v3025 = vunpack.c.l.b16 %v2353
        %v3026 = vunpack.c.h.b16 %v2353
        %v3027 = vunpack.c.l.b16 %v2354
        %v3028 = vunpack.c.h.b16 %v2354
        %v3029 = vunpack.c.l.b16 %v2355
        %v3030 = vunpack.c.h.b16 %v2355
        %v3031 = vunpack.c.l.b16 %v2356
        %v3032 = vunpack.c.h.b16 %v2356
        %v3033 = vunpack.c.l.b16 %v2357
        %v3034 = vunpack.c.h.b16 %v2357
        %v3035 = vunpack.c.l.b16 %v2358
        %v3036 = vunpack.c.h.b16 %v2358
        %v3037 = vunpack.c.l.b16 %v2359
        %v3038 = vunpack.c.h.b16 %v2359
        %v3039 = vunpack.c.l.b16 %v2360
        %v3040 = vunpack.c.h.b16 %v2360
        %v3041 = vunpack.c.l.b16 %v2361
        %v3042 = vunpack.c.h.b16 %v2361
        %v3043 = vunpack.c.l.b16 %v2362
        %v3044 = vunpack.c.h.b16 %v2362
        %v3045 = vunpack.c.l.b16 %v2363
        %v3046 = vunpack.c.h.b16 %v2363
        %v3047 = vunpack.c.l.b16 %v2364
        %v3048 = vunpack.c.h.b16 %v2364
        %v3049 = vunpack.c.l.b16 %v2365
        %v3050 = vunpack.c.h.b16 %v2365
        %v3051 = vunpack.c.l.b16 %v2366
        %v3052 = vunpack.c.h.b16 %v2366
        %v3053 = vunpack.c.l.b16 %v2367
        %v3054 = vunpack.c.h.b16 %v2367
        %v3055 = vunpack.c.l.b16 %v2368
        %v3056 = vunpack.c.h.b16 %v2368
        %v3057 = vunpack.c.l.b16 %v2369
        %v3058 = vunpack.c.h.b16 %v2369
        %v3059 = vunpack.c.l.b16 %v2370
        %v3060 = vunpack.c.h.b16 %v2370
        %v3061 = vunpack.c.l.b16 %v2371
        %v3062 = vunpack.c.h.b16 %v2371
        %v3063 = vunpack.c.l.b16 %v2372
        %v3064 = vunpack.c.h.b16 %v2372
        %v3065 = vunpack.c.l.b16 %v2373
        %v3066 = vunpack.c.h.b16 %v2373
        %v3067 = vunpack.c.l.b16 %v2374
        %v3068 = vunpack.c.h.b16 %v2374
        %v3069 = vunpack.c.l.b16 %v2375
        %v3070 = vunpack.c.h.b16 %v2375
        %v3071 = vunpack.c.l.b16 %v2376
        %v3072 = vunpack.c.h.b16 %v2376
        %v3073 = vunpack.c.l.b16 %v2377
        %v3074 = vunpack.c.h.b16 %v2377
        %v3075 = vunpack.c.l.b16 %v2378
        %v3076 = vunpack.c.h.b16 %v2378
        %v3077 = vunpack.c.l.b16 %v2379
        %v3078 = vunpack.c.h.b16 %v2379
        %v3079 = vunpack.c.l.b16 %v2380
        %v3080 = vunpack.c.h.b16 %v2380
        %v3081 = vunpack.c.l.b16 %v2381
        %v3082 = vunpack.c.h.b16 %v2381
        %v3083 = vunpack.c.l.b16 %v2382
        %v3084 = vunpack.c.h.b16 %v2382
        %v3085 = vunpack.c.l.b16 %v2383
        %v3086 = vunpack.c.h.b16 %v2383
        %v3087 = vunpack.c.l.b16 %v2384
        %v3088 = vunpack.c.h.b16 %v2384
        %v3089 = vunpack.c.l.b16 %v2385
        %v3090 = vunpack.c.h.b16 %v2385
        %v3091 = vunpack.c.l.b16 %v2386
        %v3092 = vunpack.c.h.b16 %v2386
        %v3093 = vunpack.c.l.b16 %v2387
        %v3094 = vunpack.c.h.b16 %v2387
        %v3095 = vunpack.c.l.b16 %v2388
        %v3096 = vunpack.c.h.b16 %v2388
        %v3097 = vunpack.c.l.b16 %v2389
        %v3098 = vunpack.c.h.b16 %v2389
        %v3099 = vunpack.c.l.b16 %v2390
        %v3100 = vunpack.c.h.b16 %v2390
        %v3101 = vunpack.c.l.b16 %v2391
        %v3102 = vunpack.c.h.b16 %v2391
        %v3103 = vunpack.c.l.b16 %v2392
        %v3104 = vunpack.c.h.b16 %v2392
        %v3105 = vunpack.c.l.b16 %v2393
        %v3106 = vunpack.c.h.b16 %v2393
        %v3107 = vunpack.c.l.b16 %v2394
        %v3108 = vunpack.c.h.b16 %v2394
        %v3109 = vunpack.c.l.b16 %v2395
        %v3110 = vunpack.c.h.b16 %v2395
        %v3111 = vunpack.c.l.b16 %v2396
        %v3112 = vunpack.c.h.b16 %v2396
        %v3113 = vunpack.c.l.b16 %v2397
        %v3114 = vunpack.c.h.b16 %v2397
        %v3115 = vunpack.c.l.b16 %v2398
        %v3116 = vunpack.c.h.b16 %v2398
        %v3117 = vunpack.c.l.b16 %v2399
        %v3118 = vunpack.c.h.b16 %v2399
        %v3119 = vunpack.c.l.b16 %v2400
        %v3120 = vunpack.c.h.b16 %v2400
        %v3121 = vunpack.c.l.b16 %v2401
        %v3122 = vunpack.c.h.b16 %v2401
        %v3123 = vunpack.c.l.b16 %v2402
        %v3124 = vunpack.c.h.b16 %v2402
        %v3125 = vunpack.c.l.b16 %v2403
        %v3126 = vunpack.c.h.b16 %v2403
        %v3127 = vunpack.c.l.b16 %v2404
        %v3128 = vunpack.c.h.b16 %v2404
        %v3129 = vunpack.c.l.b16 %v2405
        %v3130 = vunpack.c.h.b16 %v2405
        %v3131 = vunpack.c.l.b16 %v2406
        %v3132 = vunpack.c.h.b16 %v2406
        %v3133 = vunpack.c.l.b16 %v2407
        %v3134 = vunpack.c.h.b16 %v2407
        %v3135 = vunpack.c.l.b16 %v2408
        %v3136 = vunpack.c.h.b16 %v2408
        %v3137 = vunpack.c.l.b16 %v2409
        %v3138 = vunpack.c.h.b16 %v2409
        %v3139 = vunpack.c.l.b16 %v2410
        %v3140 = vunpack.c.h.b16 %v2410
        %v3141 = vunpack.c.l.b16 %v2411
        %v3142 = vunpack.c.h.b16 %v2411
        %v3143 = vunpack.c.l.b16 %v2412
        %v3144 = vunpack.c.h.b16 %v2412
        %v3145 = vunpack.c.l.b16 %v2413
        %v3146 = vunpack.c.h.b16 %v2413
        %v3147 = vunpack.c.l.b16 %v2414
        %v3148 = vunpack.c.h.b16 %v2414
        %v3149 = vunpack.c.l.b16 %v2415
        %v3150 = vunpack.c.h.b16 %v2415
        %v3151 = vunpack.c.l.b16 %v2416
        %v3152 = vunpack.c.h.b16 %v2416
        %v3153 = vunpack.c.l.b16 %v2417
        %v3154 = vunpack.c.h.b16 %v2417
        %v3155 = vunpack.c.l.b16 %v2418
        %v3156 = vunpack.c.h.b16 %v2418
        %v3157 = vunpack.c.l.b16 %v2419
        %v3158 = vunpack.c.h.b16 %v2419
        %v3159 = vunpack.c.l.b16 %v2420
        %v3160 = vunpack.c.h.b16 %v2420
        %v3161 = vunpack.c.l.b16 %v2421
        %v3162 = vunpack.c.h.b16 %v2421
        %v3163 = vunpack.c.l.b16 %v2422
        %v3164 = vunpack.c.h.b16 %v2422
        %v3165 = vunpack.c.l.b16 %v2423
        %v3166 = vunpack.c.h.b16 %v2423
        %v3167 = vunpack.c.l.b16 %v2424
        %v3168 = vunpack.c.h.b16 %v2424
        %v3169 = vunpack.c.l.b16 %v2425
        %v3170 = vunpack.c.h.b16 %v2425
        %v3171 = vunpack.c.l.b16 %v2426
        %v3172 = vunpack.c.h.b16 %v2426
        %v3173 = vunpack.c.l.b16 %v2427
        %v3174 = vunpack.c.h.b16 %v2427
        %v3175 = vunpack.c.l.b16 %v2428
        %v3176 = vunpack.c.h.b16 %v2428
        %v3177 = vunpack.c.l.b16 %v2429
        %v3178 = vunpack.c.h.b16 %v2429
        %v3179 = vunpack.c.l.b16 %v2430
        %v3180 = vunpack.c.h.b16 %v2430
        %v3181 = vunpack.c.l.b16 %v2431
        %v3182 = vunpack.c.h.b16 %v2431
        %v3183 = vunpack.c.l.b16 %v2432
        %v3184 = vunpack.c.h.b16 %v2432
        %v3185 = vunpack.c.l.b16 %v2433
        %v3186 = vunpack.c.h.b16 %v2433
        %v3187 = vunpack.c.l.b16 %v2434
        %v3188 = vunpack.c.h.b16 %v2434
        %v3189 = vunpack.c.l.b16 %v2435
        %v3190 = vunpack.c.h.b16 %v2435
        %v3191 = vunpack.c.l.b16 %v2436
        %v3192 = vunpack.c.h.b16 %v2436
        %v3193 = vunpack.c.l.b16 %v2437
        %v3194 = vunpack.c.h.b16 %v2437
        %v3195 = vunpack.c.l.b16 %v2438
        %v3196 = vunpack.c.h.b16 %v2438
        %v3197 = vunpack.c.l.b16 %v2439
        %v3198 = vunpack.c.h.b16 %v2439
        %v3199 = vunpack.c.l.b16 %v2440
        %v3200 = vunpack.c.h.b16 %v2440
        %v3201 = vunpack.c.l.b16 %v2441
        %v3202 = vunpack.c.h.b16 %v2441
        %v3203 = vunpack.c.l.b16 %v2442
        %v3204 = vunpack.c.h.b16 %v2442
        %v3205 = vunpack.c.l.b16 %v2443
        %v3206 = vunpack.c.h.b16 %v2443
        %v3207 = vunpack.c.l.b16 %v2444
        %v3208 = vunpack.c.h.b16 %v2444
        %v3209 = vunpack.c.l.b16 %v2445
        %v3210 = vunpack.c.h.b16 %v2445
        %v3211 = vunpack.c.l.b16 %v2446
        %v3212 = vunpack.c.h.b16 %v2446
        %v3213 = vunpack.c.l.b16 %v2447
        %v3214 = vunpack.c.h.b16 %v2447
        %v3215 = vunpack.c.l.b16 %v2448
        %v3216 = vunpack.c.h.b16 %v2448
        %v3217 = vunpack.c.l.b16 %v2449
        %v3218 = vunpack.c.h.b16 %v2449
        %v3219 = vunpack.c.l.b16 %v2450
        %v3220 = vunpack.c.h.b16 %v2450
        %v3221 = vunpack.c.l.b16 %v2451
        %v3222 = vunpack.c.h.b16 %v2451
        %v3223 = vunpack.c.l.b16 %v2452
        %v3224 = vunpack.c.h.b16 %v2452
        %v3225 = vunpack.c.l.b16 %v2453
        %v3226 = vunpack.c.h.b16 %v2453
        %v3227 = vunpack.c.l.b16 %v2454
        %v3228 = vunpack.c.h.b16 %v2454
        %v3229 = vunpack.c.l.b16 %v2455
        %v3230 = vunpack.c.h.b16 %v2455
        %v3231 = vunpack.c.l.b16 %v2456
        %v3232 = vunpack.c.h.b16 %v2456
        %v3233 = vunpack.c.l.b16 %v2457
        %v3234 = vunpack.c.h.b16 %v2457
        %v3235 = vunpack.c.l.b16 %v2458
        %v3236 = vunpack.c.h.b16 %v2458
        %v3237 = vunpack.c.l.b16 %v2459
        %v3238 = vunpack.c.h.b16 %v2459
        %v3239 = vunpack.c.l.b16 %v2460
        %v3240 = vunpack.c.h.b16 %v2460
        %v3241 = vunpack.c.l.b16 %v2461
        %v3242 = vunpack.c.h.b16 %v2461
        %v3243 = vunpack.c.l.b16 %v2462
        %v3244 = vunpack.c.h.b16 %v2462
        %v3245 = vunpack.c.l.b16 %v2463
        %v3246 = vunpack.c.h.b16 %v2463
        %v3247 = vunpack.c.l.b16 %v2464
        %v3248 = vunpack.c.h.b16 %v2464
        %v3249 = vunpack.c.l.b16 %v2465
        %v3250 = vunpack.c.h.b16 %v2465
        %v3251 = vunpack.c.l.b16 %v2466
        %v3252 = vunpack.c.h.b16 %v2466
        %v3253 = vunpack.c.l.b16 %v2467
        %v3254 = vunpack.c.h.b16 %v2467
        %v3255 = vunpack.c.l.b16 %v2468
        %v3256 = vunpack.c.h.b16 %v2468
        %v3257 = vunpack.c.l.b16 %v2469
        %v3258 = vunpack.c.h.b16 %v2469
        %v3259 = vunpack.c.l.b16 %v2470
        %v3260 = vunpack.c.h.b16 %v2470
        %v3261 = vunpack.c.l.b16 %v2471
        %v3262 = vunpack.c.h.b16 %v2471
        %v3263 = vunpack.c.l.b16 %v2472
        %v3264 = vunpack.c.h.b16 %v2472
        %v3265 = vunpack.c.l.b16 %v2473
        %v3266 = vunpack.c.h.b16 %v2473
        %v3267 = vunpack.c.l.b16 %v2474
        %v3268 = vunpack.c.h.b16 %v2474
        %v3269 = vunpack.c.l.b16 %v2475
        %v3270 = vunpack.c.h.b16 %v2475
        %v3271 = vunpack.c.l.b16 %v2476
        %v3272 = vunpack.c.h.b16 %v2476
        %v3273 = vunpack.c.l.b16 %v2477
        %v3274 = vunpack.c.h.b16 %v2477
        %v3275 = vunpack.c.l.b16 %v2478
        %v3276 = vunpack.c.h.b16 %v2478
        %v3277 = vunpack.c.l.b16 %v2479
        %v3278 = vunpack.c.h.b16 %v2479
        %v3279 = vunpack.c.l.b16 %v2480
        %v3280 = vunpack.c.h.b16 %v2480
        %v3281 = vunpack.c.l.b16 %v2481
        %v3282 = vunpack.c.h.b16 %v2481
        %v3283 = vunpack.c.l.b16 %v2482
        %v3284 = vunpack.c.h.b16 %v2482
        %v3285 = vunpack.c.l.b16 %v2483
        %v3286 = vunpack.c.h.b16 %v2483
        %v3287 = vunpack.c.l.b16 %v2484
        %v3288 = vunpack.c.h.b16 %v2484
        %v3289 = vunpack.c.l.b16 %v2485
        %v3290 = vunpack.c.h.b16 %v2485
        %v3291 = vunpack.c.l.b16 %v2486
        %v3292 = vunpack.c.h.b16 %v2486
        %v3293 = vunpack.c.l.b16 %v2487
        %v3294 = vunpack.c.h.b16 %v2487
        %v3295 = vunpack.c.l.b16 %v2488
        %v3296 = vunpack.c.h.b16 %v2488
        %v3297 = vunpack.c.l.b16 %v2489
        %v3298 = vunpack.c.h.b16 %v2489
        %v3299 = vunpack.c.l.b16 %v2490
        %v3300 = vunpack.c.h.b16 %v2490
        %v3301 = vunpack.c.l.b16 %v2491
        %v3302 = vunpack.c.h.b16 %v2491
        %v3303 = vunpack.c.l.b16 %v2492
        %v3304 = vunpack.c.h.b16 %v2492
        %v3305 = vunpack.c.l.b16 %v2493
        %v3306 = vunpack.c.h.b16 %v2493
        %v3307 = vunpack.c.l.b16 %v2494
        %v3308 = vunpack.c.h.b16 %v2494
        %v3309 = vunpack.c.l.b16 %v2495
        %v3310 = vunpack.c.h.b16 %v2495
        %v3311 = vunpack.c.l.b16 %v2496
        %v3312 = vunpack.c.h.b16 %v2496
        %v3313 = vunpack.c.l.b16 %v2497
        %v3314 = vunpack.c.h.b16 %v2497
        %v3315 = vunpack.c.l.b16 %v2498
        %v3316 = vunpack.c.h.b16 %v2498
        %v3317 = vunpack.c.l.b16 %v2499
        %v3318 = vunpack.c.h.b16 %v2499
        %v3319 = vunpack.c.l.b16 %v2500
        %v3320 = vunpack.c.h.b16 %v2500
        %v3321 = vunpack.c.l.b16 %v2501
        %v3322 = vunpack.c.h.b16 %v2501
        %v3323 = vunpack.c.l.b16 %v2502
        %v3324 = vunpack.c.h.b16 %v2502
        %v3325 = vunpack.c.l.b16 %v2503
        %v3326 = vunpack.c.h.b16 %v2503
        %v3327 = vunpack.c.l.b16 %v2504
        %v3328 = vunpack.c.h.b16 %v2504
        %v3329 = vunpack.c.l.b16 %v2505
        %v3330 = vunpack.c.h.b16 %v2505
        %v3331 = vunpack.c.l.b16 %v2506
        %v3332 = vunpack.c.h.b16 %v2506
        %v3333 = vunpack.c.l.b16 %v2507
        %v3334 = vunpack.c.h.b16 %v2507
        %v3335 = vunpack.c.l.b16 %v2508
        %v3336 = vunpack.c.h.b16 %v2508
        %v3337 = vunpack.c.l.b16 %v2509
        %v3338 = vunpack.c.h.b16 %v2509
        %v3339 = vunpack.c.l.b16 %v2510
        %v3340 = vunpack.c.h.b16 %v2510
        %v3341 = vunpack.c.l.b16 %v2511
        %v3342 = vunpack.c.h.b16 %v2511
        %v3343 = vunpack.c.l.b16 %v2512
        %v3344 = vunpack.c.h.b16 %v2512
        %v3345 = vunpack.c.l.b16 %v2513
        %v3346 = vunpack.c.h.b16 %v2513
        %v3347 = vunpack.c.l.b16 %v2514
        %v3348 = vunpack.c.h.b16 %v2514
        %v3349 = vunpack.c.l.b16 %v2515
        %v3350 = vunpack.c.h.b16 %v2515
        %v3351 = vunpack.c.l.b16 %v2516
        %v3352 = vunpack.c.h.b16 %v2516
        %v3353 = vunpack.c.l.b16 %v2517
        %v3354 = vunpack.c.h.b16 %v2517
        %v3355 = vunpack.c.l.b16 %v2518
        %v3356 = vunpack.c.h.b16 %v2518
        %v3357 = vunpack.c.l.b16 %v2519
        %v3358 = vunpack.c.h.b16 %v2519
        %v3359 = vunpack.c.l.b16 %v2520
        %v3360 = vunpack.c.h.b16 %v2520
        %v3361 = vunpack.c.l.b16 %v2521
        %v3362 = vunpack.c.h.b16 %v2521
        %v3363 = vunpack.c.l.b16 %v2522
        %v3364 = vunpack.c.h.b16 %v2522
        %v3365 = vunpack.c.l.b16 %v2523
        %v3366 = vunpack.c.h.b16 %v2523
        %v3367 = vunpack.c.l.b16 %v2524
        %v3368 = vunpack.c.h.b16 %v2524
        %v3369 = vunpack.c.l.b16 %v2525
        %v3370 = vunpack.c.h.b16 %v2525
        %v3371 = vunpack.c.l.b16 %v2526
        %v3372 = vunpack.c.h.b16 %v2526
        %v3373 = vunpack.c.l.b16 %v2527
        %v3374 = vunpack.c.h.b16 %v2527
        %v3375 = vunpack.c.l.b16 %v2528
        %v3376 = vunpack.c.h.b16 %v2528
        %v3377 = vunpack.c.l.b16 %v2529
        %v3378 = vunpack.c.h.b16 %v2529
        %v3379 = vunpack.c.l.b16 %v2530
        %v3380 = vunpack.c.h.b16 %v2530
        %v3381 = vunpack.c.l.b16 %v2531
        %v3382 = vunpack.c.h.b16 %v2531
        %v3383 = vunpack.c.l.b16 %v2532
        %v3384 = vunpack.c.h.b16 %v2532
        %v3385 = vunpack.c.l.b16 %v2533
        %v3386 = vunpack.c.h.b16 %v2533
        %v3387 = vunpack.c.l.b16 %v2534
        %v3388 = vunpack.c.h.b16 %v2534
        %v3389 = vunpack.c.l.b16 %v2535
        %v3390 = vunpack.c.h.b16 %v2535
        %v3391 = vunpack.c.l.b16 %v2536
        %v3392 = vunpack.c.h.b16 %v2536
        %v3393 = vunpack.c.l.b16 %v2537
        %v3394 = vunpack.c.h.b16 %v2537
        %v3395 = vunpack.c.l.b16 %v2538
        %v3396 = vunpack.c.h.b16 %v2538
        %v3397 = vunpack.c.l.b16 %v2539
        %v3398 = vunpack.c.h.b16 %v2539
        %v3399 = vunpack.c.l.b16 %v2540
        %v3400 = vunpack.c.h.b16 %v2540
        %v3401 = vunpack.c.l.b16 %v2541
        %v3402 = vunpack.c.h.b16 %v2541
        %v3403 = vunpack.c.l.b16 %v2542
        %v3404 = vunpack.c.h.b16 %v2542
        %v3405 = vunpack.c.l.b16 %v2543
        %v3406 = vunpack.c.h.b16 %v2543
        %v3407 = vunpack.c.l.b16 %v2544
        %v3408 = vunpack.c.h.b16 %v2544
        %v3409 = vunpack.c.l.b16 %v2545
        %v3410 = vunpack.c.h.b16 %v2545
        %v3411 = vunpack.c.l.b16 %v2546
        %v3412 = vunpack.c.h.b16 %v2546
        %v3413 = vunpack.c.l.b16 %v2547
        %v3414 = vunpack.c.h.b16 %v2547
        %v3415 = vunpack.c.l.b16 %v2548
        %v3416 = vunpack.c.h.b16 %v2548
        %v3417 = vunpack.c.l.b16 %v2549
        %v3418 = vunpack.c.h.b16 %v2549
        %v3419 = vunpack.c.l.b16 %v2550
        %v3420 = vunpack.c.h.b16 %v2550
        %v3421 = vunpack.c.l.b16 %v2551
        %v3422 = vunpack.c.h.b16 %v2551
        %v3423 = vunpack.c.l.b16 %v2552
        %v3424 = vunpack.c.h.b16 %v2552
        %v3425 = vunpack.c.l.b16 %v2553
        %v3426 = vunpack.c.h.b16 %v2553
        %v3427 = vunpack.c.l.b16 %v2554
        %v3428 = vunpack.c.h.b16 %v2554
        %v3429 = vunpack.c.l.b16 %v2555
        %v3430 = vunpack.c.h.b16 %v2555
        %v3431 = vunpack.c.l.b16 %v2556
        %v3432 = vunpack.c.h.b16 %v2556
        %v3433 = vunpack.c.l.b16 %v2557
        %v3434 = vunpack.c.h.b16 %v2557
        %v3435 = vunpack.c.l.b16 %v2558
        %v3436 = vunpack.c.h.b16 %v2558
        %v3437 = vunpack.c.l.b16 %v2559
        %v3438 = vunpack.c.h.b16 %v2559
        %v3439 = vunpack.c.l.b16 %v2560
        %v3440 = vunpack.c.h.b16 %v2560
        %v3441 = vunpack.c.l.b16 %v2561
        %v3442 = vunpack.c.h.b16 %v2561
        %v3443 = vunpack.c.l.b16 %v2562
        %v3444 = vunpack.c.h.b16 %v2562
        %v3445 = vunpack.c.l.b16 %v2563
        %v3446 = vunpack.c.h.b16 %v2563
        %v3447 = vunpack.c.l.b16 %v2564
        %v3448 = vunpack.c.h.b16 %v2564
        %v3449 = vunpack.c.l.b16 %v2565
        %v3450 = vunpack.c.h.b16 %v2565
        %v3451 = vunpack.c.l.b16 %v2566
        %v3452 = vunpack.c.h.b16 %v2566
        %v3453 = vunpack.c.l.b16 %v2567
        %v3454 = vunpack.c.h.b16 %v2567
        %v3455 = vunpack.c.l.b16 %v2568
        %v3456 = vunpack.c.h.b16 %v2568
        %v3457 = vunpack.c.l.b16 %v2569
        %v3458 = vunpack.c.h.b16 %v2569
        %v3459 = vunpack.c.l.b16 %v2570
        %v3460 = vunpack.c.h.b16 %v2570
        %v3461 = vunpack.c.l.b16 %v2571
        %v3462 = vunpack.c.h.b16 %v2571
        %v3463 = vunpack.c.l.b16 %v2572
        %v3464 = vunpack.c.h.b16 %v2572
        %v3465 = vunpack.c.l.b16 %v2573
        %v3466 = vunpack.c.h.b16 %v2573
        %v3467 = vunpack.c.l.b16 %v2574
        %v3468 = vunpack.c.h.b16 %v2574
        %v3469 = vunpack.c.l.b16 %v2575
        %v3470 = vunpack.c.h.b16 %v2575
        %v3471 = vunpack.c.l.b16 %v2576
        %v3472 = vunpack.c.h.b16 %v2576
        %v3473 = vpack.c.b16 %v2963, %v2961
        %v3474 = vpack.c.b16 %v2964, %v2962
        %v3475 = vpack.c.b16 %v2967, %v2965
        %v3476 = vpack.c.b16 %v2968, %v2966
        %v3477 = vpack.c.b16 %v2971, %v2969
        %v3478 = vpack.c.b16 %v2972, %v2970
        %v3479 = vpack.c.b16 %v2975, %v2973
        %v3480 = vpack.c.b16 %v2976, %v2974
        %v3481 = vpack.c.b16 %v2979, %v2977
        %v3482 = vpack.c.b16 %v2980, %v2978
        %v3483 = vpack.c.b16 %v2983, %v2981
        %v3484 = vpack.c.b16 %v2984, %v2982
        %v3485 = vpack.c.b16 %v2987, %v2985
        %v3486 = vpack.c.b16 %v2988, %v2986
        %v3487 = vpack.c.b16 %v2991, %v2989
        %v3488 = vpack.c.b16 %v2992, %v2990
        %v3489 = vpack.c.b16 %v2995, %v2993
        %v3490 = vpack.c.b16 %v2996, %v2994
        %v3491 = vpack.c.b16 %v2999, %v2997
        %v3492 = vpack.c.b16 %v3000, %v2998
        %v3493 = vpack.c.b16 %v3003, %v3001
        %v3494 = vpack.c.b16 %v3004, %v3002
        %v3495 = vpack.c.b16 %v3007, %v3005
        %v3496 = vpack.c.b16 %v3008, %v3006
        %v3497 = vpack.c.b16 %v3011, %v3009
        %v3498 = vpack.c.b16 %v3012, %v3010
        %v3499 = vpack.c.b16 %v3015, %v3013
        %v3500 = vpack.c.b16 %v3016, %v3014
        %v3501 = vpack.c.b16 %v3019, %v3017
        %v3502 = vpack.c.b16 %v3020, %v3018
        %v3503 = vpack.c.b16 %v3023, %v3021
        %v3504 = vpack.c.b16 %v3024, %v3022
        %v3505 = vpack.c.b16 %v3027, %v3025
        %v3506 = vpack.c.b16 %v3028, %v3026
        %v3507 = vpack.c.b16 %v3031, %v3029
        %v3508 = vpack.c.b16 %v3032, %v3030
        %v3509 = vpack.c.b16 %v3035, %v3033
        %v3510 = vpack.c.b16 %v3036, %v3034
        %v3511 = vpack.c.b16 %v3039, %v3037
        %v3512 = vpack.c.b16 %v3040, %v3038
        %v3513 = vpack.c.b16 %v3043, %v3041
        %v3514 = vpack.c.b16 %v3044, %v3042
        %v3515 = vpack.c.b16 %v3047, %v3045
        %v3516 = vpack.c.b16 %v3048, %v3046
        %v3517 = vpack.c.b16 %v3051, %v3049
        %v3518 = vpack.c.b16 %v3052, %v3050
        %v3519 = vpack.c.b16 %v3055, %v3053
        %v3520 = vpack.c.b16 %v3056, %v3054
        %v3521 = vpack.c.b16 %v3059, %v3057
        %v3522 = vpack.c.b16 %v3060, %v3058
        %v3523 = vpack.c.b16 %v3063, %v3061
        %v3524 = vpack.c.b16 %v3064, %v3062
        %v3525 = vpack.c.b16 %v3067, %v3065
        %v3526 = vpack.c.b16 %v3068, %v3066
        %v3527 = vpack.c.b16 %v3071, %v3069
        %v3528 = vpack.c.b16 %v3072, %v3070
        %v3529 = vpack.c.b16 %v3075, %v3073
        %v3530 = vpack.c.b16 %v3076, %v3074
        %v3531 = vpack.c.b16 %v3079, %v3077
        %v3532 = vpack.c.b16 %v3080, %v3078
        %v3533 = vpack.c.b16 %v3083, %v3081
        %v3534 = vpack.c.b16 %v3084, %v3082
        %v3535 = vpack.c.b16 %v3087, %v3085
        %v3536 = vpack.c.b16 %v3088, %v3086
        %v3537 = vpack.c.b16 %v3091, %v3089
        %v3538 = vpack.c.b16 %v3092, %v3090
        %v3539 = vpack.c.b16 %v3095, %v3093
        %v3540 = vpack.c.b16 %v3096, %v3094
        %v3541 = vpack.c.b16 %v3099, %v3097
        %v3542 = vpack.c.b16 %v3100, %v3098
        %v3543 = vpack.c.b16 %v3103, %v3101
        %v3544 = vpack.c.b16 %v3104, %v3102
        %v3545 = vpack.c.b16 %v3107, %v3105
        %v3546 = vpack.c.b16 %v3108, %v3106
        %v3547 = vpack.c.b16 %v3111, %v3109
        %v3548 = vpack.c.b16 %v3112, %v3110
        %v3549 = vpack.c.b16 %v3115, %v3113
        %v3550 = vpack.c.b16 %v3116, %v3114
        %v3551 = vpack.c.b16 %v3119, %v3117
        %v3552 = vpack.c.b16 %v3120, %v3118
        %v3553 = vpack.c.b16 %v3123, %v3121
        %v3554 = vpack.c.b16 %v3124, %v3122
        %v3555 = vpack.c.b16 %v3127, %v3125
        %v3556 = vpack.c.b16 %v3128, %v3126
        %v3557 = vpack.c.b16 %v3131, %v3129
        %v3558 = vpack.c.b16 %v3132, %v3130
        %v3559 = vpack.c.b16 %v3135, %v3133
        %v3560 = vpack.c.b16 %v3136, %v3134
        %v3561 = vpack.c.b16 %v3139, %v3137
        %v3562 = vpack.c.b16 %v3140, %v3138
        %v3563 = vpack.c.b16 %v3143, %v3141
        %v3564 = vpack.c.b16 %v3144, %v3142
        %v3565 = vpack.c.b16 %v3147, %v3145
        %v3566 = vpack.c.b16 %v3148, %v3146
        %v3567 = vpack.c.b16 %v3151, %v3149
        %v3568 = vpack.c.b16 %v3152, %v3150
        %v3569 = vpack.c.b16 %v3155, %v3153
        %v3570 = vpack.c.b16 %v3156, %v3154
        %v3571 = vpack.c.b16 %v3159, %v3157
        %v3572 = vpack.c.b16 %v3160, %v3158
        %v3573 = vpack.c.b16 %v3163, %v3161
        %v3574 = vpack.c.b16 %v3164, %v3162
        %v3575 = vpack.c.b16 %v3167, %v3165
        %v3576 = vpack.c.b16 %v3168, %v3166
        %v3577 = vpack.c.b16 %v3171, %v3169
        %v3578 = vpack.c.b16 %v3172, %v3170
        %v3579 = vpack.c.b16 %v3175, %v3173
        %v3580 = vpack.c.b16 %v3176, %v3174
        %v3581 = vpack.c.b16 %v3179, %v3177
        %v3582 = vpack.c.b16 %v3180, %v3178
        %v3583 = vpack.c.b16 %v3183, %v3181
        %v3584 = vpack.c.b16 %v3184, %v3182
        %v3585 = vpack.c.b16 %v3187, %v3185
        %v3586 = vpack.c.b16 %v3188, %v3186
        %v3587 = vpack.c.b16 %v3191, %v3189
        %v3588 = vpack.c.b16 %v3192, %v3190
        %v3589 = vpack.c.b16 %v3195, %v3193
        %v3590 = vpack.c.b16 %v3196, %v3194
        %v3591 = vpack.c.b16 %v3199, %v3197
        %v3592 = vpack.c.b16 %v3200, %v3198
        %v3593 = vpack.c.b16 %v3203, %v3201
        %v3594 = vpack.c.b16 %v3204, %v3202
        %v3595 = vpack.c.b16 %v3207, %v3205
        %v3596 = vpack.c.b16 %v3208, %v3206
        %v3597 = vpack.c.b16 %v3211, %v3209
        %v3598 = vpack.c.b16 %v3212, %v3210
        %v3599 = vpack.c.b16 %v3215, %v3213
        %v3600 = vpack.c.b16 %v3216, %v3214
        %v3601 = vpack.c.b16 %v3219, %v3217
        %v3602 = vpack.c.b16 %v3220, %v3218
        %v3603 = vpack.c.b16 %v3223, %v3221
        %v3604 = vpack.c.b16 %v3224, %v3222
        %v3605 = vpack.c.b16 %v3227, %v3225
        %v3606 = vpack.c.b16 %v3228, %v3226
        %v3607 = vpack.c.b16 %v3231, %v3229
        %v3608 = vpack.c.b16 %v3232, %v3230
        %v3609 = vpack.c.b16 %v3235, %v3233
        %v3610 = vpack.c.b16 %v3236, %v3234
        %v3611 = vpack.c.b16 %v3239, %v3237
        %v3612 = vpack.c.b16 %v3240, %v3238
        %v3613 = vpack.c.b16 %v3243, %v3241
        %v3614 = vpack.c.b16 %v3244, %v3242
        %v3615 = vpack.c.b16 %v3247, %v3245
        %v3616 = vpack.c.b16 %v3248, %v3246
        %v3617 = vpack.c.b16 %v3251, %v3249
        %v3618 = vpack.c.b16 %v3252, %v3250
        %v3619 = vpack.c.b16 %v3255, %v3253
        %v3620 = vpack.c.b16 %v3256, %v3254
        %v3621 = vpack.c.b16 %v3259, %v3257
        %v3622 = vpack.c.b16 %v3260, %v3258
        %v3623 = vpack.c.b16 %v3263, %v3261
        %v3624 = vpack.c.b16 %v3264, %v3262
        %v3625 = vpack.c.b16 %v3267, %v3265
        %v3626 = vpack.c.b16 %v3268, %v3266
        %v3627 = vpack.c.b16 %v3271, %v3269
        %v3628 = vpack.c.b16 %v3272, %v3270
        %v3629 = vpack.c.b16 %v3275, %v3273
        %v3630 = vpack.c.b16 %v3276, %v3274
        %v3631 = vpack.c.b16 %v3279, %v3277
        %v3632 = vpack.c.b16 %v3280, %v3278
        %v3633 = vpack.c.b16 %v3283, %v3281
        %v3634 = vpack.c.b16 %v3284, %v3282
        %v3635 = vpack.c.b16 %v3287, %v3285
        %v3636 = vpack.c.b16 %v3288, %v3286
        %v3637 = vpack.c.b16 %v3291, %v3289
        %v3638 = vpack.c.b16 %v3292, %v3290
        %v3639 = vpack.c.b16 %v3295, %v3293
        %v3640 = vpack.c.b16 %v3296, %v3294
        %v3641 = vpack.c.b16 %v3299, %v3297
        %v3642 = vpack.c.b16 %v3300, %v3298
        %v3643 = vpack.c.b16 %v3303, %v3301
        %v3644 = vpack.c.b16 %v3304, %v3302
        %v3645 = vpack.c.b16 %v3307, %v3305
        %v3646 = vpack.c.b16 %v3308, %v3306
        %v3647 = vpack.c.b16 %v3311, %v3309
        %v3648 = vpack.c.b16 %v3312, %v3310
        %v3649 = vpack.c.b16 %v3315, %v3313
        %v3650 = vpack.c.b16 %v3316, %v3314
        %v3651 = vpack.c.b16 %v3319, %v3317
        %v3652 = vpack.c.b16 %v3320, %v3318
        %v3653 = vpack.c.b16 %v3323, %v3321
        %v3654 = vpack.c.b16 %v3324, %v3322
        %v3655 = vpack.c.b16 %v3327, %v3325
        %v3656 = vpack.c.b16 %v3328, %v3326
        %v3657 = vpack.c.b16 %v3331, %v3329
        %v3658 = vpack.c.b16 %v3332, %v3330
        %v3659 = vpack.c.b16 %v3335, %v3333
        %v3660 = vpack.c.b16 %v3336, %v3334
        %v3661 = vpack.c.b16 %v3339, %v3337
        %v3662 = vpack.c.b16 %v3340, %v3338
        %v3663 = vpack.c.b16 %v3343, %v3341
        %v3664 = vpack.c.b16 %v3344, %v3342
        %v3665 = vpack.c.b16 %v3347, %v3345
        %v3666 = vpack.c.b16 %v3348, %v3346
        %v3667 = vpack.c.b16 %v3351, %v3349
        %v3668 = vpack.c.b16 %v3352, %v3350
        %v3669 = vpack.c.b16 %v3355, %v3353
        %v3670 = vpack.c.b16 %v3356, %v3354
        %v3671 = vpack.c.b16 %v3359, %v3357
        %v3672 = vpack.c.b16 %v3360, %v3358
        %v3673 = vpack.c.b16 %v3363, %v3361
        %v3674 = vpack.c.b16 %v3364, %v3362
        %v3675 = vpack.c.b16 %v3367, %v3365
        %v3676 = vpack.c.b16 %v3368, %v3366
        %v3677 = vpack.c.b16 %v3371, %v3369
        %v3678 = vpack.c.b16 %v3372, %v3370
        %v3679 = vpack.c.b16 %v3375, %v3373
        %v3680 = vpack.c.b16 %v3376, %v3374
        %v3681 = vpack.c.b16 %v3379, %v3377
        %v3682 = vpack.c.b16 %v3380, %v3378
        %v3683 = vpack.c.b16 %v3383, %v3381
        %v3684 = vpack.c.b16 %v3384, %v3382
        %v3685 = vpack.c.b16 %v3387, %v3385
        %v3686 = vpack.c.b16 %v3388, %v3386
        %v3687 = vpack.c.b16 %v3391, %v3389
        %v3688 = vpack.c.b16 %v3392, %v3390
        %v3689 = vpack.c.b16 %v3395, %v3393
        %v3690 = vpack.c.b16 %v3396, %v3394
        %v3691 = vpack.c.b16 %v3399, %v3397
        %v3692 = vpack.c.b16 %v3400, %v3398
        %v3693 = vpack.c.b16 %v3403, %v3401
        %v3694 = vpack.c.b16 %v3404, %v3402
        %v3695 = vpack.c.b16 %v3407, %v3405
        %v3696 = vpack.c.b16 %v3408, %v3406
        %v3697 = vpack.c.b16 %v3411, %v3409
        %v3698 = vpack.c.b16 %v3412, %v3410
        %v3699 = vpack.c.b16 %v3415, %v3413
        %v3700 = vpack.c.b16 %v3416, %v3414
        %v3701 = vpack.c.b16 %v3419, %v3417
        %v3702 = vpack.c.b16 %v3420, %v3418
        %v3703 = vpack.c.b16 %v3423, %v3421
        %v3704 = vpack.c.b16 %v3424, %v3422
        %v3705 = vpack.c.b16 %v3427, %v3425
        %v3706 = vpack.c.b16 %v3428, %v3426
        %v3707 = vpack.c.b16 %v3431, %v3429
        %v3708 = vpack.c.b16 %v3432, %v3430
        %v3709 = vpack.c.b16 %v3435, %v3433
        %v3710 = vpack.c.b16 %v3436, %v3434
        %v3711 = vpack.c.b16 %v3439, %v3437
        %v3712 = vpack.c.b16 %v3440, %v3438
        %v3713 = vpack.c.b16 %v3443, %v3441
        %v3714 = vpack.c.b16 %v3444, %v3442
        %v3715 = vpack.c.b16 %v3447, %v3445
        %v3716 = vpack.c.b16 %v3448, %v3446
        %v3717 = vpack.c.b16 %v3451, %v3449
        %v3718 = vpack.c.b16 %v3452, %v3450
        %v3719 = vpack.c.b16 %v3455, %v3453
        %v3720 = vpack.c.b16 %v3456, %v3454
        %v3721 = vpack.c.b16 %v3459, %v3457
        %v3722 = vpack.c.b16 %v3460, %v3458
        %v3723 = vpack.c.b16 %v3463, %v3461
        %v3724 = vpack.c.b16 %v3464, %v3462
        %v3725 = vpack.c.b16 %v3467, %v3465
        %v3726 = vpack.c.b16 %v3468, %v3466
        %v3727 = vpack.c.b16 %v3471, %v3469
        %v3728 = vpack.c.b16 %v3472, %v3470
        %3985 = vmatprep.subr.bf16.mxu0 %v3474
        %3986 = vmatpush1.bf16.msra.mxu0 %v3473
        %3987 = vmatprep.subr.bf16.mxu0 %v3476
        %3988 = vmatpush1.bf16.msra.mxu0 %v3475
        %3989 = vmatprep.subr.bf16.mxu0 %v3478
        %3990 = vmatpush1.bf16.msra.mxu0 %v3477
        %3991 = vmatprep.subr.bf16.mxu0 %v3480
        %3992 = vmatpush1.bf16.msra.mxu0 %v3479
        %3993 = vmatprep.subr.bf16.mxu0 %v3482
        %3994 = vmatpush1.bf16.msra.mxu0 %v3481
        %3995 = vmatprep.subr.bf16.mxu0 %v3484
        %3996 = vmatpush1.bf16.msra.mxu0 %v3483
        %3997 = vmatprep.subr.bf16.mxu0 %v3486
        %3998 = vmatpush1.bf16.msra.mxu0 %v3485
        %3999 = vmatprep.subr.bf16.mxu0 %v3488
        %4000 = vmatpush1.bf16.msra.mxu0 %v3487
        %4001 = vmatprep.subr.bf16.mxu0 %v3490
        %4002 = vmatpush1.bf16.msra.mxu0 %v3489
        %4003 = vmatprep.subr.bf16.mxu0 %v3492
        %4004 = vmatpush1.bf16.msra.mxu0 %v3491
        %4005 = vmatprep.subr.bf16.mxu0 %v3494
        %4006 = vmatpush1.bf16.msra.mxu0 %v3493
        %4007 = vmatprep.subr.bf16.mxu0 %v3496
        %4008 = vmatpush1.bf16.msra.mxu0 %v3495
        %4009 = vmatprep.subr.bf16.mxu0 %v3498
        %4010 = vmatpush1.bf16.msra.mxu0 %v3497
        %4011 = vmatprep.subr.bf16.mxu0 %v3500
        %4012 = vmatpush1.bf16.msra.mxu0 %v3499
        %4013 = vmatprep.subr.bf16.mxu0 %v3502
        %4014 = vmatpush1.bf16.msra.mxu0 %v3501
        %4015 = vmatprep.subr.bf16.mxu0 %v3504
        %4016 = vmatpush1.bf16.msra.mxu0 %v3503
        %4017 = vmatprep.mubr.bf16.mxu0 %v2628
        %4018 = vmatmul.mubr.bf16.gmra.mrb[0].mxu0 %v2614
        %v4019 = vpop.f32.mrb[0].mxu0
        %v4020 = vadd.f32 %v2582, %v4019
        %v4021 = vpop.f32.mrb[0].mxu0
        %v4022 = vadd.f32 %v2586, %v4021
        %v4023 = vpop.f32.mrb[0].mxu0
        %v4024 = vpop.f32.mrb[0].mxu0
        %4025 = vdwg.mxu0
        %4026 = vmatprep.subr.bf16.mxu0 %v3506
        %4027 = vmatpush1.bf16.msra.mxu0 %v3505
        %4028 = vmatprep.subr.bf16.mxu0 %v3508
        %4029 = vmatpush1.bf16.msra.mxu0 %v3507
        %4030 = vmatprep.subr.bf16.mxu0 %v3510
        %4031 = vmatpush1.bf16.msra.mxu0 %v3509
        %4032 = vmatprep.subr.bf16.mxu0 %v3512
        %4033 = vmatpush1.bf16.msra.mxu0 %v3511
        %4034 = vmatprep.subr.bf16.mxu0 %v3514
        %4035 = vmatpush1.bf16.msra.mxu0 %v3513
        %4036 = vmatprep.subr.bf16.mxu0 %v3516
        %4037 = vmatpush1.bf16.msra.mxu0 %v3515
        %4038 = vmatprep.subr.bf16.mxu0 %v3518
        %4039 = vmatpush1.bf16.msra.mxu0 %v3517
        %4040 = vmatprep.subr.bf16.mxu0 %v3520
        %4041 = vmatpush1.bf16.msra.mxu0 %v3519
        %4042 = vmatprep.subr.bf16.mxu0 %v3522
        %4043 = vmatpush1.bf16.msra.mxu0 %v3521
        %4044 = vmatprep.subr.bf16.mxu0 %v3524
        %4045 = vmatpush1.bf16.msra.mxu0 %v3523
        %4046 = vmatprep.subr.bf16.mxu0 %v3526
        %4047 = vmatpush1.bf16.msra.mxu0 %v3525
        %4048 = vmatprep.subr.bf16.mxu0 %v3528
        %4049 = vmatpush1.bf16.msra.mxu0 %v3527
        %4050 = vmatprep.subr.bf16.mxu0 %v3530
        %4051 = vmatpush1.bf16.msra.mxu0 %v3529
        %4052 = vmatprep.subr.bf16.mxu0 %v3532
        %4053 = vmatpush1.bf16.msra.mxu0 %v3531
        %4054 = vmatprep.subr.bf16.mxu0 %v3534
        %4055 = vmatpush1.bf16.msra.mxu0 %v3533
        %4056 = vmatprep.subr.bf16.mxu0 %v3536
        %4057 = vmatpush1.bf16.msra.mxu0 %v3535
        %4058 = vmatprep.mubr.bf16.mxu0 %v2638
        %4059 = vmatmul.mubr.bf16.gmra.mrb[0].mxu0 %v2636
        %v4060 = vpop.f32.mrb[0].mxu0
        %v4061 = vadd.f32 %v4020, %v4060
        %v4062 = vpop.f32.mrb[0].mxu0
        %v4063 = vadd.f32 %v4022, %v4062
        %v4064 = vpop.f32.mrb[0].mxu0
        %v4065 = vpop.f32.mrb[0].mxu0
        %4066 = vdwg.mxu0
        %4067 = vmatprep.subr.bf16.mxu0 %v3538
        %4068 = vmatpush1.bf16.msra.mxu0 %v3537
        %4069 = vmatprep.subr.bf16.mxu0 %v3540
        %4070 = vmatpush1.bf16.msra.mxu0 %v3539
        %4071 = vmatprep.subr.bf16.mxu0 %v3542
        %4072 = vmatpush1.bf16.msra.mxu0 %v3541
        %4073 = vmatprep.subr.bf16.mxu0 %v3544
        %4074 = vmatpush1.bf16.msra.mxu0 %v3543
        %4075 = vmatprep.subr.bf16.mxu0 %v3546
        %4076 = vmatpush1.bf16.msra.mxu0 %v3545
        %4077 = vmatprep.subr.bf16.mxu0 %v3548
        %4078 = vmatpush1.bf16.msra.mxu0 %v3547
        %4079 = vmatprep.subr.bf16.mxu0 %v3550
        %4080 = vmatpush1.bf16.msra.mxu0 %v3549
        %4081 = vmatprep.subr.bf16.mxu0 %v3552
        %4082 = vmatpush1.bf16.msra.mxu0 %v3551
        %4083 = vmatprep.subr.bf16.mxu0 %v3554
        %4084 = vmatpush1.bf16.msra.mxu0 %v3553
        %4085 = vmatprep.subr.bf16.mxu0 %v3556
        %4086 = vmatpush1.bf16.msra.mxu0 %v3555
        %4087 = vmatprep.subr.bf16.mxu0 %v3558
        %4088 = vmatpush1.bf16.msra.mxu0 %v3557
        %4089 = vmatprep.subr.bf16.mxu0 %v3560
        %4090 = vmatpush1.bf16.msra.mxu0 %v3559
        %4091 = vmatprep.subr.bf16.mxu0 %v3562
        %4092 = vmatpush1.bf16.msra.mxu0 %v3561
        %4093 = vmatprep.subr.bf16.mxu0 %v3564
        %4094 = vmatpush1.bf16.msra.mxu0 %v3563
        %4095 = vmatprep.subr.bf16.mxu0 %v3566
        %4096 = vmatpush1.bf16.msra.mxu0 %v3565
        %4097 = vmatprep.subr.bf16.mxu0 %v3568
        %4098 = vmatpush1.bf16.msra.mxu0 %v3567
        %4099 = vmatprep.mubr.bf16.mxu0 %v2635
        %4100 = vmatmul.mubr.bf16.gmra.mrb[0].mxu0 %v2621
        %v4101 = vpop.f32.mrb[0].mxu0
        %v4102 = vadd.f32 %v4061, %v4101
        %v4103 = vpop.f32.mrb[0].mxu0
        %v4104 = vadd.f32 %v4063, %v4103
        %v4105 = vpop.f32.mrb[0].mxu0
        %v4106 = vpop.f32.mrb[0].mxu0
        %4107 = vdwg.mxu0
        %4108 = vmatprep.subr.bf16.mxu0 %v3570
        %4109 = vmatpush1.bf16.msra.mxu0 %v3569
        %4110 = vmatprep.subr.bf16.mxu0 %v3572
        %4111 = vmatpush1.bf16.msra.mxu0 %v3571
        %4112 = vmatprep.subr.bf16.mxu0 %v3574
        %4113 = vmatpush1.bf16.msra.mxu0 %v3573
        %4114 = vmatprep.subr.bf16.mxu0 %v3576
        %4115 = vmatpush1.bf16.msra.mxu0 %v3575
        %4116 = vmatprep.subr.bf16.mxu0 %v3578
        %4117 = vmatpush1.bf16.msra.mxu0 %v3577
        %4118 = vmatprep.subr.bf16.mxu0 %v3580
        %4119 = vmatpush1.bf16.msra.mxu0 %v3579
        %4120 = vmatprep.subr.bf16.mxu0 %v3582
        %4121 = vmatpush1.bf16.msra.mxu0 %v3581
        %4122 = vmatprep.subr.bf16.mxu0 %v3584
        %4123 = vmatpush1.bf16.msra.mxu0 %v3583
        %4124 = vmatprep.subr.bf16.mxu0 %v3586
        %4125 = vmatpush1.bf16.msra.mxu0 %v3585
        %4126 = vmatprep.subr.bf16.mxu0 %v3588
        %4127 = vmatpush1.bf16.msra.mxu0 %v3587
        %4128 = vmatprep.subr.bf16.mxu0 %v3590
        %4129 = vmatpush1.bf16.msra.mxu0 %v3589
        %4130 = vmatprep.subr.bf16.mxu0 %v3592
        %4131 = vmatpush1.bf16.msra.mxu0 %v3591
        %4132 = vmatprep.subr.bf16.mxu0 %v3594
        %4133 = vmatpush1.bf16.msra.mxu0 %v3593
        %4134 = vmatprep.subr.bf16.mxu0 %v3596
        %4135 = vmatpush1.bf16.msra.mxu0 %v3595
        %4136 = vmatprep.subr.bf16.mxu0 %v3598
        %4137 = vmatpush1.bf16.msra.mxu0 %v3597
        %4138 = vmatprep.subr.bf16.mxu0 %v3600
        %4139 = vmatpush1.bf16.msra.mxu0 %v3599
        %4140 = vmatprep.mubr.bf16.mxu0 %v2639
        %4141 = vmatmul.mubr.bf16.gmra.mrb[0].mxu0 %v2637
        %v4142 = vpop.f32.mrb[0].mxu0
        %v4143 = vadd.f32 %v4102, %v4142
        %v4144 = vpop.f32.mrb[0].mxu0
        %v4145 = vadd.f32 %v4104, %v4144
        %v4146 = vpop.f32.mrb[0].mxu0
        %v4147 = vpop.f32.mrb[0].mxu0
        %4148 = vdwg.mxu0
        %4149 = vmatprep.subr.bf16.mxu0 %v3602
        %4150 = vmatpush1.bf16.msra.mxu0 %v3601
        %4151 = vmatprep.subr.bf16.mxu0 %v3604
        %4152 = vmatpush1.bf16.msra.mxu0 %v3603
        %4153 = vmatprep.subr.bf16.mxu0 %v3606
        %4154 = vmatpush1.bf16.msra.mxu0 %v3605
        %4155 = vmatprep.subr.bf16.mxu0 %v3608
        %4156 = vmatpush1.bf16.msra.mxu0 %v3607
        %4157 = vmatprep.subr.bf16.mxu0 %v3610
        %4158 = vmatpush1.bf16.msra.mxu0 %v3609
        %4159 = vmatprep.subr.bf16.mxu0 %v3612
        %4160 = vmatpush1.bf16.msra.mxu0 %v3611
        %4161 = vmatprep.subr.bf16.mxu0 %v3614
        %4162 = vmatpush1.bf16.msra.mxu0 %v3613
        %4163 = vmatprep.subr.bf16.mxu0 %v3616
        %4164 = vmatpush1.bf16.msra.mxu0 %v3615
        %4165 = vmatprep.subr.bf16.mxu0 %v3618
        %4166 = vmatpush1.bf16.msra.mxu0 %v3617
        %4167 = vmatprep.subr.bf16.mxu0 %v3620
        %4168 = vmatpush1.bf16.msra.mxu0 %v3619
        %4169 = vmatprep.subr.bf16.mxu0 %v3622
        %4170 = vmatpush1.bf16.msra.mxu0 %v3621
        %4171 = vmatprep.subr.bf16.mxu0 %v3624
        %4172 = vmatpush1.bf16.msra.mxu0 %v3623
        %4173 = vmatprep.subr.bf16.mxu0 %v3626
        %4174 = vmatpush1.bf16.msra.mxu0 %v3625
        %4175 = vmatprep.subr.bf16.mxu0 %v3628
        %4176 = vmatpush1.bf16.msra.mxu0 %v3627
        %4177 = vmatprep.subr.bf16.mxu0 %v3630
        %4178 = vmatpush1.bf16.msra.mxu0 %v3629
        %4179 = vmatprep.subr.bf16.mxu0 %v3632
        %4180 = vmatpush1.bf16.msra.mxu0 %v3631
        %4181 = vmatprep.mubr.bf16.mxu0 %v2677
        %4182 = vmatmul.mubr.bf16.gmra.mrb[0].mxu0 %v2663
        %v4183 = vpop.f32.mrb[0].mxu0
        %v4184 = vadd.f32 %v4143, %v4183
        %v4185 = vpop.f32.mrb[0].mxu0
        %v4186 = vadd.f32 %v4145, %v4185
        %v4187 = vpop.f32.mrb[0].mxu0
        %v4188 = vpop.f32.mrb[0].mxu0
        %4189 = vdwg.mxu0
        %4190 = vmatprep.subr.bf16.mxu0 %v3634
        %4191 = vmatpush1.bf16.msra.mxu0 %v3633
        %4192 = vmatprep.subr.bf16.mxu0 %v3636
        %4193 = vmatpush1.bf16.msra.mxu0 %v3635
        %4194 = vmatprep.subr.bf16.mxu0 %v3638
        %4195 = vmatpush1.bf16.msra.mxu0 %v3637
        %4196 = vmatprep.subr.bf16.mxu0 %v3640
        %4197 = vmatpush1.bf16.msra.mxu0 %v3639
        %4198 = vmatprep.subr.bf16.mxu0 %v3642
        %4199 = vmatpush1.bf16.msra.mxu0 %v3641
        %4200 = vmatprep.subr.bf16.mxu0 %v3644
        %4201 = vmatpush1.bf16.msra.mxu0 %v3643
        %4202 = vmatprep.subr.bf16.mxu0 %v3646
        %4203 = vmatpush1.bf16.msra.mxu0 %v3645
        %4204 = vmatprep.subr.bf16.mxu0 %v3648
        %4205 = vmatpush1.bf16.msra.mxu0 %v3647
        %4206 = vmatprep.subr.bf16.mxu0 %v3650
        %4207 = vmatpush1.bf16.msra.mxu0 %v3649
        %4208 = vmatprep.subr.bf16.mxu0 %v3652
        %4209 = vmatpush1.bf16.msra.mxu0 %v3651
        %4210 = vmatprep.subr.bf16.mxu0 %v3654
        %4211 = vmatpush1.bf16.msra.mxu0 %v3653
        %4212 = vmatprep.subr.bf16.mxu0 %v3656
        %4213 = vmatpush1.bf16.msra.mxu0 %v3655
        %4214 = vmatprep.subr.bf16.mxu0 %v3658
        %4215 = vmatpush1.bf16.msra.mxu0 %v3657
        %4216 = vmatprep.subr.bf16.mxu0 %v3660
        %4217 = vmatpush1.bf16.msra.mxu0 %v3659
        %4218 = vmatprep.subr.bf16.mxu0 %v3662
        %4219 = vmatpush1.bf16.msra.mxu0 %v3661
        %4220 = vmatprep.subr.bf16.mxu0 %v3664
        %4221 = vmatpush1.bf16.msra.mxu0 %v3663
        %4222 = vmatprep.mubr.bf16.mxu0 %v2687
        %4223 = vmatmul.mubr.bf16.gmra.mrb[0].mxu0 %v2685
        %v4224 = vpop.f32.mrb[0].mxu0
        %v4225 = vadd.f32 %v4184, %v4224
        %v4226 = vpop.f32.mrb[0].mxu0
        %v4227 = vadd.f32 %v4186, %v4226
        %v4228 = vpop.f32.mrb[0].mxu0
        %v4229 = vpop.f32.mrb[0].mxu0
        %4230 = vdwg.mxu0
        %4231 = vmatprep.subr.bf16.mxu0 %v3666
        %4232 = vmatpush1.bf16.msra.mxu0 %v3665
        %4233 = vmatprep.subr.bf16.mxu0 %v3668
        %4234 = vmatpush1.bf16.msra.mxu0 %v3667
        %4235 = vmatprep.subr.bf16.mxu0 %v3670
        %4236 = vmatpush1.bf16.msra.mxu0 %v3669
        %4237 = vmatprep.subr.bf16.mxu0 %v3672
        %4238 = vmatpush1.bf16.msra.mxu0 %v3671
        %4239 = vmatprep.subr.bf16.mxu0 %v3674
        %4240 = vmatpush1.bf16.msra.mxu0 %v3673
        %4241 = vmatprep.subr.bf16.mxu0 %v3676
        %4242 = vmatpush1.bf16.msra.mxu0 %v3675
        %4243 = vmatprep.subr.bf16.mxu0 %v3678
        %4244 = vmatpush1.bf16.msra.mxu0 %v3677
        %4245 = vmatprep.subr.bf16.mxu0 %v3680
        %4246 = vmatpush1.bf16.msra.mxu0 %v3679
        %4247 = vmatprep.subr.bf16.mxu0 %v3682
        %4248 = vmatpush1.bf16.msra.mxu0 %v3681
        %4249 = vmatprep.subr.bf16.mxu0 %v3684
        %4250 = vmatpush1.bf16.msra.mxu0 %v3683
        %4251 = vmatprep.subr.bf16.mxu0 %v3686
        %4252 = vmatpush1.bf16.msra.mxu0 %v3685
        %4253 = vmatprep.subr.bf16.mxu0 %v3688
        %4254 = vmatpush1.bf16.msra.mxu0 %v3687
        %4255 = vmatprep.subr.bf16.mxu0 %v3690
        %4256 = vmatpush1.bf16.msra.mxu0 %v3689
        %4257 = vmatprep.subr.bf16.mxu0 %v3692
        %4258 = vmatpush1.bf16.msra.mxu0 %v3691
        %4259 = vmatprep.subr.bf16.mxu0 %v3694
        %4260 = vmatpush1.bf16.msra.mxu0 %v3693
        %4261 = vmatprep.subr.bf16.mxu0 %v3696
        %4262 = vmatpush1.bf16.msra.mxu0 %v3695
        %4263 = vmatprep.mubr.bf16.mxu0 %v2684
        %4264 = vmatmul.mubr.bf16.gmra.mrb[0].mxu0 %v2670
        %v4265 = vpop.f32.mrb[0].mxu0
        %v4266 = vadd.f32 %v4225, %v4265
        %v4267 = vpop.f32.mrb[0].mxu0
        %v4268 = vadd.f32 %v4227, %v4267
        %v4269 = vpop.f32.mrb[0].mxu0
        %v4270 = vpop.f32.mrb[0].mxu0
        %4271 = vdwg.mxu0
        %4272 = vmatprep.subr.bf16.mxu0 %v3698
        %4273 = vmatpush1.bf16.msra.mxu0 %v3697
        %4274 = vmatprep.subr.bf16.mxu0 %v3700
        %4275 = vmatpush1.bf16.msra.mxu0 %v3699
        %4276 = vmatprep.subr.bf16.mxu0 %v3702
        %4277 = vmatpush1.bf16.msra.mxu0 %v3701
        %4278 = vmatprep.subr.bf16.mxu0 %v3704
        %4279 = vmatpush1.bf16.msra.mxu0 %v3703
        %4280 = vmatprep.subr.bf16.mxu0 %v3706
        %4281 = vmatpush1.bf16.msra.mxu0 %v3705
        %4282 = vmatprep.subr.bf16.mxu0 %v3708
        %4283 = vmatpush1.bf16.msra.mxu0 %v3707
        %4284 = vmatprep.subr.bf16.mxu0 %v3710
        %4285 = vmatpush1.bf16.msra.mxu0 %v3709
        %4286 = vmatprep.subr.bf16.mxu0 %v3712
        %4287 = vmatpush1.bf16.msra.mxu0 %v3711
        %4288 = vmatprep.subr.bf16.mxu0 %v3714
        %4289 = vmatpush1.bf16.msra.mxu0 %v3713
        %4290 = vmatprep.subr.bf16.mxu0 %v3716
        %4291 = vmatpush1.bf16.msra.mxu0 %v3715
        %4292 = vmatprep.subr.bf16.mxu0 %v3718
        %4293 = vmatpush1.bf16.msra.mxu0 %v3717
        %4294 = vmatprep.subr.bf16.mxu0 %v3720
        %4295 = vmatpush1.bf16.msra.mxu0 %v3719
        %4296 = vmatprep.subr.bf16.mxu0 %v3722
        %4297 = vmatpush1.bf16.msra.mxu0 %v3721
        %4298 = vmatprep.subr.bf16.mxu0 %v3724
        %4299 = vmatpush1.bf16.msra.mxu0 %v3723
        %4300 = vmatprep.subr.bf16.mxu0 %v3726
        %4301 = vmatpush1.bf16.msra.mxu0 %v3725
        %4302 = vmatprep.subr.bf16.mxu0 %v3728
        %4303 = vmatpush1.bf16.msra.mxu0 %v3727
        %4304 = vmatprep.mubr.bf16.mxu0 %v2688
        %4305 = vmatmul.mubr.bf16.gmra.mrb[0].mxu0 %v2686
        %v4306 = vpop.f32.mrb[0].mxu0
        %v4307 = vadd.f32 %v4266, %v4306
        %v4308 = vpop.f32.mrb[0].mxu0
        %v4309 = vadd.f32 %v4268, %v4308
        %v4310 = vpop.f32.mrb[0].mxu0
        %v4311 = vpop.f32.mrb[0].mxu0
        %4312 = vdwg.mxu0
        %v4315 = vcombine.low %v4307, %v4309
        %v4317 = vunpack.c.l.s4 1983009808
        %v4318 = vunpack.c.0.s8 %v4317
        %v4319 = vlaneseq
        %v4320 = vshrl.u32 %v4319, 7
        %v4321 = vsub.s32 %v4318, %v4320
        %v4322 = vrot.slane %v4315, %v4321
        %4324 = vst [vmem:[%s321] sm:$0xf] %v4322
        %s4325 = sand.u32 %s158, 1
        %s4326 = sand.u32 %s158, 1
        %s4327 = smul.addr %s4326, 592
        %s4328 = scalar_lea.vmem [#allocation2], %s4327
        %p4329 = scmp.lt.s32.totalorder %s19, 1
        %s4330 = scalar_select %p4329, %s19, 1
        %s4331 = smul.addr %s4330, 2
        %s4332 = smul.addr %s4331, 2
        %s4333 = scalar_lea.vmem %s7, %s4332
        // Predicated region
        $region45: #{image_encoder_forward.1} parent=43 // pred_check
          %p4334 = pneg %p168
        $region46: #{image_encoder_forward.1} parent=43 // pred_check_branch
          %4336 = sbr.rel (%p4334) target = $region48
        $region47: #{image_encoder_forward.1} parent=43 // pred_region
          %s4337 = smul.u32 37, %s19
          %s4338 = ssub.s32 73, %s4337
          %p4339 = scmp.lt.s32.totalorder %s4338, 37
          %s4340 = scalar_select %p4339, %s4338, 37
          %s4341 = smul.u32 128, %s4340
          %s4342 = smul.u32 %s4341, 2
          %p4343 = scmp.ne.s32.totalorder 0, %s4342
          %s4344 = smul.addr %s4337, 2
          %s4345 = smul.addr %s4344, 8
          %s4346 = scalar_lea.vmem %s6, %s4345
          // Predicated region
          $region49: #{image_encoder_forward.1} parent=47 // pred_check
            %p4347 = pneg %p4343
          $region50: #{image_encoder_forward.1} parent=47 // pred_check_branch
            %4349 = sbr.rel (%p4347) target = $region52
          $region51: #{image_encoder_forward.1} parent=47 // pred_region
            // Predicated region
            $region53: #{image_encoder_forward.1} parent=51 // pred_check
              _
            $region54: #{image_encoder_forward.1} parent=51 // pred_check_branch
              %4351 = sbr.rel (0) target = $region56
            $region55: #{image_encoder_forward.1} parent=51 // pred_region
              %s4352 = sshrl.u32 %s4340, 5
              // While loop
              $region57: #{image_encoder_forward.1} parent=55 // loop_pre_header
                _
              $region58: #{image_encoder_forward.1} parent=55 // loop_header
                %s4354 = sphi 0, %s4356
                %p4355 = scmp.ge.s32.totalorder %s4354, %s4352
                %s4359 = sphi 0, %s4492
                %s4360 = sphi %s4328, %s4495
                %s4361 = sphi %s4346, %s4496
              $region59: #{image_encoder_forward.1} parent=55 // loop_header_branch
                %4358 = sbr.rel (%p4355) target = $region63
              $region60: #{image_encoder_forward.1} parent=55 // loop_body
                %v4362 = vld [vmem:[%s4360] sm:$0xff]
                %4363 = vst [vmem:[%s4361] sm:$0xff] %v4362
                %v4364 = vld [vmem:[%s4360 + $0x10] sm:$0xff]
                %4365 = vst [vmem:[%s4361 + $0x10] sm:$0xff] %v4364
                %v4366 = vld [vmem:[%s4360 + $0x20] sm:$0xff]
                %4367 = vst [vmem:[%s4361 + $0x20] sm:$0xff] %v4366
                %v4368 = vld [vmem:[%s4360 + $0x30] sm:$0xff]
                %4369 = vst [vmem:[%s4361 + $0x30] sm:$0xff] %v4368
                %v4370 = vld [vmem:[%s4360 + $0x40] sm:$0xff]
                %4371 = vst [vmem:[%s4361 + $0x40] sm:$0xff] %v4370
                %v4372 = vld [vmem:[%s4360 + $0x50] sm:$0xff]
                %4373 = vst [vmem:[%s4361 + $0x50] sm:$0xff] %v4372
                %v4374 = vld [vmem:[%s4360 + $0x60] sm:$0xff]
                %4375 = vst [vmem:[%s4361 + $0x60] sm:$0xff] %v4374
                %v4376 = vld [vmem:[%s4360 + $0x70] sm:$0xff]
                %4377 = vst [vmem:[%s4361 + $0x70] sm:$0xff] %v4376
                %v4378 = vld [vmem:[%s4360 + $0x80] sm:$0xff]
                %4379 = vst [vmem:[%s4361 + $0x80] sm:$0xff] %v4378
                %v4380 = vld [vmem:[%s4360 + $0x90] sm:$0xff]
                %4381 = vst [vmem:[%s4361 + $0x90] sm:$0xff] %v4380
                %v4382 = vld [vmem:[%s4360 + $0xa0] sm:$0xff]
                %4383 = vst [vmem:[%s4361 + $0xa0] sm:$0xff] %v4382
                %v4384 = vld [vmem:[%s4360 + $0xb0] sm:$0xff]
                %4385 = vst [vmem:[%s4361 + $0xb0] sm:$0xff] %v4384
                %v4386 = vld [vmem:[%s4360 + $0xc0] sm:$0xff]
                %4387 = vst [vmem:[%s4361 + $0xc0] sm:$0xff] %v4386
                %v4388 = vld [vmem:[%s4360 + $0xd0] sm:$0xff]
                %4389 = vst [vmem:[%s4361 + $0xd0] sm:$0xff] %v4388
                %v4390 = vld [vmem:[%s4360 + $0xe0] sm:$0xff]
                %4391 = vst [vmem:[%s4361 + $0xe0] sm:$0xff] %v4390
                %v4392 = vld [vmem:[%s4360 + $0xf0] sm:$0xff]
                %4393 = vst [vmem:[%s4361 + $0xf0] sm:$0xff] %v4392
                %v4394 = vld [vmem:[%s4360 + $0x100] sm:$0xff]
                %4395 = vst [vmem:[%s4361 + $0x100] sm:$0xff] %v4394
                %v4396 = vld [vmem:[%s4360 + $0x110] sm:$0xff]
                %4397 = vst [vmem:[%s4361 + $0x110] sm:$0xff] %v4396
                %v4398 = vld [vmem:[%s4360 + $0x120] sm:$0xff]
                %4399 = vst [vmem:[%s4361 + $0x120] sm:$0xff] %v4398
                %v4400 = vld [vmem:[%s4360 + $0x130] sm:$0xff]
                %4401 = vst [vmem:[%s4361 + $0x130] sm:$0xff] %v4400
                %v4402 = vld [vmem:[%s4360 + $0x140] sm:$0xff]
                %4403 = vst [vmem:[%s4361 + $0x140] sm:$0xff] %v4402
                %v4404 = vld [vmem:[%s4360 + $0x150] sm:$0xff]
                %4405 = vst [vmem:[%s4361 + $0x150] sm:$0xff] %v4404
                %v4406 = vld [vmem:[%s4360 + $0x160] sm:$0xff]
                %4407 = vst [vmem:[%s4361 + $0x160] sm:$0xff] %v4406
                %v4408 = vld [vmem:[%s4360 + $0x170] sm:$0xff]
                %4409 = vst [vmem:[%s4361 + $0x170] sm:$0xff] %v4408
                %v4410 = vld [vmem:[%s4360 + $0x180] sm:$0xff]
                %4411 = vst [vmem:[%s4361 + $0x180] sm:$0xff] %v4410
                %v4412 = vld [vmem:[%s4360 + $0x190] sm:$0xff]
                %4413 = vst [vmem:[%s4361 + $0x190] sm:$0xff] %v4412
                %v4414 = vld [vmem:[%s4360 + $0x1a0] sm:$0xff]
                %4415 = vst [vmem:[%s4361 + $0x1a0] sm:$0xff] %v4414
                %v4416 = vld [vmem:[%s4360 + $0x1b0] sm:$0xff]
                %4417 = vst [vmem:[%s4361 + $0x1b0] sm:$0xff] %v4416
                %v4418 = vld [vmem:[%s4360 + $0x1c0] sm:$0xff]
                %4419 = vst [vmem:[%s4361 + $0x1c0] sm:$0xff] %v4418
                %v4420 = vld [vmem:[%s4360 + $0x1d0] sm:$0xff]
                %4421 = vst [vmem:[%s4361 + $0x1d0] sm:$0xff] %v4420
                %v4422 = vld [vmem:[%s4360 + $0x1e0] sm:$0xff]
                %4423 = vst [vmem:[%s4361 + $0x1e0] sm:$0xff] %v4422
                %v4424 = vld [vmem:[%s4360 + $0x1f0] sm:$0xff]
                %4425 = vst [vmem:[%s4361 + $0x1f0] sm:$0xff] %v4424
                %v4426 = vld [vmem:[%s4360 + $0x8] sm:$0xff]
                %4427 = vst [vmem:[%s4361 + $0x8] sm:$0xff] %v4426
                %v4428 = vld [vmem:[%s4360 + $0x18] sm:$0xff]
                %4429 = vst [vmem:[%s4361 + $0x18] sm:$0xff] %v4428
                %v4430 = vld [vmem:[%s4360 + $0x28] sm:$0xff]
                %4431 = vst [vmem:[%s4361 + $0x28] sm:$0xff] %v4430
                %v4432 = vld [vmem:[%s4360 + $0x38] sm:$0xff]
                %4433 = vst [vmem:[%s4361 + $0x38] sm:$0xff] %v4432
                %v4434 = vld [vmem:[%s4360 + $0x48] sm:$0xff]
                %4435 = vst [vmem:[%s4361 + $0x48] sm:$0xff] %v4434
                %v4436 = vld [vmem:[%s4360 + $0x58] sm:$0xff]
                %4437 = vst [vmem:[%s4361 + $0x58] sm:$0xff] %v4436
                %v4438 = vld [vmem:[%s4360 + $0x68] sm:$0xff]
                %4439 = vst [vmem:[%s4361 + $0x68] sm:$0xff] %v4438
                %v4440 = vld [vmem:[%s4360 + $0x78] sm:$0xff]
                %4441 = vst [vmem:[%s4361 + $0x78] sm:$0xff] %v4440
                %v4442 = vld [vmem:[%s4360 + $0x88] sm:$0xff]
                %4443 = vst [vmem:[%s4361 + $0x88] sm:$0xff] %v4442
                %v4444 = vld [vmem:[%s4360 + $0x98] sm:$0xff]
                %4445 = vst [vmem:[%s4361 + $0x98] sm:$0xff] %v4444
                %v4446 = vld [vmem:[%s4360 + $0xa8] sm:$0xff]
                %4447 = vst [vmem:[%s4361 + $0xa8] sm:$0xff] %v4446
                %v4448 = vld [vmem:[%s4360 + $0xb8] sm:$0xff]
                %4449 = vst [vmem:[%s4361 + $0xb8] sm:$0xff] %v4448
                %v4450 = vld [vmem:[%s4360 + $0xc8] sm:$0xff]
                %4451 = vst [vmem:[%s4361 + $0xc8] sm:$0xff] %v4450
                %v4452 = vld [vmem:[%s4360 + $0xd8] sm:$0xff]
                %4453 = vst [vmem:[%s4361 + $0xd8] sm:$0xff] %v4452
                %v4454 = vld [vmem:[%s4360 + $0xe8] sm:$0xff]
                %4455 = vst [vmem:[%s4361 + $0xe8] sm:$0xff] %v4454
                %v4456 = vld [vmem:[%s4360 + $0xf8] sm:$0xff]
                %4457 = vst [vmem:[%s4361 + $0xf8] sm:$0xff] %v4456
                %v4458 = vld [vmem:[%s4360 + $0x108] sm:$0xff]
                %4459 = vst [vmem:[%s4361 + $0x108] sm:$0xff] %v4458
                %v4460 = vld [vmem:[%s4360 + $0x118] sm:$0xff]
                %4461 = vst [vmem:[%s4361 + $0x118] sm:$0xff] %v4460
                %v4462 = vld [vmem:[%s4360 + $0x128] sm:$0xff]
                %4463 = vst [vmem:[%s4361 + $0x128] sm:$0xff] %v4462
                %v4464 = vld [vmem:[%s4360 + $0x138] sm:$0xff]
                %4465 = vst [vmem:[%s4361 + $0x138] sm:$0xff] %v4464
                %v4466 = vld [vmem:[%s4360 + $0x148] sm:$0xff]
                %4467 = vst [vmem:[%s4361 + $0x148] sm:$0xff] %v4466
                %v4468 = vld [vmem:[%s4360 + $0x158] sm:$0xff]
                %4469 = vst [vmem:[%s4361 + $0x158] sm:$0xff] %v4468
                %v4470 = vld [vmem:[%s4360 + $0x168] sm:$0xff]
                %4471 = vst [vmem:[%s4361 + $0x168] sm:$0xff] %v4470
                %v4472 = vld [vmem:[%s4360 + $0x178] sm:$0xff]
                %4473 = vst [vmem:[%s4361 + $0x178] sm:$0xff] %v4472
                %v4474 = vld [vmem:[%s4360 + $0x188] sm:$0xff]
                %4475 = vst [vmem:[%s4361 + $0x188] sm:$0xff] %v4474
                %v4476 = vld [vmem:[%s4360 + $0x198] sm:$0xff]
                %4477 = vst [vmem:[%s4361 + $0x198] sm:$0xff] %v4476
                %v4478 = vld [vmem:[%s4360 + $0x1a8] sm:$0xff]
                %4479 = vst [vmem:[%s4361 + $0x1a8] sm:$0xff] %v4478
                %v4480 = vld [vmem:[%s4360 + $0x1b8] sm:$0xff]
                %4481 = vst [vmem:[%s4361 + $0x1b8] sm:$0xff] %v4480
                %v4482 = vld [vmem:[%s4360 + $0x1c8] sm:$0xff]
                %4483 = vst [vmem:[%s4361 + $0x1c8] sm:$0xff] %v4482
                %v4484 = vld [vmem:[%s4360 + $0x1d8] sm:$0xff]
                %4485 = vst [vmem:[%s4361 + $0x1d8] sm:$0xff] %v4484
                %v4486 = vld [vmem:[%s4360 + $0x1e8] sm:$0xff]
                %4487 = vst [vmem:[%s4361 + $0x1e8] sm:$0xff] %v4486
                %v4488 = vld [vmem:[%s4360 + $0x1f8] sm:$0xff]
                %4489 = vst [vmem:[%s4361 + $0x1f8] sm:$0xff] %v4488
                %s4490 = sadd.s32 1, %s4359
                %p4491 = scmp.ge.s32.totalorder %s4490, %s4352
                %s4492 = scalar_select %p4491, 0, %s4490
                %s4493 = smul.u32 %s4492, 512
                %s4494 = smul.u32 %s4492, 512
                %s4495 = scalar_lea.vmem %s4328, %s4493 [#allocation2]
                %s4496 = scalar_lea.vmem %s4346, %s4494
              $region61: #{image_encoder_forward.1} parent=55 // loop_footer
                %s4356 = sadd.s32 %s4354, 1
              $region62: #{image_encoder_forward.1} parent=55 // loop_footer_branch
                %4353 = sbr.rel target = $region58
              $region63: #{image_encoder_forward.1} parent=55 // loop_exit
                _
              %s4497 = sshrl.u32 %s4340, 5
              %s4498 = sand.u32 %s4340, 31
              %s4499 = smul.u32 %s4497, 32
              %s4500 = smul.u32 16, %s4499
              %s4501 = scalar_lea.vmem %s4328, %s4500 [#allocation2]
              %s4502 = smul.u32 16, %s4499
              %s4503 = scalar_lea.vmem %s4346, %s4502
              // While loop
              $region64: #{image_encoder_forward.1} parent=55 // loop_pre_header
                _
              $region65: #{image_encoder_forward.1} parent=55 // loop_header
                %s4505 = sphi 0, %s4507
                %p4506 = scmp.ge.s32.totalorder %s4505, %s4498
                %s4510 = sphi 0, %s4519
                %s4511 = sphi %s4501, %s4522
                %s4512 = sphi %s4503, %s4523
              $region66: #{image_encoder_forward.1} parent=55 // loop_header_branch
                %4509 = sbr.rel (%p4506) target = $region70
              $region67: #{image_encoder_forward.1} parent=55 // loop_body
                %v4513 = vld [vmem:[%s4511] sm:$0xff]
                %4514 = vst [vmem:[%s4512] sm:$0xff] %v4513
                %v4515 = vld [vmem:[%s4511 + $0x8] sm:$0xff]
                %4516 = vst [vmem:[%s4512 + $0x8] sm:$0xff] %v4515
                %s4517 = sadd.s32 1, %s4510
                %p4518 = scmp.ge.s32.totalorder %s4517, %s4498
                %s4519 = scalar_select %p4518, 0, %s4517
                %s4520 = smul.u32 %s4519, 16
                %s4521 = smul.u32 %s4519, 16
                %s4522 = scalar_lea.vmem %s4501, %s4520 [#allocation2]
                %s4523 = scalar_lea.vmem %s4503, %s4521
              $region68: #{image_encoder_forward.1} parent=55 // loop_footer
                %s4507 = sadd.s32 %s4505, 1
              $region69: #{image_encoder_forward.1} parent=55 // loop_footer_branch
                %4504 = sbr.rel target = $region65
              $region70: #{image_encoder_forward.1} parent=55 // loop_exit
                _
            $region56: #{image_encoder_forward.1} parent=51 // pred_fallthru
              _
            // Predicated region
            $region71: #{image_encoder_forward.1} parent=51 // pred_check
              _
            $region72: #{image_encoder_forward.1} parent=51 // pred_check_branch
              %4525 = sbr.rel target = $region74
            $region73: #{image_encoder_forward.1} parent=51 // pred_region
              _
            $region74: #{image_encoder_forward.1} parent=51 // pred_fallthru
              _
          $region52: #{image_encoder_forward.1} parent=47 // pred_fallthru
            _
          %4526 = vnop
        $region48: #{image_encoder_forward.1} parent=43 // pred_fallthru
          _
        // Predicated region
        $region75: #{image_encoder_forward.1} parent=43 // pred_check
          %p4527 = pneg %p194
        $region76: #{image_encoder_forward.1} parent=43 // pred_check_branch
          %4529 = sbr.rel (%p4527) target = $region78
        $region77: #{image_encoder_forward.1} parent=43 // pred_region
          _
        $region78: #{image_encoder_forward.1} parent=43 // pred_fallthru
          _
      $region44: #{image_encoder_forward.1} parent=5 // pred_fallthru
        _
      %p4530 = scmp.le.s32.totalorder 2, %s14
      // Predicated region
      $region79: #{image_encoder_forward.1} parent=5 // pred_check
        %p4531 = pneg %p4530
      $region80: #{image_encoder_forward.1} parent=5 // pred_check_branch
        %4533 = sbr.rel (%p4531) target = $region82
      $region81: #{image_encoder_forward.1} parent=5 // pred_region
        %s4534 = ssub.s32 %s14, 2
        // Predicated region
        $region83: #{image_encoder_forward.1} parent=81 // pred_check
          %p4535 = pneg %p174
        $region84: #{image_encoder_forward.1} parent=81 // pred_check_branch
          %4537 = sbr.rel (%p4535) target = $region86
        $region85: #{image_encoder_forward.1} parent=81 // pred_region
          %s4538 = sand.u32 %s159, 1
          %s4539 = sand.u32 %s159, 1
          %s4540 = smul.addr %s4539, 592
          %s4541 = scalar_lea.vmem [#allocation2], %s4540
        $region86: #{image_encoder_forward.1} parent=81 // pred_fallthru
          _
        // Predicated region
        $region87: #{image_encoder_forward.1} parent=81 // pred_check
          %p4542 = pneg %p200
        $region88: #{image_encoder_forward.1} parent=81 // pred_check_branch
          %4544 = sbr.rel (%p4542) target = $region90
        $region89: #{image_encoder_forward.1} parent=81 // pred_region
          %p4545 = scmp.lt.s32.totalorder %s20, 1
          %s4546 = scalar_select %p4545, %s20, 1
          %s4547 = smul.addr %s4546, 2
          %s4548 = smul.addr %s4547, 2
          %s4549 = scalar_lea.vmem %s7, %s4548
        $region90: #{image_encoder_forward.1} parent=81 // pred_fallthru
          _
      $region82: #{image_encoder_forward.1} parent=5 // pred_fallthru
        _
    $region6: #{image_encoder_forward.1} parent=1 // loop_footer
      %s18 = sadd.s32 1, %s14
    $region7: #{image_encoder_forward.1} parent=1 // loop_footer_branch
      %13 = sbr.rel target = $region3
    $region8: #{image_encoder_forward.1} parent=1 // loop_exit
      _

</llo_original>
